<compile_context>
chip_gen: v5e
topology: v5e:2x2
jax: 0.10.0
libtpu: 0.0.40
codegen_flags: <defaults>
</compile_context>

<pallas_src>
import functools
from math import sqrt

import jax
import jax.numpy as jnp
from jax.experimental import pallas as pl
from jax.experimental.pallas import tpu as pltpu

_C = 64  # lane-friendly channel width used for all layers (3 -> 64 zero-pad)


def _vdsr_fused_kernel(x_ref, w_ref, o_ref, buf_a, buf_b, *,
                       H, W, Wc, C, n_layers):
    """Fused VDSR forward for one batch element.

    x_ref : (1, H, W, C)        f32   channel-padded input (residual source)
    w_ref : (L, 3C, 3C)         bf16  packed weights, [dx*C+cin, dy*C+cout]
    o_ref : (1, H, W, C)        f32   channel-padded output
    buf_a, buf_b : (H+2, Wc+2, C) bf16 VMEM ping-pong activation buffers
                                      (1-pixel zero halo built in)
    """
    f32 = jnp.float32
    Hp = H + 2
    K = 3 * C

    # Zero both activation buffers every grid step.  Only the halo ring (and
    # the Wc-W extra compute columns) must stay zero, but scratch VMEM is
    # per-TensorCore, so zero-once-under-pl.when(b==0) would break when the
    # "parallel" batch axis is split across two cores.  Cost is negligible.
    buf_a[...] = jnp.zeros_like(buf_a)
    buf_b[...] = jnp.zeros_like(buf_b)
    buf_a[1:H + 1, 1:W + 1, :] = x_ref[0].astype(buf_a.dtype)

    def conv3x3(src_ref, w):
        """3x3 'same' conv as one (Hp*Wc, 3C) x (3C, 3C) MXU matmul.

        w: (3C, 3C) bf16.  Returns the (H, Wc, C) f32 conv output (no ReLU).
        """
        p = src_ref[...]                                      # (Hp, Wc+2, C)
        # Pack the three dx taps along K (lane concat, built once per layer).
        lhs = jnp.concatenate(
            [p[:, 0:Wc, :], p[:, 1:Wc + 1, :], p[:, 2:Wc + 2, :]], axis=-1)
        y = jnp.dot(lhs.reshape(Hp * Wc, K), w,
                    preferred_element_type=f32).reshape(Hp, Wc, K)
        # dy weight blocks were packed along N: combine with row-shifted adds.
        return (y[0:H, :, 0:C]
                + y[1:H + 1, :, C:2 * C]
                + y[2:H + 2, :, 2 * C:3 * C])                 # (H, Wc, C) f32

    def conv_relu(src_ref, dst_ref, layer):
        act = jnp.maximum(conv3x3(src_ref, w_ref[layer]), 0.0)
        dst_ref[1:H + 1, 1:W + 1, :] = act[:, 0:W, :].astype(dst_ref.dtype)

    # Layer 0 (input conv + ReLU): buf_a -> buf_b.
    conv_relu(buf_a, buf_b, 0)

    # 18 hidden Conv+ReLU layers, 2 per fori_loop iteration so the ping-pong
    # buffers keep static refs; only the weight index is dynamic.
    n_pairs = (n_layers - 2) // 2

    def pair(i, carry):
        conv_relu(buf_b, buf_a, 1 + 2 * i)
        conv_relu(buf_a, buf_b, 2 + 2 * i)
        return carry

    jax.lax.fori_loop(0, n_pairs, pair, 0)

    # Output conv (no ReLU) + residual add, both in f32.
    out = conv3x3(buf_b, w_ref[n_layers - 1])[:, 0:W, :] + x_ref[0]
    o_ref[0] = out.astype(o_ref.dtype)


def vdsr_forward_fused(x_f32, w_all):
    """x_f32: (B, H, W, 64) f32;  w_all: (L, 192, 192) bf16."""
    B, H, W, C = x_f32.shape
    L, K, _ = w_all.shape
    assert K == 3 * C and (L - 2) % 2 == 0

    Wc = ((W + 7) // 8) * 8          # compute width (layout-free reshapes)
    Hp, Wpb = H + 2, Wc + 2

    kern = functools.partial(_vdsr_fused_kernel,
                             H=H, W=W, Wc=Wc, C=C, n_layers=L)

    flops = 2 * B * L * (Hp * Wc) * K * K
    bytes_accessed = x_f32.size * 4 + B * H * W * C * 4 + w_all.size * 2

    try:
        vmem_cap = int(pltpu.get_tpu_info().vmem_capacity_bytes)
    except Exception:                                     # pragma: no cover
        vmem_cap = 64 << 20
    w_lanes = ((K + 127) // 128) * 128
    vmem_est = (2 * Hp * Wpb * C * 2          # ping-pong activation buffers
                + 2 * L * K * w_lanes * 2     # resident weights (2 pipeline bufs)
                + 2 * H * W * 128 * 4         # input blocks (lane-padded)
                + 2 * H * W * 128 * 4         # output blocks
                + 3 * Hp * Wc * K * 4)        # LHS concat + f32 matmul temporaries
    vmem_limit = int(min(max(2 * vmem_est, 32 << 20), int(0.75 * vmem_cap)))

    return pl.pallas_call(
        kern,
        out_shape=jax.ShapeDtypeStruct((B, H, W, C), jnp.float32),
        grid_spec=pltpu.PrefetchScalarGridSpec(
            num_scalar_prefetch=0,
            grid=(B,),
            in_specs=[
                pl.BlockSpec((1, H, W, C), lambda b: (b, 0, 0, 0)),
                # Constant index_map: weights DMA'd once, resident across grid.
                pl.BlockSpec((L, K, K), lambda b: (0, 0, 0)),
            ],
            out_specs=pl.BlockSpec((1, H, W, C), lambda b: (b, 0, 0, 0)),
            scratch_shapes=[pltpu.VMEM((Hp, Wpb, C), jnp.bfloat16),
                            pltpu.VMEM((Hp, Wpb, C), jnp.bfloat16)],
        ),
        compiler_params=pltpu.CompilerParams(
            dimension_semantics=("parallel",),
            vmem_limit_bytes=vmem_limit),
        cost_estimate=pl.CostEstimate(flops=int(flops), transcendentals=0,
                                      bytes_accessed=int(bytes_accessed)),
    )(x_f32, w_all)


def init_vdsr_params(key):
    """Deterministic init matching VDSR.__init__: N(0, sqrt(2 / (k*k*Cout)))."""
    def conv_w(k, cin, cout):
        n = 3 * 3 * cout
        return (jax.random.normal(k, (3, 3, cin, cout), jnp.float32)
                * sqrt(2.0 / n))

    keys = jax.random.split(key, 20)
    return {
        "input": conv_w(keys[0], 3, 64),
        "residual": [conv_w(keys[1 + i], 64, 64) for i in range(18)],
        "output": conv_w(keys[19], 64, 3),
    }


def _pack_weights(params):
    """-> (L, 192, 192) bf16 with layout [layer, dx*64+cin, dy*64+cout].

    Boundary layers are zero-padded to 64 channels (Cin for the input conv,
    Cout for the output conv), which keeps padded channels exactly zero.
    """
    w_in = params["input"]                                   # (3,3,3,64)
    w_out = params["output"]                                 # (3,3,64,3)
    w_in = jnp.pad(w_in, ((0, 0), (0, 0), (0, _C - w_in.shape[2]), (0, 0)))
    w_out = jnp.pad(w_out, ((0, 0), (0, 0), (0, 0), (0, _C - w_out.shape[3])))
    stack = jnp.stack([w_in] + list(params["residual"]) + [w_out], axis=0)
    L = stack.shape[0]                                       # (L, dy, dx, ci, co)
    w_all = jnp.transpose(stack, (0, 2, 3, 1, 4))            # (L, dx, ci, dy, co)
    return w_all.reshape(L, 3 * _C, 3 * _C).astype(jnp.bfloat16)


def preprocess_forward(params, x_nchw):
    """Preprocess.forward(x) == VDSR.forward(x).  Input/output are NCHW."""
    B, Cin, H, W = x_nchw.shape
    x = jnp.transpose(x_nchw, (0, 2, 3, 1)).astype(jnp.float32)  # NCHW -> NHWC
    x = jnp.pad(x, ((0, 0), (0, 0), (0, 0), (0, _C - Cin)))      # channels -> 64
    out = vdsr_forward_fused(x, _pack_weights(params))           # (B,H,W,64) f32
    out = jnp.transpose(out[..., :Cin], (0, 3, 1, 2))            # NHWC -> NCHW
    return out.astype(x_nchw.dtype)


if __name__ == "__main__":
    key = jax.random.PRNGKey(0)
    pkey, xkey = jax.random.split(key)
    params = init_vdsr_params(pkey)
    x = jax.random.normal(xkey, (2, 3, 16, 16), jnp.float32)     # NCHW like PyTorch

    fwd = jax.jit(preprocess_forward)
    y = fwd(params, x)
    jax.block_until_ready(y)
    assert y.shape == (2, 3, 16, 16) and y.dtype == jnp.float32
    print("KERNEL_OK")
</pallas_src>

<mosaic_0001>
module attributes {stable_mosaic.version = 11 : i64} {
  func.func @_vdsr_fused_kernel(%arg0: i32, %arg1: memref<1x16x16x64xf32, #tpu.memory_space<vmem>>, %arg2: memref<20x192x192xbf16, #tpu.memory_space<vmem>>, %arg3: memref<1x16x16x64xf32, #tpu.memory_space<vmem>>, %arg4: memref<18x18x64xbf16, #tpu.memory_space<vmem>>, %arg5: memref<18x18x64xbf16, #tpu.memory_space<vmem>>) attributes {dimension_semantics = [#tpu.dimension_semantics<parallel>], iteration_bounds = array<i64: 2>, scalar_prefetch = 0 : i64, scratch_operands = 2 : i64, tpu.core_type = #tpu.core_type<tc>, window_params = [{transform_indices = @transform_0, window_bounds = array<i64: 1, 16, 16, 64>}, {pipeline_mode = #tpu.pipeline_mode<synchronous>, transform_indices = @transform_1, window_bounds = array<i64: 20, 192, 192>}, {transform_indices = @transform_2, window_bounds = array<i64: 1, 16, 16, 64>}]} {
    %cst = arith.constant 0.000000e+00 : bf16
    %0 = vector.broadcast %cst : bf16 to vector<18x18x64xbf16>
    %c0 = arith.constant 0 : index
    %c0_0 = arith.constant 0 : index
    %c0_1 = arith.constant 0 : index
    %1 = vector.load %arg4[%c0, %c0_0, %c0_1] : memref<18x18x64xbf16, #tpu.memory_space<vmem>>, vector<18x18x64xbf16>
    tpu.vector_store %arg4[%c0, %c0_0, %c0_1], %0 {strides = array<i32>} : memref<18x18x64xbf16, #tpu.memory_space<vmem>>, vector<18x18x64xbf16>,
    %cst_2 = arith.constant 0.000000e+00 : bf16
    %2 = vector.broadcast %cst_2 : bf16 to vector<18x18x64xbf16>
    %c0_3 = arith.constant 0 : index
    %c0_4 = arith.constant 0 : index
    %c0_5 = arith.constant 0 : index
    %3 = vector.load %arg5[%c0_3, %c0_4, %c0_5] : memref<18x18x64xbf16, #tpu.memory_space<vmem>>, vector<18x18x64xbf16>
    tpu.vector_store %arg5[%c0_3, %c0_4, %c0_5], %2 {strides = array<i32>} : memref<18x18x64xbf16, #tpu.memory_space<vmem>>, vector<18x18x64xbf16>,
    %c0_6 = arith.constant 0 : index
    %c0_7 = arith.constant 0 : index
    %c0_8 = arith.constant 0 : index
    %c0_9 = arith.constant 0 : index
    %4 = vector.load %arg1[%c0_6, %c0_7, %c0_8, %c0_9] : memref<1x16x16x64xf32, #tpu.memory_space<vmem>>, vector<1x16x16x64xf32>
    %5 = vector.shape_cast %4 : vector<1x16x16x64xf32> to vector<16x16x64xf32>
    %6 = arith.truncf %5 : vector<16x16x64xf32> to vector<16x16x64xbf16>
    %c1 = arith.constant 1 : index
    %c1_10 = arith.constant 1 : index
    %c0_11 = arith.constant 0 : index
    %7 = vector.load %arg4[%c1, %c1_10, %c0_11] : memref<18x18x64xbf16, #tpu.memory_space<vmem>>, vector<16x16x64xbf16>
    tpu.vector_store %arg4[%c1, %c1_10, %c0_11], %6 {strides = array<i32>} : memref<18x18x64xbf16, #tpu.memory_space<vmem>>, vector<16x16x64xbf16>,
    %c0_12 = arith.constant 0 : index
    %c0_13 = arith.constant 0 : index
    %c0_14 = arith.constant 0 : index
    %8 = vector.load %arg2[%c0_12, %c0_13, %c0_14] : memref<20x192x192xbf16, #tpu.memory_space<vmem>>, vector<1x192x192xbf16>
    %9 = vector.shape_cast %8 : vector<1x192x192xbf16> to vector<192x192xbf16>
    %c0_15 = arith.constant 0 : index
    %c0_16 = arith.constant 0 : index
    %c0_17 = arith.constant 0 : index
    %10 = vector.load %arg4[%c0_15, %c0_16, %c0_17] : memref<18x18x64xbf16, #tpu.memory_space<vmem>>, vector<18x18x64xbf16>
    %11 = vector.extract_strided_slice %10 {offsets = [0, 0, 0], sizes = [18, 16, 64], strides = [1, 1, 1]} : vector<18x18x64xbf16> to vector<18x16x64xbf16>
    %12 = vector.extract_strided_slice %10 {offsets = [0, 1, 0], sizes = [18, 16, 64], strides = [1, 1, 1]} : vector<18x18x64xbf16> to vector<18x16x64xbf16>
    %13 = vector.extract_strided_slice %10 {offsets = [0, 2, 0], sizes = [18, 16, 64], strides = [1, 1, 1]} : vector<18x18x64xbf16> to vector<18x16x64xbf16>
    %14 = tpu.concatenate %11, %12, %13 in 2 : vector<18x16x64xbf16>, vector<18x16x64xbf16>, vector<18x16x64xbf16> -> vector<18x16x192xbf16>
    %15 = vector.shape_cast %14 : vector<18x16x192xbf16> to vector<288x192xbf16>
    %cst_18 = arith.constant dense<0.000000e+00> : vector<288x192xf32>
    %16 = tpu.matmul %15, %9, %cst_18 {dimension_numbers = #tpu.dot_dimension_numbers<[1], [0], [0], [1], [0, 0, 1, 1], [], []>} : vector<288x192xbf16>, vector<192x192xbf16>, vector<288x192xf32> -> vector<288x192xf32>
    %17 = vector.shape_cast %16 : vector<288x192xf32> to vector<18x16x192xf32>
    %18 = vector.extract_strided_slice %17 {offsets = [0, 0, 0], sizes = [16, 16, 64], strides = [1, 1, 1]} : vector<18x16x192xf32> to vector<16x16x64xf32>
    %19 = vector.extract_strided_slice %17 {offsets = [1, 0, 64], sizes = [16, 16, 64], strides = [1, 1, 1]} : vector<18x16x192xf32> to vector<16x16x64xf32>
    %20 = arith.addf %18, %19 : vector<16x16x64xf32>
    %21 = vector.extract_strided_slice %17 {offsets = [2, 0, 128], sizes = [16, 16, 64], strides = [1, 1, 1]} : vector<18x16x192xf32> to vector<16x16x64xf32>
    %22 = arith.addf %20, %21 : vector<16x16x64xf32>
    %cst_19 = arith.constant 0.000000e+00 : f32
    %23 = vector.broadcast %cst_19 : f32 to vector<16x16x64xf32>
    %24 = arith.maximumf %22, %23 : vector<16x16x64xf32>
    %25 = arith.truncf %24 : vector<16x16x64xf32> to vector<16x16x64xbf16>
    %c1_20 = arith.constant 1 : index
    %c1_21 = arith.constant 1 : index
    %c0_22 = arith.constant 0 : index
    %26 = vector.load %arg5[%c1_20, %c1_21, %c0_22] : memref<18x18x64xbf16, #tpu.memory_space<vmem>>, vector<16x16x64xbf16>
    tpu.vector_store %arg5[%c1_20, %c1_21, %c0_22], %25 {strides = array<i32>} : memref<18x18x64xbf16, #tpu.memory_space<vmem>>, vector<16x16x64xbf16>,
    %c0_i32 = arith.constant 0 : i32
    %c9_i32 = arith.constant 9 : i32
    %27 = arith.addi %c0_i32, %c9_i32 : i32
    %c1_i32 = arith.constant 1 : i32
    scf.for %arg6 = %c0_i32 to %27 step %c1_i32  : i32 {
      %c2_i32 = arith.constant 2 : i32
      %49 = arith.muli %c2_i32, %arg6 : i32
      %c1_i32_38 = arith.constant 1 : i32
      %50 = arith.addi %c1_i32_38, %49 : i32
      %51 = arith.index_cast %50 : i32 to index
      %c0_39 = arith.constant 0 : index
      %c0_40 = arith.constant 0 : index
      %52 = vector.load %arg2[%51, %c0_39, %c0_40] : memref<20x192x192xbf16, #tpu.memory_space<vmem>>, vector<1x192x192xbf16>
      %53 = vector.shape_cast %52 : vector<1x192x192xbf16> to vector<192x192xbf16>
      %c0_41 = arith.constant 0 : index
      %c0_42 = arith.constant 0 : index
      %c0_43 = arith.constant 0 : index
      %54 = vector.load %arg5[%c0_41, %c0_42, %c0_43] : memref<18x18x64xbf16, #tpu.memory_space<vmem>>, vector<18x18x64xbf16>
      %55 = vector.extract_strided_slice %54 {offsets = [0, 0, 0], sizes = [18, 16, 64], strides = [1, 1, 1]} : vector<18x18x64xbf16> to vector<18x16x64xbf16>
      %56 = vector.extract_strided_slice %54 {offsets = [0, 1, 0], sizes = [18, 16, 64], strides = [1, 1, 1]} : vector<18x18x64xbf16> to vector<18x16x64xbf16>
      %57 = vector.extract_strided_slice %54 {offsets = [0, 2, 0], sizes = [18, 16, 64], strides = [1, 1, 1]} : vector<18x18x64xbf16> to vector<18x16x64xbf16>
      %58 = tpu.concatenate %55, %56, %57 in 2 : vector<18x16x64xbf16>, vector<18x16x64xbf16>, vector<18x16x64xbf16> -> vector<18x16x192xbf16>
      %59 = vector.shape_cast %58 : vector<18x16x192xbf16> to vector<288x192xbf16>
      %cst_44 = arith.constant dense<0.000000e+00> : vector<288x192xf32>
      %60 = tpu.matmul %59, %53, %cst_44 {dimension_numbers = #tpu.dot_dimension_numbers<[1], [0], [0], [1], [0, 0, 1, 1], [], []>} : vector<288x192xbf16>, vector<192x192xbf16>, vector<288x192xf32> -> vector<288x192xf32>
      %61 = vector.shape_cast %60 : vector<288x192xf32> to vector<18x16x192xf32>
      %62 = vector.extract_strided_slice %61 {offsets = [0, 0, 0], sizes = [16, 16, 64], strides = [1, 1, 1]} : vector<18x16x192xf32> to vector<16x16x64xf32>
      %63 = vector.extract_strided_slice %61 {offsets = [1, 0, 64], sizes = [16, 16, 64], strides = [1, 1, 1]} : vector<18x16x192xf32> to vector<16x16x64xf32>
      %64 = arith.addf %62, %63 : vector<16x16x64xf32>
      %65 = vector.extract_strided_slice %61 {offsets = [2, 0, 128], sizes = [16, 16, 64], strides = [1, 1, 1]} : vector<18x16x192xf32> to vector<16x16x64xf32>
      %66 = arith.addf %64, %65 : vector<16x16x64xf32>
      %cst_45 = arith.constant 0.000000e+00 : f32
      %67 = vector.broadcast %cst_45 : f32 to vector<16x16x64xf32>
      %68 = arith.maximumf %66, %67 : vector<16x16x64xf32>
      %69 = arith.truncf %68 : vector<16x16x64xf32> to vector<16x16x64xbf16>
      %c1_46 = arith.constant 1 : index
      %c1_47 = arith.constant 1 : index
      %c0_48 = arith.constant 0 : index
      %70 = vector.load %arg4[%c1_46, %c1_47, %c0_48] : memref<18x18x64xbf16, #tpu.memory_space<vmem>>, vector<16x16x64xbf16>
      tpu.vector_store %arg4[%c1_46, %c1_47, %c0_48], %69 {strides = array<i32>} : memref<18x18x64xbf16, #tpu.memory_space<vmem>>, vector<16x16x64xbf16>,
      %c2_i32_49 = arith.constant 2 : i32
      %71 = arith.muli %c2_i32_49, %arg6 : i32
      %c2_i32_50 = arith.constant 2 : i32
      %72 = arith.addi %c2_i32_50, %71 : i32
      %73 = arith.index_cast %72 : i32 to index
      %c0_51 = arith.constant 0 : index
      %c0_52 = arith.constant 0 : index
      %74 = vector.load %arg2[%73, %c0_51, %c0_52] : memref<20x192x192xbf16, #tpu.memory_space<vmem>>, vector<1x192x192xbf16>
      %75 = vector.shape_cast %74 : vector<1x192x192xbf16> to vector<192x192xbf16>
      %c0_53 = arith.constant 0 : index
      %c0_54 = arith.constant 0 : index
      %c0_55 = arith.constant 0 : index
      %76 = vector.load %arg4[%c0_53, %c0_54, %c0_55] : memref<18x18x64xbf16, #tpu.memory_space<vmem>>, vector<18x18x64xbf16>
      %77 = vector.extract_strided_slice %76 {offsets = [0, 0, 0], sizes = [18, 16, 64], strides = [1, 1, 1]} : vector<18x18x64xbf16> to vector<18x16x64xbf16>
      %78 = vector.extract_strided_slice %76 {offsets = [0, 1, 0], sizes = [18, 16, 64], strides = [1, 1, 1]} : vector<18x18x64xbf16> to vector<18x16x64xbf16>
      %79 = vector.extract_strided_slice %76 {offsets = [0, 2, 0], sizes = [18, 16, 64], strides = [1, 1, 1]} : vector<18x18x64xbf16> to vector<18x16x64xbf16>
      %80 = tpu.concatenate %77, %78, %79 in 2 : vector<18x16x64xbf16>, vector<18x16x64xbf16>, vector<18x16x64xbf16> -> vector<18x16x192xbf16>
      %81 = vector.shape_cast %80 : vector<18x16x192xbf16> to vector<288x192xbf16>
      %cst_56 = arith.constant dense<0.000000e+00> : vector<288x192xf32>
      %82 = tpu.matmul %81, %75, %cst_56 {dimension_numbers = #tpu.dot_dimension_numbers<[1], [0], [0], [1], [0, 0, 1, 1], [], []>} : vector<288x192xbf16>, vector<192x192xbf16>, vector<288x192xf32> -> vector<288x192xf32>
      %83 = vector.shape_cast %82 : vector<288x192xf32> to vector<18x16x192xf32>
      %84 = vector.extract_strided_slice %83 {offsets = [0, 0, 0], sizes = [16, 16, 64], strides = [1, 1, 1]} : vector<18x16x192xf32> to vector<16x16x64xf32>
      %85 = vector.extract_strided_slice %83 {offsets = [1, 0, 64], sizes = [16, 16, 64], strides = [1, 1, 1]} : vector<18x16x192xf32> to vector<16x16x64xf32>
      %86 = arith.addf %84, %85 : vector<16x16x64xf32>
      %87 = vector.extract_strided_slice %83 {offsets = [2, 0, 128], sizes = [16, 16, 64], strides = [1, 1, 1]} : vector<18x16x192xf32> to vector<16x16x64xf32>
      %88 = arith.addf %86, %87 : vector<16x16x64xf32>
      %cst_57 = arith.constant 0.000000e+00 : f32
      %89 = vector.broadcast %cst_57 : f32 to vector<16x16x64xf32>
      %90 = arith.maximumf %88, %89 : vector<16x16x64xf32>
      %91 = arith.truncf %90 : vector<16x16x64xf32> to vector<16x16x64xbf16>
      %c1_58 = arith.constant 1 : index
      %c1_59 = arith.constant 1 : index
      %c0_60 = arith.constant 0 : index
      %92 = vector.load %arg5[%c1_58, %c1_59, %c0_60] : memref<18x18x64xbf16, #tpu.memory_space<vmem>>, vector<16x16x64xbf16>
      tpu.vector_store %arg5[%c1_58, %c1_59, %c0_60], %91 {strides = array<i32>} : memref<18x18x64xbf16, #tpu.memory_space<vmem>>, vector<16x16x64xbf16>,
    }
    %c9_i32_23 = arith.constant 9 : i32
    %c19 = arith.constant 19 : index
    %c0_24 = arith.constant 0 : index
    %c0_25 = arith.constant 0 : index
    %28 = vector.load %arg2[%c19, %c0_24, %c0_25] : memref<20x192x192xbf16, #tpu.memory_space<vmem>>, vector<1x192x192xbf16>
    %29 = vector.shape_cast %28 : vector<1x192x192xbf16> to vector<192x192xbf16>
    %c0_26 = arith.constant 0 : index
    %c0_27 = arith.constant 0 : index
    %c0_28 = arith.constant 0 : index
    %30 = vector.load %arg5[%c0_26, %c0_27, %c0_28] : memref<18x18x64xbf16, #tpu.memory_space<vmem>>, vector<18x18x64xbf16>
    %31 = vector.extract_strided_slice %30 {offsets = [0, 0, 0], sizes = [18, 16, 64], strides = [1, 1, 1]} : vector<18x18x64xbf16> to vector<18x16x64xbf16>
    %32 = vector.extract_strided_slice %30 {offsets = [0, 1, 0], sizes = [18, 16, 64], strides = [1, 1, 1]} : vector<18x18x64xbf16> to vector<18x16x64xbf16>
    %33 = vector.extract_strided_slice %30 {offsets = [0, 2, 0], sizes = [18, 16, 64], strides = [1, 1, 1]} : vector<18x18x64xbf16> to vector<18x16x64xbf16>
    %34 = tpu.concatenate %31, %32, %33 in 2 : vector<18x16x64xbf16>, vector<18x16x64xbf16>, vector<18x16x64xbf16> -> vector<18x16x192xbf16>
    %35 = vector.shape_cast %34 : vector<18x16x192xbf16> to vector<288x192xbf16>
    %cst_29 = arith.constant dense<0.000000e+00> : vector<288x192xf32>
    %36 = tpu.matmul %35, %29, %cst_29 {dimension_numbers = #tpu.dot_dimension_numbers<[1], [0], [0], [1], [0, 0, 1, 1], [], []>} : vector<288x192xbf16>, vector<192x192xbf16>, vector<288x192xf32> -> vector<288x192xf32>
    %37 = vector.shape_cast %36 : vector<288x192xf32> to vector<18x16x192xf32>
    %38 = vector.extract_strided_slice %37 {offsets = [0, 0, 0], sizes = [16, 16, 64], strides = [1, 1, 1]} : vector<18x16x192xf32> to vector<16x16x64xf32>
    %39 = vector.extract_strided_slice %37 {offsets = [1, 0, 64], sizes = [16, 16, 64], strides = [1, 1, 1]} : vector<18x16x192xf32> to vector<16x16x64xf32>
    %40 = arith.addf %38, %39 : vector<16x16x64xf32>
    %41 = vector.extract_strided_slice %37 {offsets = [2, 0, 128], sizes = [16, 16, 64], strides = [1, 1, 1]} : vector<18x16x192xf32> to vector<16x16x64xf32>
    %42 = arith.addf %40, %41 : vector<16x16x64xf32>
    %c0_30 = arith.constant 0 : index
    %c0_31 = arith.constant 0 : index
    %c0_32 = arith.constant 0 : index
    %c0_33 = arith.constant 0 : index
    %43 = vector.load %arg1[%c0_30, %c0_31, %c0_32, %c0_33] : memref<1x16x16x64xf32, #tpu.memory_space<vmem>>, vector<1x16x16x64xf32>
    %44 = vector.shape_cast %43 : vector<1x16x16x64xf32> to vector<16x16x64xf32>
    %45 = arith.addf %42, %44 : vector<16x16x64xf32>
    %c0_34 = arith.constant 0 : index
    %c0_35 = arith.constant 0 : index
    %c0_36 = arith.constant 0 : index
    %c0_37 = arith.constant 0 : index
    %46 = vector.load %arg3[%c0_34, %c0_35, %c0_36, %c0_37] : memref<1x16x16x64xf32, #tpu.memory_space<vmem>>, vector<1x16x16x64xf32>
    %47 = vector.shape_cast %46 : vector<1x16x16x64xf32> to vector<16x16x64xf32>
    %48 = vector.shape_cast %45 : vector<16x16x64xf32> to vector<1x16x16x64xf32>
    tpu.vector_store %arg3[%c0_34, %c0_35, %c0_36, %c0_37], %48 {strides = array<i32>} : memref<1x16x16x64xf32, #tpu.memory_space<vmem>>, vector<1x16x16x64xf32>,
    return
  }
  func.func @transform_0(%arg0: i32) -> (i32, i32, i32, i32) {
    %c0_i32 = arith.constant 0 : i32
    %c0_i32_0 = arith.constant 0 : i32
    %c0_i32_1 = arith.constant 0 : i32
    %c0_i32_2 = arith.constant 0 : i32
    return %arg0, %c0_i32, %c0_i32_0, %c0_i32_1 : i32, i32, i32, i32
  }
  func.func @transform_1(%arg0: i32) -> (i32, i32, i32) {
    %c0_i32 = arith.constant 0 : i32
    %c0_i32_0 = arith.constant 0 : i32
    %c0_i32_1 = arith.constant 0 : i32
    %c0_i32_2 = arith.constant 0 : i32
    return %c0_i32, %c0_i32_0, %c0_i32_1 : i32, i32, i32
  }
  func.func @transform_2(%arg0: i32) -> (i32, i32, i32, i32) {
    %c0_i32 = arith.constant 0 : i32
    %c0_i32_0 = arith.constant 0 : i32
    %c0_i32_1 = arith.constant 0 : i32
    %c0_i32_2 = arith.constant 0 : i32
    return %arg0, %c0_i32, %c0_i32_0, %c0_i32_1 : i32, i32, i32, i32
  }
}

</mosaic_0001>

<llo_original>
// kernel: preprocess_forward.1
$region0: #{preprocess_forward.1}
  #allocation0 [shape = 'u32[]', space=smem, size = 0x4, offset = 0x4, fixed_abs, tag = 'smem constant byte address 0x4 - core index']
  #allocation1 [shape = 'u32[72,128]{1,0:T(1,128)}', space=vmem, size = 0x9000, scoped, tag = 'internal scratch']
  #allocation2 [shape = 'bf16[18,18,64]{2,1,0:T(8,128)(2,1)}', space=vmem, size = 0x1b000, scoped, tag = 'scratch operand']
  #allocation3 [shape = 'bf16[18,18,64]{2,1,0:T(8,128)(2,1)}', space=vmem, size = 0x1b000, scoped, tag = 'scratch operand']
  %s0 = inlined_call_operand.vmem [shape: f32[2,16,16,64], index: 0, kind: input, shape index: {}]
  %s1 = inlined_call_operand.vmem [shape: bf16[20,192,192], index: 1, kind: input, shape index: {}]
  %s2 = inlined_call_operand.vmem [shape: f32[2,16,16,64], index: 2, kind: output, shape index: {}]
  %s3 = sld [smem:[#allocation0]]
  $region48: #{preprocess_forward.1} parent=0
    _
  %s5 = ssub.s32 1, %s3
  %s6 = scalar_select 0, %s5, %s3
  loop: start=0, step=1, limit=4
  $region2: #{preprocess_forward.1} parent=0 // loop_pre_header
    _
  $region3: #{preprocess_forward.1} parent=0 // loop_header
    %s8 = sphi 0, %s12
    %p9 = scmp.ge.s32.totalorder %s8, 4
    %s18 = sphi 0, %s20
    %s21 = sphi 0, %s18
    %s22 = sphi 0, %s21
    %s38 = sphi 0, %s22
    %s42 = sphi 0, %s42
    %s44 = sphi 0, %s42
    %s45 = sphi 0, %s44
    %s59 = sphi 0, %s45
    %s65 = sphi 0, %s67
    %s68 = sphi 0, %s65
    %s69 = sphi 0, %s68
    %s85 = sphi 0, %s69
  $region4: #{preprocess_forward.1} parent=0 // loop_header_branch
    %11 = sbr.rel (%p9) target = $region8
  $region5: #{preprocess_forward.1} parent=0 // loop_body
    %s13 = ssub.s32 %s8, 1
    %s14 = ssub.s32 %s8, 2
    %s15 = sadd.s32 %s8, 1
    %s16 = ssub.s32 %s8, %s15
    %p17 = scmp.eq.s32.totalorder %s16, 0
    %s19 = sadd.s32 %s18, 1
    %s20 = scalar_select %p17, %s18, %s19
    %p23 = pneg %p17
    %p24 = scmp.eq.s32.totalorder %s8, 1
    %p25 = por %p23, %p24
    %p26 = scmp.ne.s32.totalorder %s18, %s21
    %p27 = scmp.eq.s32.totalorder %s8, 0
    %p28 = por %p26, %p27
    %p29 = scmp.ne.s32.totalorder %s18, %s21
    %p30 = scmp.eq.s32.totalorder %s13, 1
    %p31 = por %p29, %p30
    %p32 = scmp.ne.s32.totalorder %s21, %s22
    %p33 = scmp.eq.s32.totalorder %s13, 0
    %p34 = por %p32, %p33
    %p35 = scmp.ne.s32.totalorder %s21, %s22
    %p36 = scmp.eq.s32.totalorder %s14, 1
    %p37 = por %p35, %p36
    %p39 = scmp.ne.s32.totalorder %s22, %s38
    %p40 = scmp.eq.s32.totalorder %s14, 0
    %p41 = por %p39, %p40
    %s43 = sadd.s32 %s42, 1
    %p46 = scmp.eq.s32.totalorder %s8, 1
    %p47 = scmp.ne.s32.totalorder %s42, %s44
    %p48 = scmp.eq.s32.totalorder %s8, 0
    %p49 = por %p47, %p48
    %p50 = scmp.ne.s32.totalorder %s42, %s44
    %p51 = scmp.eq.s32.totalorder %s13, 1
    %p52 = por %p50, %p51
    %p53 = scmp.ne.s32.totalorder %s44, %s45
    %p54 = scmp.eq.s32.totalorder %s13, 0
    %p55 = por %p53, %p54
    %p56 = scmp.ne.s32.totalorder %s44, %s45
    %p57 = scmp.eq.s32.totalorder %s14, 1
    %p58 = por %p56, %p57
    %p60 = scmp.ne.s32.totalorder %s45, %s59
    %p61 = scmp.eq.s32.totalorder %s14, 0
    %p62 = por %p60, %p61
    %s63 = ssub.s32 %s8, %s15
    %p64 = scmp.eq.s32.totalorder %s63, 0
    %s66 = sadd.s32 %s65, 1
    %s67 = scalar_select %p64, %s65, %s66
    %p70 = pneg %p64
    %p71 = scmp.eq.s32.totalorder %s8, 1
    %p72 = por %p70, %p71
    %p73 = scmp.ne.s32.totalorder %s65, %s68
    %p74 = scmp.eq.s32.totalorder %s8, 0
    %p75 = por %p73, %p74
    %p76 = scmp.ne.s32.totalorder %s65, %s68
    %p77 = scmp.eq.s32.totalorder %s13, 1
    %p78 = por %p76, %p77
    %p79 = scmp.ne.s32.totalorder %s68, %s69
    %p80 = scmp.eq.s32.totalorder %s13, 0
    %p81 = por %p79, %p80
    %p82 = scmp.ne.s32.totalorder %s68, %s69
    %p83 = scmp.eq.s32.totalorder %s14, 1
    %p84 = por %p82, %p83
    %p86 = scmp.ne.s32.totalorder %s69, %s85
    %p87 = scmp.eq.s32.totalorder %s14, 0
    %p88 = por %p86, %p87
    %p89 = scmp.le.s32.totalorder 1, %s8
    %p90 = scmp.lt.s32.totalorder %s8, 3
    %p91 = pnand %p89, %p90
    %p92 = pneg %p91
    // Predicated region
    $region9: #{preprocess_forward.1} parent=5 // pred_check
      _
    $region10: #{preprocess_forward.1} parent=5 // pred_check_branch
      %94 = sbr.rel (%p91) target = $region12
    $region11: #{preprocess_forward.1} parent=5 // pred_region
      %s95 = ssub.s32 %s8, 1
      // Predicated region
      $region13: #{preprocess_forward.1} parent=11 // pred_check
        %p96 = pneg %p55
      $region14: #{preprocess_forward.1} parent=11 // pred_check_branch
        %98 = sbr.rel (%p96) target = $region16
      $region15: #{preprocess_forward.1} parent=11 // pred_region
        _
      $region16: #{preprocess_forward.1} parent=11 // pred_fallthru
        _
    $region12: #{preprocess_forward.1} parent=5 // pred_fallthru
      _
    %p99 = scmp.lt.s32.totalorder %s8, 2
    // Predicated region
    $region17: #{preprocess_forward.1} parent=5 // pred_check
      %p100 = pneg %p99
    $region18: #{preprocess_forward.1} parent=5 // pred_check_branch
      %102 = sbr.rel (%p100) target = $region20
    $region19: #{preprocess_forward.1} parent=5 // pred_region
      // Predicated region
      $region21: #{preprocess_forward.1} parent=19 // pred_check
        %p103 = pneg %p28
      $region22: #{preprocess_forward.1} parent=19 // pred_check_branch
        %105 = sbr.rel (%p103) target = $region24
      $region23: #{preprocess_forward.1} parent=19 // pred_region
        %p106 = scmp.lt.s32.totalorder %s8, 1
        %s107 = scalar_select %p106, %s8, 1
        %s108 = smul.addr %s107, 32
        %s109 = smul.addr %s108, 8
        %s110 = scalar_lea.vmem %s0, %s109
      $region24: #{preprocess_forward.1} parent=19 // pred_fallthru
        _
    $region20: #{preprocess_forward.1} parent=5 // pred_fallthru
      _
    %p111 = scmp.le.s32.totalorder 1, %s8
    %p112 = scmp.lt.s32.totalorder %s8, 3
    %p113 = pnand %p111, %p112
    %p114 = pneg %p113
    // Predicated region
    $region25: #{preprocess_forward.1} parent=5 // pred_check
      _
    $region26: #{preprocess_forward.1} parent=5 // pred_check_branch
      %116 = sbr.rel (%p113) target = $region28
    $region27: #{preprocess_forward.1} parent=5 // pred_region
      %s117 = ssub.s32 %s8, 1
      %p118 = scmp.lt.s32.totalorder %s13, 1
      %s119 = scalar_select %p118, %s13, 1
      %s120 = smul.addr %s119, 32
      %s121 = smul.addr %s120, 8
      %s122 = scalar_lea.vmem %s0, %s121
      %p123 = pneg %p34
      %p124 = pneg %p31
      %p125 = pneg %p55
      %p126 = pneg %p52
      %p127 = pneg %p81
      %p128 = pneg %p78
      %p129 = scmp.lt.s32.totalorder %s13, 1
      %s130 = scalar_select %p129, %s13, 1
      %s131 = smul.addr %s130, 32
      %s132 = smul.addr %s131, 8
      %s133 = scalar_lea.vmem %s2, %s132
      %p134 = scmp.lt.s32.totalorder %s13, 1
      %s135 = scalar_select %p134, %s13, 1
      %s136 = smul.addr %s135, 32
      %s137 = smul.addr %s136, 8
      %s138 = scalar_lea.vmem %s0, %s137
      %p139 = scmp.lt.s32.totalorder %s13, 1
      %s140 = scalar_select %p139, %s13, 1
      %s141 = smul.addr %s140, 32
      %s142 = smul.addr %s141, 8
      %s143 = scalar_lea.vmem %s2, %s142
      %vm145 = vcmask 519168
      %146 = vst.msk [vmem:[#allocation2] sm:$0xf] %vm145, 0
      %147 = vst.msk [vmem:[#allocation2 + $0x4] sm:$0xf] %vm145, 0
      %vm148 = vcmask 516096
      %149 = vst.msk [vmem:[#allocation2 + $0x8] sm:$0x1] %vm148, 0
      %150 = vst.msk [vmem:[#allocation2 + $0xc] sm:$0xf] %vm145, 0
      %151 = vst.msk [vmem:[#allocation2 + $0x10] sm:$0xf] %vm145, 0
      %152 = vst.msk [vmem:[#allocation2 + $0x14] sm:$0x1] %vm148, 0
      %153 = vst.msk [vmem:[#allocation2 + $0x18] sm:$0xf] %vm145, 0
      %154 = vst.msk [vmem:[#allocation2 + $0x1c] sm:$0xf] %vm145, 0
      %155 = vst.msk [vmem:[#allocation2 + $0x20] sm:$0x1] %vm148, 0
      %156 = vst.msk [vmem:[#allocation2 + $0x24] sm:$0xf] %vm145, 0
      %157 = vst.msk [vmem:[#allocation2 + $0x28] sm:$0xf] %vm145, 0
      %158 = vst.msk [vmem:[#allocation2 + $0x2c] sm:$0x1] %vm148, 0
      %159 = vst.msk [vmem:[#allocation2 + $0x30] sm:$0xf] %vm145, 0
      %160 = vst.msk [vmem:[#allocation2 + $0x34] sm:$0xf] %vm145, 0
      %161 = vst.msk [vmem:[#allocation2 + $0x38] sm:$0x1] %vm148, 0
      %162 = vst.msk [vmem:[#allocation2 + $0x3c] sm:$0xf] %vm145, 0
      %163 = vst.msk [vmem:[#allocation2 + $0x40] sm:$0xf] %vm145, 0
      %164 = vst.msk [vmem:[#allocation2 + $0x44] sm:$0x1] %vm148, 0
      %165 = vst.msk [vmem:[#allocation2 + $0x48] sm:$0xf] %vm145, 0
      %166 = vst.msk [vmem:[#allocation2 + $0x4c] sm:$0xf] %vm145, 0
      %167 = vst.msk [vmem:[#allocation2 + $0x50] sm:$0x1] %vm148, 0
      %168 = vst.msk [vmem:[#allocation2 + $0x54] sm:$0xf] %vm145, 0
      %169 = vst.msk [vmem:[#allocation2 + $0x58] sm:$0xf] %vm145, 0
      %170 = vst.msk [vmem:[#allocation2 + $0x5c] sm:$0x1] %vm148, 0
      %171 = vst.msk [vmem:[#allocation2 + $0x60] sm:$0xf] %vm145, 0
      %172 = vst.msk [vmem:[#allocation2 + $0x64] sm:$0xf] %vm145, 0
      %173 = vst.msk [vmem:[#allocation2 + $0x68] sm:$0x1] %vm148, 0
      %174 = vst.msk [vmem:[#allocation2 + $0x6c] sm:$0xf] %vm145, 0
      %175 = vst.msk [vmem:[#allocation2 + $0x70] sm:$0xf] %vm145, 0
      %176 = vst.msk [vmem:[#allocation2 + $0x74] sm:$0x1] %vm148, 0
      %177 = vst.msk [vmem:[#allocation2 + $0x78] sm:$0xf] %vm145, 0
      %178 = vst.msk [vmem:[#allocation2 + $0x7c] sm:$0xf] %vm145, 0
      %179 = vst.msk [vmem:[#allocation2 + $0x80] sm:$0x1] %vm148, 0
      %180 = vst.msk [vmem:[#allocation2 + $0x84] sm:$0xf] %vm145, 0
      %181 = vst.msk [vmem:[#allocation2 + $0x88] sm:$0xf] %vm145, 0
      %182 = vst.msk [vmem:[#allocation2 + $0x8c] sm:$0x1] %vm148, 0
      %183 = vst.msk [vmem:[#allocation2 + $0x90] sm:$0xf] %vm145, 0
      %184 = vst.msk [vmem:[#allocation2 + $0x94] sm:$0xf] %vm145, 0
      %185 = vst.msk [vmem:[#allocation2 + $0x98] sm:$0x1] %vm148, 0
      %186 = vst.msk [vmem:[#allocation2 + $0x9c] sm:$0xf] %vm145, 0
      %187 = vst.msk [vmem:[#allocation2 + $0xa0] sm:$0xf] %vm145, 0
      %188 = vst.msk [vmem:[#allocation2 + $0xa4] sm:$0x1] %vm148, 0
      %189 = vst.msk [vmem:[#allocation2 + $0xa8] sm:$0xf] %vm145, 0
      %190 = vst.msk [vmem:[#allocation2 + $0xac] sm:$0xf] %vm145, 0
      %191 = vst.msk [vmem:[#allocation2 + $0xb0] sm:$0x1] %vm148, 0
      %192 = vst.msk [vmem:[#allocation2 + $0xb4] sm:$0xf] %vm145, 0
      %193 = vst.msk [vmem:[#allocation2 + $0xb8] sm:$0xf] %vm145, 0
      %194 = vst.msk [vmem:[#allocation2 + $0xbc] sm:$0x1] %vm148, 0
      %195 = vst.msk [vmem:[#allocation2 + $0xc0] sm:$0xf] %vm145, 0
      %196 = vst.msk [vmem:[#allocation2 + $0xc4] sm:$0xf] %vm145, 0
      %197 = vst.msk [vmem:[#allocation2 + $0xc8] sm:$0x1] %vm148, 0
      %198 = vst.msk [vmem:[#allocation2 + $0xcc] sm:$0xf] %vm145, 0
      %199 = vst.msk [vmem:[#allocation2 + $0xd0] sm:$0xf] %vm145, 0
      %200 = vst.msk [vmem:[#allocation2 + $0xd4] sm:$0x1] %vm148, 0
      %201 = vst.msk [vmem:[#allocation3] sm:$0xf] %vm145, 0
      %202 = vst.msk [vmem:[#allocation3 + $0x4] sm:$0xf] %vm145, 0
      %203 = vst.msk [vmem:[#allocation3 + $0x8] sm:$0x1] %vm148, 0
      %204 = vst.msk [vmem:[#allocation3 + $0xc] sm:$0xf] %vm145, 0
      %205 = vst.msk [vmem:[#allocation3 + $0x10] sm:$0xf] %vm145, 0
      %206 = vst.msk [vmem:[#allocation3 + $0x14] sm:$0x1] %vm148, 0
      %207 = vst.msk [vmem:[#allocation3 + $0x18] sm:$0xf] %vm145, 0
      %208 = vst.msk [vmem:[#allocation3 + $0x1c] sm:$0xf] %vm145, 0
      %209 = vst.msk [vmem:[#allocation3 + $0x20] sm:$0x1] %vm148, 0
      %210 = vst.msk [vmem:[#allocation3 + $0x24] sm:$0xf] %vm145, 0
      %211 = vst.msk [vmem:[#allocation3 + $0x28] sm:$0xf] %vm145, 0
      %212 = vst.msk [vmem:[#allocation3 + $0x2c] sm:$0x1] %vm148, 0
      %213 = vst.msk [vmem:[#allocation3 + $0x30] sm:$0xf] %vm145, 0
      %214 = vst.msk [vmem:[#allocation3 + $0x34] sm:$0xf] %vm145, 0
      %215 = vst.msk [vmem:[#allocation3 + $0x38] sm:$0x1] %vm148, 0
      %216 = vst.msk [vmem:[#allocation3 + $0x3c] sm:$0xf] %vm145, 0
      %217 = vst.msk [vmem:[#allocation3 + $0x40] sm:$0xf] %vm145, 0
      %218 = vst.msk [vmem:[#allocation3 + $0x44] sm:$0x1] %vm148, 0
      %219 = vst.msk [vmem:[#allocation3 + $0x48] sm:$0xf] %vm145, 0
      %220 = vst.msk [vmem:[#allocation3 + $0x4c] sm:$0xf] %vm145, 0
      %221 = vst.msk [vmem:[#allocation3 + $0x50] sm:$0x1] %vm148, 0
      %222 = vst.msk [vmem:[#allocation3 + $0x54] sm:$0xf] %vm145, 0
      %223 = vst.msk [vmem:[#allocation3 + $0x58] sm:$0xf] %vm145, 0
      %224 = vst.msk [vmem:[#allocation3 + $0x5c] sm:$0x1] %vm148, 0
      %225 = vst.msk [vmem:[#allocation3 + $0x60] sm:$0xf] %vm145, 0
      %226 = vst.msk [vmem:[#allocation3 + $0x64] sm:$0xf] %vm145, 0
      %227 = vst.msk [vmem:[#allocation3 + $0x68] sm:$0x1] %vm148, 0
      %228 = vst.msk [vmem:[#allocation3 + $0x6c] sm:$0xf] %vm145, 0
      %229 = vst.msk [vmem:[#allocation3 + $0x70] sm:$0xf] %vm145, 0
      %230 = vst.msk [vmem:[#allocation3 + $0x74] sm:$0x1] %vm148, 0
      %231 = vst.msk [vmem:[#allocation3 + $0x78] sm:$0xf] %vm145, 0
      %232 = vst.msk [vmem:[#allocation3 + $0x7c] sm:$0xf] %vm145, 0
      %233 = vst.msk [vmem:[#allocation3 + $0x80] sm:$0x1] %vm148, 0
      %234 = vst.msk [vmem:[#allocation3 + $0x84] sm:$0xf] %vm145, 0
      %235 = vst.msk [vmem:[#allocation3 + $0x88] sm:$0xf] %vm145, 0
      %236 = vst.msk [vmem:[#allocation3 + $0x8c] sm:$0x1] %vm148, 0
      %237 = vst.msk [vmem:[#allocation3 + $0x90] sm:$0xf] %vm145, 0
      %238 = vst.msk [vmem:[#allocation3 + $0x94] sm:$0xf] %vm145, 0
      %239 = vst.msk [vmem:[#allocation3 + $0x98] sm:$0x1] %vm148, 0
      %240 = vst.msk [vmem:[#allocation3 + $0x9c] sm:$0xf] %vm145, 0
      %241 = vst.msk [vmem:[#allocation3 + $0xa0] sm:$0xf] %vm145, 0
      %242 = vst.msk [vmem:[#allocation3 + $0xa4] sm:$0x1] %vm148, 0
      %243 = vst.msk [vmem:[#allocation3 + $0xa8] sm:$0xf] %vm145, 0
      %244 = vst.msk [vmem:[#allocation3 + $0xac] sm:$0xf] %vm145, 0
      %245 = vst.msk [vmem:[#allocation3 + $0xb0] sm:$0x1] %vm148, 0
      %246 = vst.msk [vmem:[#allocation3 + $0xb4] sm:$0xf] %vm145, 0
      %247 = vst.msk [vmem:[#allocation3 + $0xb8] sm:$0xf] %vm145, 0
      %248 = vst.msk [vmem:[#allocation3 + $0xbc] sm:$0x1] %vm148, 0
      %249 = vst.msk [vmem:[#allocation3 + $0xc0] sm:$0xf] %vm145, 0
      %250 = vst.msk [vmem:[#allocation3 + $0xc4] sm:$0xf] %vm145, 0
      %251 = vst.msk [vmem:[#allocation3 + $0xc8] sm:$0x1] %vm148, 0
      %252 = vst.msk [vmem:[#allocation3 + $0xcc] sm:$0xf] %vm145, 0
      %253 = vst.msk [vmem:[#allocation3 + $0xd0] sm:$0xf] %vm145, 0
      %254 = vst.msk [vmem:[#allocation3 + $0xd4] sm:$0x1] %vm148, 0
      %v255 = vld [vmem:[%s138] sm:$0xff]
      %v256 = vld [vmem:[%s138 + $0x8] sm:$0xff]
      %v257 = vld [vmem:[%s138 + $0x10] sm:$0xff]
      %v258 = vld [vmem:[%s138 + $0x18] sm:$0xff]
      %v259 = vld [vmem:[%s138 + $0x20] sm:$0xff]
      %v260 = vld [vmem:[%s138 + $0x28] sm:$0xff]
      %v261 = vld [vmem:[%s138 + $0x30] sm:$0xff]
      %v262 = vld [vmem:[%s138 + $0x38] sm:$0xff]
      %v263 = vld [vmem:[%s138 + $0x40] sm:$0xff]
      %v264 = vld [vmem:[%s138 + $0x48] sm:$0xff]
      %v265 = vld [vmem:[%s138 + $0x50] sm:$0xff]
      %v266 = vld [vmem:[%s138 + $0x58] sm:$0xff]
      %v267 = vld [vmem:[%s138 + $0x60] sm:$0xff]
      %v268 = vld [vmem:[%s138 + $0x68] sm:$0xff]
      %v269 = vld [vmem:[%s138 + $0x70] sm:$0xff]
      %v270 = vld [vmem:[%s138 + $0x78] sm:$0xff]
      %v271 = vld [vmem:[%s138 + $0x80] sm:$0xff]
      %v272 = vld [vmem:[%s138 + $0x88] sm:$0xff]
      %v273 = vld [vmem:[%s138 + $0x90] sm:$0xff]
      %v274 = vld [vmem:[%s138 + $0x98] sm:$0xff]
      %v275 = vld [vmem:[%s138 + $0xa0] sm:$0xff]
      %v276 = vld [vmem:[%s138 + $0xa8] sm:$0xff]
      %v277 = vld [vmem:[%s138 + $0xb0] sm:$0xff]
      %v278 = vld [vmem:[%s138 + $0xb8] sm:$0xff]
      %v279 = vld [vmem:[%s138 + $0xc0] sm:$0xff]
      %v280 = vld [vmem:[%s138 + $0xc8] sm:$0xff]
      %v281 = vld [vmem:[%s138 + $0xd0] sm:$0xff]
      %v282 = vld [vmem:[%s138 + $0xd8] sm:$0xff]
      %v283 = vld [vmem:[%s138 + $0xe0] sm:$0xff]
      %v284 = vld [vmem:[%s138 + $0xe8] sm:$0xff]
      %v285 = vld [vmem:[%s138 + $0xf0] sm:$0xff]
      %v286 = vld [vmem:[%s138 + $0xf8] sm:$0xff]
      %v287 = vpack.c.bf16 %v255, %v255
      %v288 = vpack.c.bf16 %v256, %v256
      %v289 = vpack.c.bf16 %v257, %v257
      %v290 = vpack.c.bf16 %v258, %v258
      %v291 = vpack.c.bf16 %v259, %v259
      %v292 = vpack.c.bf16 %v260, %v260
      %v293 = vpack.c.bf16 %v261, %v261
      %v294 = vpack.c.bf16 %v262, %v262
      %v295 = vpack.c.bf16 %v263, %v263
      %v296 = vpack.c.bf16 %v264, %v264
      %v297 = vpack.c.bf16 %v265, %v265
      %v298 = vpack.c.bf16 %v266, %v266
      %v299 = vpack.c.bf16 %v267, %v267
      %v300 = vpack.c.bf16 %v268, %v268
      %v301 = vpack.c.bf16 %v269, %v269
      %v302 = vpack.c.bf16 %v270, %v270
      %v303 = vpack.c.bf16 %v271, %v271
      %v304 = vpack.c.bf16 %v272, %v272
      %v305 = vpack.c.bf16 %v273, %v273
      %v306 = vpack.c.bf16 %v274, %v274
      %v307 = vpack.c.bf16 %v275, %v275
      %v308 = vpack.c.bf16 %v276, %v276
      %v309 = vpack.c.bf16 %v277, %v277
      %v310 = vpack.c.bf16 %v278, %v278
      %v311 = vpack.c.bf16 %v279, %v279
      %v312 = vpack.c.bf16 %v280, %v280
      %v313 = vpack.c.bf16 %v281, %v281
      %v314 = vpack.c.bf16 %v282, %v282
      %v315 = vpack.c.bf16 %v283, %v283
      %v316 = vpack.c.bf16 %v284, %v284
      %v317 = vpack.c.bf16 %v285, %v285
      %v318 = vpack.c.bf16 %v286, %v286
      %vm319 = vsmask.f32 256
      %vm320 = vsmask.f32 4368
      %vm321 = vmor %vm319, %vm320
      %v323 = vshrl.u32 %v287, 16
      %v325 = vrot.slane %v323, 7
      %v326 = vshll.u32 %v287, 16
      %v328 = vor.u32 %v325, %v326
      %v329 = vrot.slane %v325, 4
      %v331 = vshrl.u32 %v288, 16
      %v333 = vrot.slane %v331, 7
      %v334 = vshll.u32 %v288, 16
      %v336 = vor.u32 %v333, %v334
      %v337 = vsel %vm321, %v329, %v336
      %v338 = vrot.slane %v333, 4
      %v340 = vshrl.u32 %v289, 16
      %v342 = vrot.slane %v340, 7
      %v343 = vshll.u32 %v289, 16
      %v345 = vor.u32 %v342, %v343
      %v346 = vrot.slane %v342, 4
      %v348 = vshrl.u32 %v290, 16
      %v350 = vrot.slane %v348, 7
      %v351 = vshll.u32 %v290, 16
      %v353 = vor.u32 %v350, %v351
      %v354 = vsel %vm321, %v346, %v353
      %v355 = vrot.slane %v350, 4
      %v357 = vshrl.u32 %v291, 16
      %v359 = vrot.slane %v357, 7
      %v360 = vshll.u32 %v291, 16
      %v362 = vor.u32 %v359, %v360
      %v363 = vrot.slane %v359, 4
      %v365 = vshrl.u32 %v292, 16
      %v367 = vrot.slane %v365, 7
      %v368 = vshll.u32 %v292, 16
      %v370 = vor.u32 %v367, %v368
      %v371 = vsel %vm321, %v363, %v370
      %v372 = vrot.slane %v367, 4
      %v374 = vshrl.u32 %v293, 16
      %v376 = vrot.slane %v374, 7
      %v377 = vshll.u32 %v293, 16
      %v379 = vor.u32 %v376, %v377
      %v380 = vrot.slane %v376, 4
      %v382 = vshrl.u32 %v294, 16
      %v384 = vrot.slane %v382, 7
      %v385 = vshll.u32 %v294, 16
      %v387 = vor.u32 %v384, %v385
      %v388 = vsel %vm321, %v380, %v387
      %v389 = vrot.slane %v384, 4
      %v391 = vshrl.u32 %v295, 16
      %v393 = vrot.slane %v391, 7
      %v394 = vshll.u32 %v295, 16
      %v396 = vor.u32 %v393, %v394
      %v397 = vrot.slane %v393, 4
      %v399 = vshrl.u32 %v296, 16
      %v401 = vrot.slane %v399, 7
      %v402 = vshll.u32 %v296, 16
      %v404 = vor.u32 %v401, %v402
      %v405 = vsel %vm321, %v397, %v404
      %v406 = vrot.slane %v401, 4
      %v408 = vshrl.u32 %v297, 16
      %v410 = vrot.slane %v408, 7
      %v411 = vshll.u32 %v297, 16
      %v413 = vor.u32 %v410, %v411
      %v414 = vrot.slane %v410, 4
      %v416 = vshrl.u32 %v298, 16
      %v418 = vrot.slane %v416, 7
      %v419 = vshll.u32 %v298, 16
      %v421 = vor.u32 %v418, %v419
      %v422 = vsel %vm321, %v414, %v421
      %v423 = vrot.slane %v418, 4
      %v425 = vshrl.u32 %v299, 16
      %v427 = vrot.slane %v425, 7
      %v428 = vshll.u32 %v299, 16
      %v430 = vor.u32 %v427, %v428
      %v431 = vrot.slane %v427, 4
      %v433 = vshrl.u32 %v300, 16
      %v435 = vrot.slane %v433, 7
      %v436 = vshll.u32 %v300, 16
      %v438 = vor.u32 %v435, %v436
      %v439 = vsel %vm321, %v431, %v438
      %v440 = vrot.slane %v435, 4
      %v442 = vshrl.u32 %v301, 16
      %v444 = vrot.slane %v442, 7
      %v445 = vshll.u32 %v301, 16
      %v447 = vor.u32 %v444, %v445
      %v448 = vrot.slane %v444, 4
      %v450 = vshrl.u32 %v302, 16
      %v452 = vrot.slane %v450, 7
      %v453 = vshll.u32 %v302, 16
      %v455 = vor.u32 %v452, %v453
      %v456 = vsel %vm321, %v448, %v455
      %v457 = vrot.slane %v452, 4
      %v459 = vshrl.u32 %v303, 16
      %v461 = vrot.slane %v459, 7
      %v462 = vshll.u32 %v303, 16
      %v464 = vor.u32 %v461, %v462
      %v465 = vrot.slane %v461, 4
      %v467 = vshrl.u32 %v304, 16
      %v469 = vrot.slane %v467, 7
      %v470 = vshll.u32 %v304, 16
      %v472 = vor.u32 %v469, %v470
      %v473 = vsel %vm321, %v465, %v472
      %v474 = vrot.slane %v469, 4
      %v476 = vshrl.u32 %v305, 16
      %v478 = vrot.slane %v476, 7
      %v479 = vshll.u32 %v305, 16
      %v481 = vor.u32 %v478, %v479
      %v482 = vrot.slane %v478, 4
      %v484 = vshrl.u32 %v306, 16
      %v486 = vrot.slane %v484, 7
      %v487 = vshll.u32 %v306, 16
      %v489 = vor.u32 %v486, %v487
      %v490 = vsel %vm321, %v482, %v489
      %v491 = vrot.slane %v486, 4
      %v493 = vshrl.u32 %v307, 16
      %v495 = vrot.slane %v493, 7
      %v496 = vshll.u32 %v307, 16
      %v498 = vor.u32 %v495, %v496
      %v499 = vrot.slane %v495, 4
      %v501 = vshrl.u32 %v308, 16
      %v503 = vrot.slane %v501, 7
      %v504 = vshll.u32 %v308, 16
      %v506 = vor.u32 %v503, %v504
      %v507 = vsel %vm321, %v499, %v506
      %v508 = vrot.slane %v503, 4
      %v510 = vshrl.u32 %v309, 16
      %v512 = vrot.slane %v510, 7
      %v513 = vshll.u32 %v309, 16
      %v515 = vor.u32 %v512, %v513
      %v516 = vrot.slane %v512, 4
      %v518 = vshrl.u32 %v310, 16
      %v520 = vrot.slane %v518, 7
      %v521 = vshll.u32 %v310, 16
      %v523 = vor.u32 %v520, %v521
      %v524 = vsel %vm321, %v516, %v523
      %v525 = vrot.slane %v520, 4
      %v527 = vshrl.u32 %v311, 16
      %v529 = vrot.slane %v527, 7
      %v530 = vshll.u32 %v311, 16
      %v532 = vor.u32 %v529, %v530
      %v533 = vrot.slane %v529, 4
      %v535 = vshrl.u32 %v312, 16
      %v537 = vrot.slane %v535, 7
      %v538 = vshll.u32 %v312, 16
      %v540 = vor.u32 %v537, %v538
      %v541 = vsel %vm321, %v533, %v540
      %v542 = vrot.slane %v537, 4
      %v544 = vshrl.u32 %v313, 16
      %v546 = vrot.slane %v544, 7
      %v547 = vshll.u32 %v313, 16
      %v549 = vor.u32 %v546, %v547
      %v550 = vrot.slane %v546, 4
      %v552 = vshrl.u32 %v314, 16
      %v554 = vrot.slane %v552, 7
      %v555 = vshll.u32 %v314, 16
      %v557 = vor.u32 %v554, %v555
      %v558 = vsel %vm321, %v550, %v557
      %v559 = vrot.slane %v554, 4
      %v561 = vshrl.u32 %v315, 16
      %v563 = vrot.slane %v561, 7
      %v564 = vshll.u32 %v315, 16
      %v566 = vor.u32 %v563, %v564
      %v567 = vrot.slane %v563, 4
      %v569 = vshrl.u32 %v316, 16
      %v571 = vrot.slane %v569, 7
      %v572 = vshll.u32 %v316, 16
      %v574 = vor.u32 %v571, %v572
      %v575 = vsel %vm321, %v567, %v574
      %v576 = vrot.slane %v571, 4
      %v578 = vshrl.u32 %v317, 16
      %v580 = vrot.slane %v578, 7
      %v581 = vshll.u32 %v317, 16
      %v583 = vor.u32 %v580, %v581
      %v584 = vrot.slane %v580, 4
      %v586 = vshrl.u32 %v318, 16
      %v588 = vrot.slane %v586, 7
      %v589 = vshll.u32 %v318, 16
      %v591 = vor.u32 %v588, %v589
      %v592 = vsel %vm321, %v584, %v591
      %v593 = vrot.slane %v588, 4
      %s642 = scalar_lea.vmem [#allocation2], 12
      %vm643 = vcmask 519168
      %vm644 = vsmask.f32 7938
      %vm645 = vmand %vm643, %vm644
      %v646 = vld [vmem:[%s642] sm:$0xf]
      %v647 = vsel %vm645, %v328, %v646
      %648 = vst [vmem:[%s642] sm:$0xf] %v647
      %649 = vst.msk [vmem:[%s642 + $0x4] sm:$0xf] %vm145, %v337
      %vm650 = vcmask 516096
      %vm651 = vmand %vm650, %vm319
      %v652 = vld [vmem:[%s642 + $0x8] sm:$0x1]
      %v653 = vsel %vm651, %v338, %v652
      %654 = vst [vmem:[%s642 + $0x8] sm:$0x1] %v653
      %v655 = vld [vmem:[%s642 + $0xc] sm:$0xf]
      %v656 = vsel %vm645, %v345, %v655
      %657 = vst [vmem:[%s642 + $0xc] sm:$0xf] %v656
      %658 = vst.msk [vmem:[%s642 + $0x10] sm:$0xf] %vm145, %v354
      %v659 = vld [vmem:[%s642 + $0x14] sm:$0x1]
      %v660 = vsel %vm651, %v355, %v659
      %661 = vst [vmem:[%s642 + $0x14] sm:$0x1] %v660
      %v662 = vld [vmem:[%s642 + $0x18] sm:$0xf]
      %v663 = vsel %vm645, %v362, %v662
      %664 = vst [vmem:[%s642 + $0x18] sm:$0xf] %v663
      %665 = vst.msk [vmem:[%s642 + $0x1c] sm:$0xf] %vm145, %v371
      %v666 = vld [vmem:[%s642 + $0x20] sm:$0x1]
      %v667 = vsel %vm651, %v372, %v666
      %668 = vst [vmem:[%s642 + $0x20] sm:$0x1] %v667
      %v669 = vld [vmem:[%s642 + $0x24] sm:$0xf]
      %v670 = vsel %vm645, %v379, %v669
      %671 = vst [vmem:[%s642 + $0x24] sm:$0xf] %v670
      %672 = vst.msk [vmem:[%s642 + $0x28] sm:$0xf] %vm145, %v388
      %v673 = vld [vmem:[%s642 + $0x2c] sm:$0x1]
      %v674 = vsel %vm651, %v389, %v673
      %675 = vst [vmem:[%s642 + $0x2c] sm:$0x1] %v674
      %v676 = vld [vmem:[%s642 + $0x30] sm:$0xf]
      %v677 = vsel %vm645, %v396, %v676
      %678 = vst [vmem:[%s642 + $0x30] sm:$0xf] %v677
      %679 = vst.msk [vmem:[%s642 + $0x34] sm:$0xf] %vm145, %v405
      %v680 = vld [vmem:[%s642 + $0x38] sm:$0x1]
      %v681 = vsel %vm651, %v406, %v680
      %682 = vst [vmem:[%s642 + $0x38] sm:$0x1] %v681
      %v683 = vld [vmem:[%s642 + $0x3c] sm:$0xf]
      %v684 = vsel %vm645, %v413, %v683
      %685 = vst [vmem:[%s642 + $0x3c] sm:$0xf] %v684
      %686 = vst.msk [vmem:[%s642 + $0x40] sm:$0xf] %vm145, %v422
      %v687 = vld [vmem:[%s642 + $0x44] sm:$0x1]
      %v688 = vsel %vm651, %v423, %v687
      %689 = vst [vmem:[%s642 + $0x44] sm:$0x1] %v688
      %v690 = vld [vmem:[%s642 + $0x48] sm:$0xf]
      %v691 = vsel %vm645, %v430, %v690
      %692 = vst [vmem:[%s642 + $0x48] sm:$0xf] %v691
      %693 = vst.msk [vmem:[%s642 + $0x4c] sm:$0xf] %vm145, %v439
      %v694 = vld [vmem:[%s642 + $0x50] sm:$0x1]
      %v695 = vsel %vm651, %v440, %v694
      %696 = vst [vmem:[%s642 + $0x50] sm:$0x1] %v695
      %v697 = vld [vmem:[%s642 + $0x54] sm:$0xf]
      %v698 = vsel %vm645, %v447, %v697
      %699 = vst [vmem:[%s642 + $0x54] sm:$0xf] %v698
      %700 = vst.msk [vmem:[%s642 + $0x58] sm:$0xf] %vm145, %v456
      %v701 = vld [vmem:[%s642 + $0x5c] sm:$0x1]
      %v702 = vsel %vm651, %v457, %v701
      %703 = vst [vmem:[%s642 + $0x5c] sm:$0x1] %v702
      %v704 = vld [vmem:[%s642 + $0x60] sm:$0xf]
      %v705 = vsel %vm645, %v464, %v704
      %706 = vst [vmem:[%s642 + $0x60] sm:$0xf] %v705
      %707 = vst.msk [vmem:[%s642 + $0x64] sm:$0xf] %vm145, %v473
      %v708 = vld [vmem:[%s642 + $0x68] sm:$0x1]
      %v709 = vsel %vm651, %v474, %v708
      %710 = vst [vmem:[%s642 + $0x68] sm:$0x1] %v709
      %v711 = vld [vmem:[%s642 + $0x6c] sm:$0xf]
      %v712 = vsel %vm645, %v481, %v711
      %713 = vst [vmem:[%s642 + $0x6c] sm:$0xf] %v712
      %714 = vst.msk [vmem:[%s642 + $0x70] sm:$0xf] %vm145, %v490
      %v715 = vld [vmem:[%s642 + $0x74] sm:$0x1]
      %v716 = vsel %vm651, %v491, %v715
      %717 = vst [vmem:[%s642 + $0x74] sm:$0x1] %v716
      %v718 = vld [vmem:[%s642 + $0x78] sm:$0xf]
      %v719 = vsel %vm645, %v498, %v718
      %720 = vst [vmem:[%s642 + $0x78] sm:$0xf] %v719
      %721 = vst.msk [vmem:[%s642 + $0x7c] sm:$0xf] %vm145, %v507
      %v722 = vld [vmem:[%s642 + $0x80] sm:$0x1]
      %v723 = vsel %vm651, %v508, %v722
      %724 = vst [vmem:[%s642 + $0x80] sm:$0x1] %v723
      %v725 = vld [vmem:[%s642 + $0x84] sm:$0xf]
      %v726 = vsel %vm645, %v515, %v725
      %727 = vst [vmem:[%s642 + $0x84] sm:$0xf] %v726
      %728 = vst.msk [vmem:[%s642 + $0x88] sm:$0xf] %vm145, %v524
      %v729 = vld [vmem:[%s642 + $0x8c] sm:$0x1]
      %v730 = vsel %vm651, %v525, %v729
      %731 = vst [vmem:[%s642 + $0x8c] sm:$0x1] %v730
      %v732 = vld [vmem:[%s642 + $0x90] sm:$0xf]
      %v733 = vsel %vm645, %v532, %v732
      %734 = vst [vmem:[%s642 + $0x90] sm:$0xf] %v733
      %735 = vst.msk [vmem:[%s642 + $0x94] sm:$0xf] %vm145, %v541
      %v736 = vld [vmem:[%s642 + $0x98] sm:$0x1]
      %v737 = vsel %vm651, %v542, %v736
      %738 = vst [vmem:[%s642 + $0x98] sm:$0x1] %v737
      %v739 = vld [vmem:[%s642 + $0x9c] sm:$0xf]
      %v740 = vsel %vm645, %v549, %v739
      %741 = vst [vmem:[%s642 + $0x9c] sm:$0xf] %v740
      %742 = vst.msk [vmem:[%s642 + $0xa0] sm:$0xf] %vm145, %v558
      %v743 = vld [vmem:[%s642 + $0xa4] sm:$0x1]
      %v744 = vsel %vm651, %v559, %v743
      %745 = vst [vmem:[%s642 + $0xa4] sm:$0x1] %v744
      %v746 = vld [vmem:[%s642 + $0xa8] sm:$0xf]
      %v747 = vsel %vm645, %v566, %v746
      %748 = vst [vmem:[%s642 + $0xa8] sm:$0xf] %v747
      %749 = vst.msk [vmem:[%s642 + $0xac] sm:$0xf] %vm145, %v575
      %v750 = vld [vmem:[%s642 + $0xb0] sm:$0x1]
      %v751 = vsel %vm651, %v576, %v750
      %752 = vst [vmem:[%s642 + $0xb0] sm:$0x1] %v751
      %v753 = vld [vmem:[%s642 + $0xb4] sm:$0xf]
      %v754 = vsel %vm645, %v583, %v753
      %755 = vst [vmem:[%s642 + $0xb4] sm:$0xf] %v754
      %756 = vst.msk [vmem:[%s642 + $0xb8] sm:$0xf] %vm145, %v592
      %v757 = vld [vmem:[%s642 + $0xbc] sm:$0x1]
      %v758 = vsel %vm651, %v593, %v757
      %759 = vst [vmem:[%s642 + $0xbc] sm:$0x1] %v758
      %v760 = vld [vmem:[%s1] sm:$0xff]
      %v761 = vld [vmem:[%s1 + $0x8] sm:$0xff]
      %v762 = vld [vmem:[%s1 + $0x10] sm:$0xff]
      %v763 = vld [vmem:[%s1 + $0x18] sm:$0xff]
      %v764 = vld [vmem:[%s1 + $0x20] sm:$0xff]
      %v765 = vld [vmem:[%s1 + $0x28] sm:$0xff]
      %v766 = vld [vmem:[%s1 + $0x30] sm:$0xff]
      %v767 = vld [vmem:[%s1 + $0x38] sm:$0xff]
      %v768 = vld [vmem:[%s1 + $0x40] sm:$0xff]
      %v769 = vld [vmem:[%s1 + $0x48] sm:$0xff]
      %v770 = vld [vmem:[%s1 + $0x50] sm:$0xff]
      %v771 = vld [vmem:[%s1 + $0x58] sm:$0xff]
      %v772 = vld [vmem:[%s1 + $0x60] sm:$0xff]
      %v773 = vld [vmem:[%s1 + $0x68] sm:$0xff]
      %v774 = vld [vmem:[%s1 + $0x70] sm:$0xff]
      %v775 = vld [vmem:[%s1 + $0x78] sm:$0xff]
      %v776 = vld [vmem:[%s1 + $0x80] sm:$0xff]
      %v777 = vld [vmem:[%s1 + $0x88] sm:$0xff]
      %v778 = vld [vmem:[%s1 + $0x90] sm:$0xff]
      %v779 = vld [vmem:[%s1 + $0x98] sm:$0xff]
      %v780 = vld [vmem:[%s1 + $0xa0] sm:$0xff]
      %v781 = vld [vmem:[%s1 + $0xa8] sm:$0xff]
      %v782 = vld [vmem:[%s1 + $0xb0] sm:$0xff]
      %v783 = vld [vmem:[%s1 + $0xb8] sm:$0xff]
      %v784 = vld [vmem:[#allocation2] sm:$0xf]
      %v785 = vld [vmem:[#allocation2 + $0x4] sm:$0xf]
      %v786 = vld [vmem:[#allocation2 + $0x8] sm:$0x1]
      %v787 = vld [vmem:[#allocation2 + $0xc] sm:$0xf]
      %v788 = vld [vmem:[#allocation2 + $0x10] sm:$0xf]
      %v789 = vld [vmem:[#allocation2 + $0x14] sm:$0x1]
      %v790 = vld [vmem:[#allocation2 + $0x18] sm:$0xf]
      %v791 = vld [vmem:[#allocation2 + $0x1c] sm:$0xf]
      %v792 = vld [vmem:[#allocation2 + $0x20] sm:$0x1]
      %v793 = vld [vmem:[#allocation2 + $0x24] sm:$0xf]
      %v794 = vld [vmem:[#allocation2 + $0x28] sm:$0xf]
      %v795 = vld [vmem:[#allocation2 + $0x2c] sm:$0x1]
      %v796 = vld [vmem:[#allocation2 + $0x30] sm:$0xf]
      %v797 = vld [vmem:[#allocation2 + $0x34] sm:$0xf]
      %v798 = vld [vmem:[#allocation2 + $0x38] sm:$0x1]
      %v799 = vld [vmem:[#allocation2 + $0x3c] sm:$0xf]
      %v800 = vld [vmem:[#allocation2 + $0x40] sm:$0xf]
      %v801 = vld [vmem:[#allocation2 + $0x44] sm:$0x1]
      %v802 = vld [vmem:[#allocation2 + $0x48] sm:$0xf]
      %v803 = vld [vmem:[#allocation2 + $0x4c] sm:$0xf]
      %v804 = vld [vmem:[#allocation2 + $0x50] sm:$0x1]
      %v805 = vld [vmem:[#allocation2 + $0x54] sm:$0xf]
      %v806 = vld [vmem:[#allocation2 + $0x58] sm:$0xf]
      %v807 = vld [vmem:[#allocation2 + $0x5c] sm:$0x1]
      %v808 = vld [vmem:[#allocation2 + $0x60] sm:$0xf]
      %v809 = vld [vmem:[#allocation2 + $0x64] sm:$0xf]
      %v810 = vld [vmem:[#allocation2 + $0x68] sm:$0x1]
      %v811 = vld [vmem:[#allocation2 + $0x6c] sm:$0xf]
      %v812 = vld [vmem:[#allocation2 + $0x70] sm:$0xf]
      %v813 = vld [vmem:[#allocation2 + $0x74] sm:$0x1]
      %v814 = vld [vmem:[#allocation2 + $0x78] sm:$0xf]
      %v815 = vld [vmem:[#allocation2 + $0x7c] sm:$0xf]
      %v816 = vld [vmem:[#allocation2 + $0x80] sm:$0x1]
      %v817 = vld [vmem:[#allocation2 + $0x84] sm:$0xf]
      %v818 = vld [vmem:[#allocation2 + $0x88] sm:$0xf]
      %v819 = vld [vmem:[#allocation2 + $0x8c] sm:$0x1]
      %v820 = vld [vmem:[#allocation2 + $0x90] sm:$0xf]
      %v821 = vld [vmem:[#allocation2 + $0x94] sm:$0xf]
      %v822 = vld [vmem:[#allocation2 + $0x98] sm:$0x1]
      %v823 = vld [vmem:[#allocation2 + $0x9c] sm:$0xf]
      %v824 = vld [vmem:[#allocation2 + $0xa0] sm:$0xf]
      %v825 = vld [vmem:[#allocation2 + $0xa4] sm:$0x1]
      %v826 = vld [vmem:[#allocation2 + $0xa8] sm:$0xf]
      %v827 = vld [vmem:[#allocation2 + $0xac] sm:$0xf]
      %v828 = vld [vmem:[#allocation2 + $0xb0] sm:$0x1]
      %v829 = vld [vmem:[#allocation2 + $0xb4] sm:$0xf]
      %v830 = vld [vmem:[#allocation2 + $0xb8] sm:$0xf]
      %v831 = vld [vmem:[#allocation2 + $0xbc] sm:$0x1]
      %v832 = vld [vmem:[#allocation2 + $0xc0] sm:$0xf]
      %v833 = vld [vmem:[#allocation2 + $0xc4] sm:$0xf]
      %v834 = vld [vmem:[#allocation2 + $0xc8] sm:$0x1]
      %v835 = vld [vmem:[#allocation2 + $0xcc] sm:$0xf]
      %v836 = vld [vmem:[#allocation2 + $0xd0] sm:$0xf]
      %v837 = vld [vmem:[#allocation2 + $0xd4] sm:$0x1]
      %v874 = vunpack.c.l.b16 %v784
      %v875 = vunpack.c.l.b16 %v785
      %v876 = vunpack.c.l.b16 %v787
      %v877 = vunpack.c.l.b16 %v788
      %v878 = vunpack.c.l.b16 %v790
      %v879 = vunpack.c.l.b16 %v791
      %v880 = vunpack.c.l.b16 %v793
      %v881 = vunpack.c.l.b16 %v794
      %v882 = vunpack.c.l.b16 %v796
      %v883 = vunpack.c.l.b16 %v797
      %v884 = vunpack.c.l.b16 %v799
      %v885 = vunpack.c.l.b16 %v800
      %v886 = vunpack.c.l.b16 %v802
      %v887 = vunpack.c.l.b16 %v803
      %v888 = vunpack.c.l.b16 %v805
      %v889 = vunpack.c.l.b16 %v806
      %v890 = vunpack.c.l.b16 %v808
      %v891 = vunpack.c.l.b16 %v809
      %v892 = vunpack.c.l.b16 %v811
      %v893 = vunpack.c.l.b16 %v812
      %v894 = vunpack.c.l.b16 %v814
      %v895 = vunpack.c.l.b16 %v815
      %v896 = vunpack.c.l.b16 %v817
      %v897 = vunpack.c.l.b16 %v818
      %v898 = vunpack.c.l.b16 %v820
      %v899 = vunpack.c.l.b16 %v821
      %v900 = vunpack.c.l.b16 %v823
      %v901 = vunpack.c.l.b16 %v824
      %v902 = vunpack.c.l.b16 %v826
      %v903 = vunpack.c.l.b16 %v827
      %v904 = vunpack.c.l.b16 %v829
      %v905 = vunpack.c.l.b16 %v830
      %v906 = vunpack.c.l.b16 %v832
      %v907 = vunpack.c.l.b16 %v833
      %v908 = vunpack.c.l.b16 %v835
      %v909 = vunpack.c.l.b16 %v836
      %v910 = vpack.c.b16 %v875, %v874
      %v911 = vpack.c.b16 %v877, %v876
      %v912 = vpack.c.b16 %v879, %v878
      %v913 = vpack.c.b16 %v881, %v880
      %v914 = vpack.c.b16 %v883, %v882
      %v915 = vpack.c.b16 %v885, %v884
      %v916 = vpack.c.b16 %v887, %v886
      %v917 = vpack.c.b16 %v889, %v888
      %v918 = vpack.c.b16 %v891, %v890
      %v919 = vpack.c.b16 %v893, %v892
      %v920 = vpack.c.b16 %v895, %v894
      %v921 = vpack.c.b16 %v897, %v896
      %v922 = vpack.c.b16 %v899, %v898
      %v923 = vpack.c.b16 %v901, %v900
      %v924 = vpack.c.b16 %v903, %v902
      %v925 = vpack.c.b16 %v905, %v904
      %v926 = vpack.c.b16 %v907, %v906
      %v927 = vpack.c.b16 %v909, %v908
      %v946 = vunpack.c.l.b16 %v786
      %v947 = vunpack.c.l.b16 %v789
      %v948 = vunpack.c.l.b16 %v792
      %v949 = vunpack.c.l.b16 %v795
      %v950 = vunpack.c.l.b16 %v798
      %v951 = vunpack.c.l.b16 %v801
      %v952 = vunpack.c.l.b16 %v804
      %v953 = vunpack.c.l.b16 %v807
      %v954 = vunpack.c.l.b16 %v810
      %v955 = vunpack.c.l.b16 %v813
      %v956 = vunpack.c.l.b16 %v816
      %v957 = vunpack.c.l.b16 %v819
      %v958 = vunpack.c.l.b16 %v822
      %v959 = vunpack.c.l.b16 %v825
      %v960 = vunpack.c.l.b16 %v828
      %v961 = vunpack.c.l.b16 %v831
      %v962 = vunpack.c.l.b16 %v834
      %v963 = vunpack.c.l.b16 %v837
      %v964 = vpack.c.b16 %v946, %v946
      %v965 = vpack.c.b16 %v947, %v947
      %v966 = vpack.c.b16 %v948, %v948
      %v967 = vpack.c.b16 %v949, %v949
      %v968 = vpack.c.b16 %v950, %v950
      %v969 = vpack.c.b16 %v951, %v951
      %v970 = vpack.c.b16 %v952, %v952
      %v971 = vpack.c.b16 %v953, %v953
      %v972 = vpack.c.b16 %v954, %v954
      %v973 = vpack.c.b16 %v955, %v955
      %v974 = vpack.c.b16 %v956, %v956
      %v975 = vpack.c.b16 %v957, %v957
      %v976 = vpack.c.b16 %v958, %v958
      %v977 = vpack.c.b16 %v959, %v959
      %v978 = vpack.c.b16 %v960, %v960
      %v979 = vpack.c.b16 %v961, %v961
      %v980 = vpack.c.b16 %v962, %v962
      %v981 = vpack.c.b16 %v963, %v963
      %vm982 = vsmask.f32 7424
      %v984 = vshrl.u32 %v910, 16
      %v986 = vshll.u32 %v910, 16
      %v988 = vrot.slane %v986, 1
      %v989 = vor.u32 %v984, %v988
      %v991 = vshll.u32 %v964, 16
      %v993 = vrot.slane %v991, 1
      %v994 = vsel %vm982, %v989, %v993
      %v996 = vshrl.u32 %v911, 16
      %v998 = vshll.u32 %v911, 16
      %v1000 = vrot.slane %v998, 1
      %v1001 = vor.u32 %v996, %v1000
      %v1003 = vshll.u32 %v965, 16
      %v1005 = vrot.slane %v1003, 1
      %v1006 = vsel %vm982, %v1001, %v1005
      %v1008 = vshrl.u32 %v912, 16
      %v1010 = vshll.u32 %v912, 16
      %v1012 = vrot.slane %v1010, 1
      %v1013 = vor.u32 %v1008, %v1012
      %v1015 = vshll.u32 %v966, 16
      %v1017 = vrot.slane %v1015, 1
      %v1018 = vsel %vm982, %v1013, %v1017
      %v1020 = vshrl.u32 %v913, 16
      %v1022 = vshll.u32 %v913, 16
      %v1024 = vrot.slane %v1022, 1
      %v1025 = vor.u32 %v1020, %v1024
      %v1027 = vshll.u32 %v967, 16
      %v1029 = vrot.slane %v1027, 1
      %v1030 = vsel %vm982, %v1025, %v1029
      %v1032 = vshrl.u32 %v914, 16
      %v1034 = vshll.u32 %v914, 16
      %v1036 = vrot.slane %v1034, 1
      %v1037 = vor.u32 %v1032, %v1036
      %v1039 = vshll.u32 %v968, 16
      %v1041 = vrot.slane %v1039, 1
      %v1042 = vsel %vm982, %v1037, %v1041
      %v1044 = vshrl.u32 %v915, 16
      %v1046 = vshll.u32 %v915, 16
      %v1048 = vrot.slane %v1046, 1
      %v1049 = vor.u32 %v1044, %v1048
      %v1051 = vshll.u32 %v969, 16
      %v1053 = vrot.slane %v1051, 1
      %v1054 = vsel %vm982, %v1049, %v1053
      %v1056 = vshrl.u32 %v916, 16
      %v1058 = vshll.u32 %v916, 16
      %v1060 = vrot.slane %v1058, 1
      %v1061 = vor.u32 %v1056, %v1060
      %v1063 = vshll.u32 %v970, 16
      %v1065 = vrot.slane %v1063, 1
      %v1066 = vsel %vm982, %v1061, %v1065
      %v1068 = vshrl.u32 %v917, 16
      %v1070 = vshll.u32 %v917, 16
      %v1072 = vrot.slane %v1070, 1
      %v1073 = vor.u32 %v1068, %v1072
      %v1075 = vshll.u32 %v971, 16
      %v1077 = vrot.slane %v1075, 1
      %v1078 = vsel %vm982, %v1073, %v1077
      %v1080 = vshrl.u32 %v918, 16
      %v1082 = vshll.u32 %v918, 16
      %v1084 = vrot.slane %v1082, 1
      %v1085 = vor.u32 %v1080, %v1084
      %v1087 = vshll.u32 %v972, 16
      %v1089 = vrot.slane %v1087, 1
      %v1090 = vsel %vm982, %v1085, %v1089
      %v1092 = vshrl.u32 %v919, 16
      %v1094 = vshll.u32 %v919, 16
      %v1096 = vrot.slane %v1094, 1
      %v1097 = vor.u32 %v1092, %v1096
      %v1099 = vshll.u32 %v973, 16
      %v1101 = vrot.slane %v1099, 1
      %v1102 = vsel %vm982, %v1097, %v1101
      %v1104 = vshrl.u32 %v920, 16
      %v1106 = vshll.u32 %v920, 16
      %v1108 = vrot.slane %v1106, 1
      %v1109 = vor.u32 %v1104, %v1108
      %v1111 = vshll.u32 %v974, 16
      %v1113 = vrot.slane %v1111, 1
      %v1114 = vsel %vm982, %v1109, %v1113
      %v1116 = vshrl.u32 %v921, 16
      %v1118 = vshll.u32 %v921, 16
      %v1120 = vrot.slane %v1118, 1
      %v1121 = vor.u32 %v1116, %v1120
      %v1123 = vshll.u32 %v975, 16
      %v1125 = vrot.slane %v1123, 1
      %v1126 = vsel %vm982, %v1121, %v1125
      %v1128 = vshrl.u32 %v922, 16
      %v1130 = vshll.u32 %v922, 16
      %v1132 = vrot.slane %v1130, 1
      %v1133 = vor.u32 %v1128, %v1132
      %v1135 = vshll.u32 %v976, 16
      %v1137 = vrot.slane %v1135, 1
      %v1138 = vsel %vm982, %v1133, %v1137
      %v1140 = vshrl.u32 %v923, 16
      %v1142 = vshll.u32 %v923, 16
      %v1144 = vrot.slane %v1142, 1
      %v1145 = vor.u32 %v1140, %v1144
      %v1147 = vshll.u32 %v977, 16
      %v1149 = vrot.slane %v1147, 1
      %v1150 = vsel %vm982, %v1145, %v1149
      %v1152 = vshrl.u32 %v924, 16
      %v1154 = vshll.u32 %v924, 16
      %v1156 = vrot.slane %v1154, 1
      %v1157 = vor.u32 %v1152, %v1156
      %v1159 = vshll.u32 %v978, 16
      %v1161 = vrot.slane %v1159, 1
      %v1162 = vsel %vm982, %v1157, %v1161
      %v1164 = vshrl.u32 %v925, 16
      %v1166 = vshll.u32 %v925, 16
      %v1168 = vrot.slane %v1166, 1
      %v1169 = vor.u32 %v1164, %v1168
      %v1171 = vshll.u32 %v979, 16
      %v1173 = vrot.slane %v1171, 1
      %v1174 = vsel %vm982, %v1169, %v1173
      %v1176 = vshrl.u32 %v926, 16
      %v1178 = vshll.u32 %v926, 16
      %v1180 = vrot.slane %v1178, 1
      %v1181 = vor.u32 %v1176, %v1180
      %v1183 = vshll.u32 %v980, 16
      %v1185 = vrot.slane %v1183, 1
      %v1186 = vsel %vm982, %v1181, %v1185
      %v1188 = vshrl.u32 %v927, 16
      %v1190 = vshll.u32 %v927, 16
      %v1192 = vrot.slane %v1190, 1
      %v1193 = vor.u32 %v1188, %v1192
      %v1195 = vshll.u32 %v981, 16
      %v1197 = vrot.slane %v1195, 1
      %v1198 = vsel %vm982, %v1193, %v1197
      %1199 = vrot.lane.b32.xlu0 %v994, 64
      %v1200 = vpop.permute.xlu0 %1199
      %1201 = vrot.lane.b32.xlu0 %v1006, 64
      %v1202 = vpop.permute.xlu0 %1201
      %1203 = vrot.lane.b32.xlu0 %v1018, 64
      %v1204 = vpop.permute.xlu0 %1203
      %1205 = vrot.lane.b32.xlu0 %v1030, 64
      %v1206 = vpop.permute.xlu0 %1205
      %1207 = vrot.lane.b32.xlu0 %v1042, 64
      %v1208 = vpop.permute.xlu0 %1207
      %1209 = vrot.lane.b32.xlu0 %v1054, 64
      %v1210 = vpop.permute.xlu0 %1209
      %1211 = vrot.lane.b32.xlu0 %v1066, 64
      %v1212 = vpop.permute.xlu0 %1211
      %1213 = vrot.lane.b32.xlu0 %v1078, 64
      %v1214 = vpop.permute.xlu0 %1213
      %1215 = vrot.lane.b32.xlu0 %v1090, 64
      %v1216 = vpop.permute.xlu0 %1215
      %1217 = vrot.lane.b32.xlu0 %v1102, 64
      %v1218 = vpop.permute.xlu0 %1217
      %1219 = vrot.lane.b32.xlu0 %v1114, 64
      %v1220 = vpop.permute.xlu0 %1219
      %1221 = vrot.lane.b32.xlu0 %v1126, 64
      %v1222 = vpop.permute.xlu0 %1221
      %1223 = vrot.lane.b32.xlu0 %v1138, 64
      %v1224 = vpop.permute.xlu0 %1223
      %1225 = vrot.lane.b32.xlu0 %v1150, 64
      %v1226 = vpop.permute.xlu0 %1225
      %1227 = vrot.lane.b32.xlu0 %v1162, 64
      %v1228 = vpop.permute.xlu0 %1227
      %1229 = vrot.lane.b32.xlu0 %v1174, 64
      %v1230 = vpop.permute.xlu0 %1229
      %1231 = vrot.lane.b32.xlu0 %v1186, 64
      %v1232 = vpop.permute.xlu0 %1231
      %1233 = vrot.lane.b32.xlu0 %v1198, 64
      %v1234 = vpop.permute.xlu0 %1233
      %vm1235 = vcmask 1046528
      %v1236 = vrot.slane %v910, 1
      %v1237 = vrot.slane %v964, 1
      %v1238 = vsel %vm1235, %v1236, %v1237
      %v1239 = vrot.slane %v911, 1
      %v1240 = vrot.slane %v965, 1
      %v1241 = vsel %vm1235, %v1239, %v1240
      %v1242 = vrot.slane %v912, 1
      %v1243 = vrot.slane %v966, 1
      %v1244 = vsel %vm1235, %v1242, %v1243
      %v1245 = vrot.slane %v913, 1
      %v1246 = vrot.slane %v967, 1
      %v1247 = vsel %vm1235, %v1245, %v1246
      %v1248 = vrot.slane %v914, 1
      %v1249 = vrot.slane %v968, 1
      %v1250 = vsel %vm1235, %v1248, %v1249
      %v1251 = vrot.slane %v915, 1
      %v1252 = vrot.slane %v969, 1
      %v1253 = vsel %vm1235, %v1251, %v1252
      %v1254 = vrot.slane %v916, 1
      %v1255 = vrot.slane %v970, 1
      %v1256 = vsel %vm1235, %v1254, %v1255
      %v1257 = vrot.slane %v917, 1
      %v1258 = vrot.slane %v971, 1
      %v1259 = vsel %vm1235, %v1257, %v1258
      %v1260 = vrot.slane %v918, 1
      %v1261 = vrot.slane %v972, 1
      %v1262 = vsel %vm1235, %v1260, %v1261
      %v1263 = vrot.slane %v919, 1
      %v1264 = vrot.slane %v973, 1
      %v1265 = vsel %vm1235, %v1263, %v1264
      %v1266 = vrot.slane %v920, 1
      %v1267 = vrot.slane %v974, 1
      %v1268 = vsel %vm1235, %v1266, %v1267
      %v1269 = vrot.slane %v921, 1
      %v1270 = vrot.slane %v975, 1
      %v1271 = vsel %vm1235, %v1269, %v1270
      %v1272 = vrot.slane %v922, 1
      %v1273 = vrot.slane %v976, 1
      %v1274 = vsel %vm1235, %v1272, %v1273
      %v1275 = vrot.slane %v923, 1
      %v1276 = vrot.slane %v977, 1
      %v1277 = vsel %vm1235, %v1275, %v1276
      %v1278 = vrot.slane %v924, 1
      %v1279 = vrot.slane %v978, 1
      %v1280 = vsel %vm1235, %v1278, %v1279
      %v1281 = vrot.slane %v925, 1
      %v1282 = vrot.slane %v979, 1
      %v1283 = vsel %vm1235, %v1281, %v1282
      %v1284 = vrot.slane %v926, 1
      %v1285 = vrot.slane %v980, 1
      %v1286 = vsel %vm1235, %v1284, %v1285
      %v1287 = vrot.slane %v927, 1
      %v1288 = vrot.slane %v981, 1
      %v1289 = vsel %vm1235, %v1287, %v1288
      %vm1290 = vcmask 523264
      %v1292 = vsel %vm1290, %v910, %v1200
      %v1295 = vsel %vm1290, %v911, %v1202
      %v1298 = vsel %vm1290, %v912, %v1204
      %v1301 = vsel %vm1290, %v913, %v1206
      %v1304 = vsel %vm1290, %v914, %v1208
      %v1307 = vsel %vm1290, %v915, %v1210
      %v1310 = vsel %vm1290, %v916, %v1212
      %v1313 = vsel %vm1290, %v917, %v1214
      %v1316 = vsel %vm1290, %v918, %v1216
      %v1319 = vsel %vm1290, %v919, %v1218
      %v1322 = vsel %vm1290, %v920, %v1220
      %v1325 = vsel %vm1290, %v921, %v1222
      %v1328 = vsel %vm1290, %v922, %v1224
      %v1331 = vsel %vm1290, %v923, %v1226
      %v1334 = vsel %vm1290, %v924, %v1228
      %v1337 = vsel %vm1290, %v925, %v1230
      %v1340 = vsel %vm1290, %v926, %v1232
      %v1343 = vsel %vm1290, %v927, %v1234
      %v1369 = vunpack.c.l.b16 %v760
      %v1370 = vunpack.c.h.b16 %v760
      %v1371 = vunpack.c.l.b16 %v761
      %v1372 = vunpack.c.h.b16 %v761
      %v1373 = vunpack.c.l.b16 %v762
      %v1374 = vunpack.c.h.b16 %v762
      %v1375 = vunpack.c.l.b16 %v763
      %v1376 = vunpack.c.h.b16 %v763
      %v1377 = vunpack.c.l.b16 %v764
      %v1378 = vunpack.c.h.b16 %v764
      %v1379 = vunpack.c.l.b16 %v765
      %v1380 = vunpack.c.h.b16 %v765
      %v1381 = vunpack.c.l.b16 %v766
      %v1382 = vunpack.c.h.b16 %v766
      %v1383 = vunpack.c.l.b16 %v767
      %v1384 = vunpack.c.h.b16 %v767
      %v1385 = vunpack.c.l.b16 %v768
      %v1386 = vunpack.c.h.b16 %v768
      %v1387 = vunpack.c.l.b16 %v769
      %v1388 = vunpack.c.h.b16 %v769
      %v1389 = vunpack.c.l.b16 %v770
      %v1390 = vunpack.c.h.b16 %v770
      %v1391 = vunpack.c.l.b16 %v771
      %v1392 = vunpack.c.h.b16 %v771
      %v1393 = vunpack.c.l.b16 %v772
      %v1394 = vunpack.c.h.b16 %v772
      %v1395 = vunpack.c.l.b16 %v773
      %v1396 = vunpack.c.h.b16 %v773
      %v1397 = vunpack.c.l.b16 %v774
      %v1398 = vunpack.c.h.b16 %v774
      %v1399 = vunpack.c.l.b16 %v775
      %v1400 = vunpack.c.h.b16 %v775
      %v1401 = vunpack.c.l.b16 %v776
      %v1402 = vunpack.c.h.b16 %v776
      %v1403 = vunpack.c.l.b16 %v777
      %v1404 = vunpack.c.h.b16 %v777
      %v1405 = vunpack.c.l.b16 %v778
      %v1406 = vunpack.c.h.b16 %v778
      %v1407 = vunpack.c.l.b16 %v779
      %v1408 = vunpack.c.h.b16 %v779
      %v1409 = vunpack.c.l.b16 %v780
      %v1410 = vunpack.c.h.b16 %v780
      %v1411 = vunpack.c.l.b16 %v781
      %v1412 = vunpack.c.h.b16 %v781
      %v1413 = vunpack.c.l.b16 %v782
      %v1414 = vunpack.c.h.b16 %v782
      %v1415 = vunpack.c.l.b16 %v783
      %v1416 = vunpack.c.h.b16 %v783
      %v1417 = vpack.c.b16 %v1371, %v1369
      %v1418 = vpack.c.b16 %v1372, %v1370
      %v1419 = vpack.c.b16 %v1375, %v1373
      %v1420 = vpack.c.b16 %v1376, %v1374
      %v1421 = vpack.c.b16 %v1379, %v1377
      %v1422 = vpack.c.b16 %v1380, %v1378
      %v1423 = vpack.c.b16 %v1383, %v1381
      %v1424 = vpack.c.b16 %v1384, %v1382
      %v1425 = vpack.c.b16 %v1387, %v1385
      %v1426 = vpack.c.b16 %v1388, %v1386
      %v1427 = vpack.c.b16 %v1391, %v1389
      %v1428 = vpack.c.b16 %v1392, %v1390
      %v1429 = vpack.c.b16 %v1395, %v1393
      %v1430 = vpack.c.b16 %v1396, %v1394
      %v1431 = vpack.c.b16 %v1399, %v1397
      %v1432 = vpack.c.b16 %v1400, %v1398
      %v1433 = vpack.c.b16 %v1403, %v1401
      %v1434 = vpack.c.b16 %v1404, %v1402
      %v1435 = vpack.c.b16 %v1407, %v1405
      %v1436 = vpack.c.b16 %v1408, %v1406
      %v1437 = vpack.c.b16 %v1411, %v1409
      %v1438 = vpack.c.b16 %v1412, %v1410
      %v1439 = vpack.c.b16 %v1415, %v1413
      %v1440 = vpack.c.b16 %v1416, %v1414
      %v1466 = vsel %vm1290, %v1238, 0
      %v1469 = vsel %vm1290, %v1241, 0
      %v1472 = vsel %vm1290, %v1244, 0
      %v1475 = vsel %vm1290, %v1247, 0
      %v1478 = vsel %vm1290, %v1250, 0
      %v1481 = vsel %vm1290, %v1253, 0
      %v1484 = vsel %vm1290, %v1256, 0
      %v1487 = vsel %vm1290, %v1259, 0
      %v1490 = vsel %vm1290, %v1262, 0
      %v1493 = vsel %vm1290, %v1265, 0
      %v1496 = vsel %vm1290, %v1268, 0
      %v1499 = vsel %vm1290, %v1271, 0
      %v1502 = vsel %vm1290, %v1274, 0
      %v1505 = vsel %vm1290, %v1277, 0
      %v1508 = vsel %vm1290, %v1280, 0
      %v1511 = vsel %vm1290, %v1283, 0
      %v1514 = vsel %vm1290, %v1286, 0
      %v1517 = vsel %vm1290, %v1289, 0
      %1519 = vmatpush.bf16.msra.mxu0 %v1431
      %1520 = vmatpush.bf16.msra.mxu0 %v1429
      %1521 = vmatpush.bf16.msra.mxu0 %v1427
      %1522 = vmatpush.bf16.msra.mxu0 %v1425
      %1523 = vmatpush.bf16.msra.mxu0 %v1423
      %1524 = vmatpush.bf16.msra.mxu0 %v1421
      %1525 = vmatpush.bf16.msra.mxu0 %v1419
      %1526 = vmatpush.bf16.msra.mxu0 %v1417
      %1527 = vmatmul.bf16.gmra.mxu0 %v1292
      %v1528 = vpop.f32.mrf.mxu0
      %v1529 = vadd.f32 0.0, %v1528
      %v1530 = vpop.f32.mrf.mxu0
      %v1531 = vadd.f32 0.0, %v1530
      %1532 = vmatmul.bf16.gmra.mxu0 %v1295
      %v1533 = vpop.f32.mrf.mxu0
      %v1534 = vadd.f32 0.0, %v1533
      %v1535 = vpop.f32.mrf.mxu0
      %v1536 = vadd.f32 0.0, %v1535
      %1537 = vmatmul.bf16.gmra.mxu0 %v1298
      %v1538 = vpop.f32.mrf.mxu0
      %v1539 = vadd.f32 0.0, %v1538
      %v1540 = vpop.f32.mrf.mxu0
      %v1541 = vadd.f32 0.0, %v1540
      %1542 = vmatmul.bf16.gmra.mxu0 %v1301
      %v1543 = vpop.f32.mrf.mxu0
      %v1544 = vadd.f32 0.0, %v1543
      %v1545 = vpop.f32.mrf.mxu0
      %v1546 = vadd.f32 0.0, %v1545
      %1547 = vmatmul.bf16.gmra.mxu0 %v1304
      %v1548 = vpop.f32.mrf.mxu0
      %v1549 = vadd.f32 0.0, %v1548
      %v1550 = vpop.f32.mrf.mxu0
      %v1551 = vadd.f32 0.0, %v1550
      %1552 = vmatmul.bf16.gmra.mxu0 %v1307
      %v1553 = vpop.f32.mrf.mxu0
      %v1554 = vadd.f32 0.0, %v1553
      %v1555 = vpop.f32.mrf.mxu0
      %v1556 = vadd.f32 0.0, %v1555
      %1557 = vmatmul.bf16.gmra.mxu0 %v1310
      %v1558 = vpop.f32.mrf.mxu0
      %v1559 = vadd.f32 0.0, %v1558
      %v1560 = vpop.f32.mrf.mxu0
      %v1561 = vadd.f32 0.0, %v1560
      %1562 = vmatmul.bf16.gmra.mxu0 %v1313
      %v1563 = vpop.f32.mrf.mxu0
      %v1564 = vadd.f32 0.0, %v1563
      %v1565 = vpop.f32.mrf.mxu0
      %v1566 = vadd.f32 0.0, %v1565
      %1567 = vmatmul.bf16.gmra.mxu0 %v1316
      %v1568 = vpop.f32.mrf.mxu0
      %v1569 = vadd.f32 0.0, %v1568
      %v1570 = vpop.f32.mrf.mxu0
      %v1571 = vadd.f32 0.0, %v1570
      %1572 = vmatmul.bf16.gmra.mxu0 %v1319
      %v1573 = vpop.f32.mrf.mxu0
      %v1574 = vadd.f32 0.0, %v1573
      %v1575 = vpop.f32.mrf.mxu0
      %v1576 = vadd.f32 0.0, %v1575
      %1577 = vmatmul.bf16.gmra.mxu0 %v1322
      %v1578 = vpop.f32.mrf.mxu0
      %v1579 = vadd.f32 0.0, %v1578
      %v1580 = vpop.f32.mrf.mxu0
      %v1581 = vadd.f32 0.0, %v1580
      %1582 = vmatmul.bf16.gmra.mxu0 %v1325
      %v1583 = vpop.f32.mrf.mxu0
      %v1584 = vadd.f32 0.0, %v1583
      %v1585 = vpop.f32.mrf.mxu0
      %v1586 = vadd.f32 0.0, %v1585
      %1587 = vmatmul.bf16.gmra.mxu0 %v1328
      %v1588 = vpop.f32.mrf.mxu0
      %v1589 = vadd.f32 0.0, %v1588
      %v1590 = vpop.f32.mrf.mxu0
      %v1591 = vadd.f32 0.0, %v1590
      %1592 = vmatmul.bf16.gmra.mxu0 %v1331
      %v1593 = vpop.f32.mrf.mxu0
      %v1594 = vadd.f32 0.0, %v1593
      %v1595 = vpop.f32.mrf.mxu0
      %v1596 = vadd.f32 0.0, %v1595
      %1597 = vmatmul.bf16.gmra.mxu0 %v1334
      %v1598 = vpop.f32.mrf.mxu0
      %v1599 = vadd.f32 0.0, %v1598
      %v1600 = vpop.f32.mrf.mxu0
      %v1601 = vadd.f32 0.0, %v1600
      %1602 = vmatmul.bf16.gmra.mxu0 %v1337
      %v1603 = vpop.f32.mrf.mxu0
      %v1604 = vadd.f32 0.0, %v1603
      %v1605 = vpop.f32.mrf.mxu0
      %v1606 = vadd.f32 0.0, %v1605
      %1607 = vmatmul.bf16.gmra.mxu0 %v1340
      %v1608 = vpop.f32.mrf.mxu0
      %v1609 = vadd.f32 0.0, %v1608
      %v1610 = vpop.f32.mrf.mxu0
      %v1611 = vadd.f32 0.0, %v1610
      %1612 = vmatmul.bf16.gmra.mxu0 %v1343
      %v1613 = vpop.f32.mrf.mxu0
      %v1614 = vpop.f32.mrf.mxu0
      %1615 = vdwg.mxu0
      %1616 = vmatpush.bf16.msra.mxu0 0
      %1617 = vmatpush.bf16.msra.mxu0 0
      %1618 = vmatpush.bf16.msra.mxu0 0
      %1619 = vmatpush.bf16.msra.mxu0 0
      %1620 = vmatpush.bf16.msra.mxu0 %v1439
      %1621 = vmatpush.bf16.msra.mxu0 %v1437
      %1622 = vmatpush.bf16.msra.mxu0 %v1435
      %1623 = vmatpush.bf16.msra.mxu0 %v1433
      %1624 = vmatmul.bf16.gmra.mxu0 %v1466
      %v1625 = vpop.f32.mrf.mxu0
      %v1626 = vadd.f32 %v1529, %v1625
      %v1627 = vpop.f32.mrf.mxu0
      %v1628 = vadd.f32 %v1531, %v1627
      %1629 = vmatmul.bf16.gmra.mxu0 %v1469
      %v1630 = vpop.f32.mrf.mxu0
      %v1631 = vadd.f32 %v1534, %v1630
      %v1632 = vpop.f32.mrf.mxu0
      %v1633 = vadd.f32 %v1536, %v1632
      %1634 = vmatmul.bf16.gmra.mxu0 %v1472
      %v1635 = vpop.f32.mrf.mxu0
      %v1636 = vadd.f32 %v1539, %v1635
      %v1637 = vpop.f32.mrf.mxu0
      %v1638 = vadd.f32 %v1541, %v1637
      %1639 = vmatmul.bf16.gmra.mxu0 %v1475
      %v1640 = vpop.f32.mrf.mxu0
      %v1641 = vadd.f32 %v1544, %v1640
      %v1642 = vpop.f32.mrf.mxu0
      %v1643 = vadd.f32 %v1546, %v1642
      %1644 = vmatmul.bf16.gmra.mxu0 %v1478
      %v1645 = vpop.f32.mrf.mxu0
      %v1646 = vadd.f32 %v1549, %v1645
      %v1647 = vpop.f32.mrf.mxu0
      %v1648 = vadd.f32 %v1551, %v1647
      %1649 = vmatmul.bf16.gmra.mxu0 %v1481
      %v1650 = vpop.f32.mrf.mxu0
      %v1651 = vadd.f32 %v1554, %v1650
      %v1652 = vpop.f32.mrf.mxu0
      %v1653 = vadd.f32 %v1556, %v1652
      %1654 = vmatmul.bf16.gmra.mxu0 %v1484
      %v1655 = vpop.f32.mrf.mxu0
      %v1656 = vadd.f32 %v1559, %v1655
      %v1657 = vpop.f32.mrf.mxu0
      %v1658 = vadd.f32 %v1561, %v1657
      %1659 = vmatmul.bf16.gmra.mxu0 %v1487
      %v1660 = vpop.f32.mrf.mxu0
      %v1661 = vadd.f32 %v1564, %v1660
      %v1662 = vpop.f32.mrf.mxu0
      %v1663 = vadd.f32 %v1566, %v1662
      %1664 = vmatmul.bf16.gmra.mxu0 %v1490
      %v1665 = vpop.f32.mrf.mxu0
      %v1666 = vadd.f32 %v1569, %v1665
      %v1667 = vpop.f32.mrf.mxu0
      %v1668 = vadd.f32 %v1571, %v1667
      %1669 = vmatmul.bf16.gmra.mxu0 %v1493
      %v1670 = vpop.f32.mrf.mxu0
      %v1671 = vadd.f32 %v1574, %v1670
      %v1672 = vpop.f32.mrf.mxu0
      %v1673 = vadd.f32 %v1576, %v1672
      %1674 = vmatmul.bf16.gmra.mxu0 %v1496
      %v1675 = vpop.f32.mrf.mxu0
      %v1676 = vadd.f32 %v1579, %v1675
      %v1677 = vpop.f32.mrf.mxu0
      %v1678 = vadd.f32 %v1581, %v1677
      %1679 = vmatmul.bf16.gmra.mxu0 %v1499
      %v1680 = vpop.f32.mrf.mxu0
      %v1681 = vadd.f32 %v1584, %v1680
      %v1682 = vpop.f32.mrf.mxu0
      %v1683 = vadd.f32 %v1586, %v1682
      %1684 = vmatmul.bf16.gmra.mxu0 %v1502
      %v1685 = vpop.f32.mrf.mxu0
      %v1686 = vadd.f32 %v1589, %v1685
      %v1687 = vpop.f32.mrf.mxu0
      %v1688 = vadd.f32 %v1591, %v1687
      %1689 = vmatmul.bf16.gmra.mxu0 %v1505
      %v1690 = vpop.f32.mrf.mxu0
      %v1691 = vadd.f32 %v1594, %v1690
      %v1692 = vpop.f32.mrf.mxu0
      %v1693 = vadd.f32 %v1596, %v1692
      %1694 = vmatmul.bf16.gmra.mxu0 %v1508
      %v1695 = vpop.f32.mrf.mxu0
      %v1696 = vadd.f32 %v1599, %v1695
      %v1697 = vpop.f32.mrf.mxu0
      %v1698 = vadd.f32 %v1601, %v1697
      %1699 = vmatmul.bf16.gmra.mxu0 %v1511
      %v1700 = vpop.f32.mrf.mxu0
      %v1701 = vadd.f32 %v1604, %v1700
      %v1702 = vpop.f32.mrf.mxu0
      %v1703 = vadd.f32 %v1606, %v1702
      %1704 = vmatmul.bf16.gmra.mxu0 %v1514
      %v1705 = vpop.f32.mrf.mxu0
      %v1706 = vadd.f32 %v1609, %v1705
      %v1707 = vpop.f32.mrf.mxu0
      %v1708 = vadd.f32 %v1611, %v1707
      %1709 = vmatmul.bf16.gmra.mxu0 %v1517
      %v1710 = vpop.f32.mrf.mxu0
      %v1711 = vpop.f32.mrf.mxu0
      %1712 = vdwg.mxu0
      %1713 = vmatpush.bf16.msra.mxu0 %v1432
      %1714 = vmatpush.bf16.msra.mxu0 %v1430
      %1715 = vmatpush.bf16.msra.mxu0 %v1428
      %1716 = vmatpush.bf16.msra.mxu0 %v1426
      %1717 = vmatpush.bf16.msra.mxu0 %v1424
      %1718 = vmatpush.bf16.msra.mxu0 %v1422
      %1719 = vmatpush.bf16.msra.mxu0 %v1420
      %1720 = vmatpush.bf16.msra.mxu0 %v1418
      %1721 = vmatmul.bf16.gmra.mxu0 %v1292
      %v1722 = vpop.f32.mrf.mxu0
      %v1723 = vpop.f32.mrf.mxu0
      %1724 = vmatmul.bf16.gmra.mxu0 %v1295
      %v1725 = vpop.f32.mrf.mxu0
      %v1726 = vpop.f32.mrf.mxu0
      %1727 = vmatmul.bf16.gmra.mxu0 %v1298
      %v1728 = vpop.f32.mrf.mxu0
      %v1729 = vadd.f32 0.0, %v1728
      %v1730 = vpop.f32.mrf.mxu0
      %v1731 = vadd.f32 0.0, %v1730
      %1732 = vmatmul.bf16.gmra.mxu0 %v1301
      %v1733 = vpop.f32.mrf.mxu0
      %v1734 = vadd.f32 0.0, %v1733
      %v1735 = vpop.f32.mrf.mxu0
      %v1736 = vadd.f32 0.0, %v1735
      %1737 = vmatmul.bf16.gmra.mxu0 %v1304
      %v1738 = vpop.f32.mrf.mxu0
      %v1739 = vadd.f32 0.0, %v1738
      %v1740 = vpop.f32.mrf.mxu0
      %v1741 = vadd.f32 0.0, %v1740
      %1742 = vmatmul.bf16.gmra.mxu0 %v1307
      %v1743 = vpop.f32.mrf.mxu0
      %v1744 = vadd.f32 0.0, %v1743
      %v1745 = vpop.f32.mrf.mxu0
      %v1746 = vadd.f32 0.0, %v1745
      %1747 = vmatmul.bf16.gmra.mxu0 %v1310
      %v1748 = vpop.f32.mrf.mxu0
      %v1749 = vadd.f32 0.0, %v1748
      %v1750 = vpop.f32.mrf.mxu0
      %v1751 = vadd.f32 0.0, %v1750
      %1752 = vmatmul.bf16.gmra.mxu0 %v1313
      %v1753 = vpop.f32.mrf.mxu0
      %v1754 = vadd.f32 0.0, %v1753
      %v1755 = vpop.f32.mrf.mxu0
      %v1756 = vadd.f32 0.0, %v1755
      %1757 = vmatmul.bf16.gmra.mxu0 %v1316
      %v1758 = vpop.f32.mrf.mxu0
      %v1759 = vadd.f32 0.0, %v1758
      %v1760 = vpop.f32.mrf.mxu0
      %v1761 = vadd.f32 0.0, %v1760
      %1762 = vmatmul.bf16.gmra.mxu0 %v1319
      %v1763 = vpop.f32.mrf.mxu0
      %v1764 = vadd.f32 0.0, %v1763
      %v1765 = vpop.f32.mrf.mxu0
      %v1766 = vadd.f32 0.0, %v1765
      %1767 = vmatmul.bf16.gmra.mxu0 %v1322
      %v1768 = vpop.f32.mrf.mxu0
      %v1769 = vadd.f32 0.0, %v1768
      %v1770 = vpop.f32.mrf.mxu0
      %v1771 = vadd.f32 0.0, %v1770
      %1772 = vmatmul.bf16.gmra.mxu0 %v1325
      %v1773 = vpop.f32.mrf.mxu0
      %v1774 = vadd.f32 0.0, %v1773
      %v1775 = vpop.f32.mrf.mxu0
      %v1776 = vadd.f32 0.0, %v1775
      %1777 = vmatmul.bf16.gmra.mxu0 %v1328
      %v1778 = vpop.f32.mrf.mxu0
      %v1779 = vadd.f32 0.0, %v1778
      %v1780 = vpop.f32.mrf.mxu0
      %v1781 = vadd.f32 0.0, %v1780
      %1782 = vmatmul.bf16.gmra.mxu0 %v1331
      %v1783 = vpop.f32.mrf.mxu0
      %v1784 = vadd.f32 0.0, %v1783
      %v1785 = vpop.f32.mrf.mxu0
      %v1786 = vadd.f32 0.0, %v1785
      %1787 = vmatmul.bf16.gmra.mxu0 %v1334
      %v1788 = vpop.f32.mrf.mxu0
      %v1789 = vadd.f32 0.0, %v1788
      %v1790 = vpop.f32.mrf.mxu0
      %v1791 = vadd.f32 0.0, %v1790
      %1792 = vmatmul.bf16.gmra.mxu0 %v1337
      %v1793 = vpop.f32.mrf.mxu0
      %v1794 = vadd.f32 0.0, %v1793
      %v1795 = vpop.f32.mrf.mxu0
      %v1796 = vadd.f32 0.0, %v1795
      %1797 = vmatmul.bf16.gmra.mxu0 %v1340
      %v1798 = vpop.f32.mrf.mxu0
      %v1799 = vadd.f32 0.0, %v1798
      %v1800 = vpop.f32.mrf.mxu0
      %v1801 = vadd.f32 0.0, %v1800
      %1802 = vmatmul.bf16.gmra.mxu0 %v1343
      %v1803 = vpop.f32.mrf.mxu0
      %v1804 = vadd.f32 0.0, %v1803
      %v1805 = vpop.f32.mrf.mxu0
      %v1806 = vadd.f32 0.0, %v1805
      %1807 = vdwg.mxu0
      %1808 = vmatpush.bf16.msra.mxu0 0
      %1809 = vmatpush.bf16.msra.mxu0 0
      %1810 = vmatpush.bf16.msra.mxu0 0
      %1811 = vmatpush.bf16.msra.mxu0 0
      %1812 = vmatpush.bf16.msra.mxu0 %v1440
      %1813 = vmatpush.bf16.msra.mxu0 %v1438
      %1814 = vmatpush.bf16.msra.mxu0 %v1436
      %1815 = vmatpush.bf16.msra.mxu0 %v1434
      %1816 = vmatmul.bf16.gmra.mxu0 %v1466
      %v1817 = vpop.f32.mrf.mxu0
      %v1818 = vpop.f32.mrf.mxu0
      %1819 = vmatmul.bf16.gmra.mxu0 %v1469
      %v1820 = vpop.f32.mrf.mxu0
      %v1821 = vpop.f32.mrf.mxu0
      %1822 = vmatmul.bf16.gmra.mxu0 %v1472
      %v1823 = vpop.f32.mrf.mxu0
      %v1824 = vadd.f32 %v1729, %v1823
      %v1825 = vpop.f32.mrf.mxu0
      %v1826 = vadd.f32 %v1731, %v1825
      %1827 = vmatmul.bf16.gmra.mxu0 %v1475
      %v1828 = vpop.f32.mrf.mxu0
      %v1829 = vadd.f32 %v1734, %v1828
      %v1830 = vpop.f32.mrf.mxu0
      %v1831 = vadd.f32 %v1736, %v1830
      %1832 = vmatmul.bf16.gmra.mxu0 %v1478
      %v1833 = vpop.f32.mrf.mxu0
      %v1834 = vadd.f32 %v1739, %v1833
      %v1835 = vpop.f32.mrf.mxu0
      %v1836 = vadd.f32 %v1741, %v1835
      %1837 = vmatmul.bf16.gmra.mxu0 %v1481
      %v1838 = vpop.f32.mrf.mxu0
      %v1839 = vadd.f32 %v1744, %v1838
      %v1840 = vpop.f32.mrf.mxu0
      %v1841 = vadd.f32 %v1746, %v1840
      %1842 = vmatmul.bf16.gmra.mxu0 %v1484
      %v1843 = vpop.f32.mrf.mxu0
      %v1844 = vadd.f32 %v1749, %v1843
      %v1845 = vpop.f32.mrf.mxu0
      %v1846 = vadd.f32 %v1751, %v1845
      %1847 = vmatmul.bf16.gmra.mxu0 %v1487
      %v1848 = vpop.f32.mrf.mxu0
      %v1849 = vadd.f32 %v1754, %v1848
      %v1850 = vpop.f32.mrf.mxu0
      %v1851 = vadd.f32 %v1756, %v1850
      %1852 = vmatmul.bf16.gmra.mxu0 %v1490
      %v1853 = vpop.f32.mrf.mxu0
      %v1854 = vadd.f32 %v1759, %v1853
      %v1855 = vpop.f32.mrf.mxu0
      %v1856 = vadd.f32 %v1761, %v1855
      %1857 = vmatmul.bf16.gmra.mxu0 %v1493
      %v1858 = vpop.f32.mrf.mxu0
      %v1859 = vadd.f32 %v1764, %v1858
      %v1860 = vpop.f32.mrf.mxu0
      %v1861 = vadd.f32 %v1766, %v1860
      %1862 = vmatmul.bf16.gmra.mxu0 %v1496
      %v1863 = vpop.f32.mrf.mxu0
      %v1864 = vadd.f32 %v1769, %v1863
      %v1865 = vpop.f32.mrf.mxu0
      %v1866 = vadd.f32 %v1771, %v1865
      %1867 = vmatmul.bf16.gmra.mxu0 %v1499
      %v1868 = vpop.f32.mrf.mxu0
      %v1869 = vadd.f32 %v1774, %v1868
      %v1870 = vpop.f32.mrf.mxu0
      %v1871 = vadd.f32 %v1776, %v1870
      %1872 = vmatmul.bf16.gmra.mxu0 %v1502
      %v1873 = vpop.f32.mrf.mxu0
      %v1874 = vadd.f32 %v1779, %v1873
      %v1875 = vpop.f32.mrf.mxu0
      %v1876 = vadd.f32 %v1781, %v1875
      %1877 = vmatmul.bf16.gmra.mxu0 %v1505
      %v1878 = vpop.f32.mrf.mxu0
      %v1879 = vadd.f32 %v1784, %v1878
      %v1880 = vpop.f32.mrf.mxu0
      %v1881 = vadd.f32 %v1786, %v1880
      %1882 = vmatmul.bf16.gmra.mxu0 %v1508
      %v1883 = vpop.f32.mrf.mxu0
      %v1884 = vadd.f32 %v1789, %v1883
      %v1885 = vpop.f32.mrf.mxu0
      %v1886 = vadd.f32 %v1791, %v1885
      %1887 = vmatmul.bf16.gmra.mxu0 %v1511
      %v1888 = vpop.f32.mrf.mxu0
      %v1889 = vadd.f32 %v1794, %v1888
      %v1890 = vpop.f32.mrf.mxu0
      %v1891 = vadd.f32 %v1796, %v1890
      %1892 = vmatmul.bf16.gmra.mxu0 %v1514
      %v1893 = vpop.f32.mrf.mxu0
      %v1894 = vadd.f32 %v1799, %v1893
      %v1895 = vpop.f32.mrf.mxu0
      %v1896 = vadd.f32 %v1801, %v1895
      %1897 = vmatmul.bf16.gmra.mxu0 %v1517
      %v1898 = vpop.f32.mrf.mxu0
      %v1899 = vadd.f32 %v1804, %v1898
      %v1900 = vpop.f32.mrf.mxu0
      %v1901 = vadd.f32 %v1806, %v1900
      %1902 = vdwg.mxu0
      %1935 = vrot.lane.b32.xlu0 %v1631, 64
      %v1936 = vpop.permute.xlu0 %1935
      %1937 = vrot.lane.b32.xlu0 %v1633, 64
      %v1938 = vpop.permute.xlu0 %1937
      %1939 = vrot.lane.b32.xlu0 %v1636, 64
      %v1940 = vpop.permute.xlu0 %1939
      %1941 = vrot.lane.b32.xlu0 %v1638, 64
      %v1942 = vpop.permute.xlu0 %1941
      %1943 = vrot.lane.b32.xlu0 %v1641, 64
      %v1944 = vpop.permute.xlu0 %1943
      %1945 = vrot.lane.b32.xlu0 %v1643, 64
      %v1946 = vpop.permute.xlu0 %1945
      %1947 = vrot.lane.b32.xlu0 %v1646, 64
      %v1948 = vpop.permute.xlu0 %1947
      %1949 = vrot.lane.b32.xlu0 %v1648, 64
      %v1950 = vpop.permute.xlu0 %1949
      %1951 = vrot.lane.b32.xlu0 %v1651, 64
      %v1952 = vpop.permute.xlu0 %1951
      %1953 = vrot.lane.b32.xlu0 %v1653, 64
      %v1954 = vpop.permute.xlu0 %1953
      %1955 = vrot.lane.b32.xlu0 %v1656, 64
      %v1956 = vpop.permute.xlu0 %1955
      %1957 = vrot.lane.b32.xlu0 %v1658, 64
      %v1958 = vpop.permute.xlu0 %1957
      %1959 = vrot.lane.b32.xlu0 %v1661, 64
      %v1960 = vpop.permute.xlu0 %1959
      %1961 = vrot.lane.b32.xlu0 %v1663, 64
      %v1962 = vpop.permute.xlu0 %1961
      %1963 = vrot.lane.b32.xlu0 %v1666, 64
      %v1964 = vpop.permute.xlu0 %1963
      %1965 = vrot.lane.b32.xlu0 %v1668, 64
      %v1966 = vpop.permute.xlu0 %1965
      %1967 = vrot.lane.b32.xlu0 %v1671, 64
      %v1968 = vpop.permute.xlu0 %1967
      %1969 = vrot.lane.b32.xlu0 %v1673, 64
      %v1970 = vpop.permute.xlu0 %1969
      %1971 = vrot.lane.b32.xlu0 %v1676, 64
      %v1972 = vpop.permute.xlu0 %1971
      %1973 = vrot.lane.b32.xlu0 %v1678, 64
      %v1974 = vpop.permute.xlu0 %1973
      %1975 = vrot.lane.b32.xlu0 %v1681, 64
      %v1976 = vpop.permute.xlu0 %1975
      %1977 = vrot.lane.b32.xlu0 %v1683, 64
      %v1978 = vpop.permute.xlu0 %1977
      %1979 = vrot.lane.b32.xlu0 %v1686, 64
      %v1980 = vpop.permute.xlu0 %1979
      %1981 = vrot.lane.b32.xlu0 %v1688, 64
      %v1982 = vpop.permute.xlu0 %1981
      %1983 = vrot.lane.b32.xlu0 %v1691, 64
      %v1984 = vpop.permute.xlu0 %1983
      %1985 = vrot.lane.b32.xlu0 %v1693, 64
      %v1986 = vpop.permute.xlu0 %1985
      %1987 = vrot.lane.b32.xlu0 %v1696, 64
      %v1988 = vpop.permute.xlu0 %1987
      %1989 = vrot.lane.b32.xlu0 %v1698, 64
      %v1990 = vpop.permute.xlu0 %1989
      %1991 = vrot.lane.b32.xlu0 %v1701, 64
      %v1992 = vpop.permute.xlu0 %1991
      %1993 = vrot.lane.b32.xlu0 %v1703, 64
      %v1994 = vpop.permute.xlu0 %1993
      %1995 = vrot.lane.b32.xlu0 %v1706, 64
      %v1996 = vpop.permute.xlu0 %1995
      %1997 = vrot.lane.b32.xlu0 %v1708, 64
      %v1998 = vpop.permute.xlu0 %1997
      %v2031 = vadd.f32 %v1626, %v1936
      %v2032 = vadd.f32 %v1628, %v1938
      %v2033 = vadd.f32 %v1631, %v1940
      %v2034 = vadd.f32 %v1633, %v1942
      %v2035 = vadd.f32 %v1636, %v1944
      %v2036 = vadd.f32 %v1638, %v1946
      %v2037 = vadd.f32 %v1641, %v1948
      %v2038 = vadd.f32 %v1643, %v1950
      %v2039 = vadd.f32 %v1646, %v1952
      %v2040 = vadd.f32 %v1648, %v1954
      %v2041 = vadd.f32 %v1651, %v1956
      %v2042 = vadd.f32 %v1653, %v1958
      %v2043 = vadd.f32 %v1656, %v1960
      %v2044 = vadd.f32 %v1658, %v1962
      %v2045 = vadd.f32 %v1661, %v1964
      %v2046 = vadd.f32 %v1663, %v1966
      %v2047 = vadd.f32 %v1666, %v1968
      %v2048 = vadd.f32 %v1668, %v1970
      %v2049 = vadd.f32 %v1671, %v1972
      %v2050 = vadd.f32 %v1673, %v1974
      %v2051 = vadd.f32 %v1676, %v1976
      %v2052 = vadd.f32 %v1678, %v1978
      %v2053 = vadd.f32 %v1681, %v1980
      %v2054 = vadd.f32 %v1683, %v1982
      %v2055 = vadd.f32 %v1686, %v1984
      %v2056 = vadd.f32 %v1688, %v1986
      %v2057 = vadd.f32 %v1691, %v1988
      %v2058 = vadd.f32 %v1693, %v1990
      %v2059 = vadd.f32 %v1696, %v1992
      %v2060 = vadd.f32 %v1698, %v1994
      %v2061 = vadd.f32 %v1701, %v1996
      %v2062 = vadd.f32 %v1703, %v1998
      %v2063 = vadd.f32 %v2031, %v1824
      %v2064 = vadd.f32 %v2032, %v1826
      %v2065 = vadd.f32 %v2033, %v1829
      %v2066 = vadd.f32 %v2034, %v1831
      %v2067 = vadd.f32 %v2035, %v1834
      %v2068 = vadd.f32 %v2036, %v1836
      %v2069 = vadd.f32 %v2037, %v1839
      %v2070 = vadd.f32 %v2038, %v1841
      %v2071 = vadd.f32 %v2039, %v1844
      %v2072 = vadd.f32 %v2040, %v1846
      %v2073 = vadd.f32 %v2041, %v1849
      %v2074 = vadd.f32 %v2042, %v1851
      %v2075 = vadd.f32 %v2043, %v1854
      %v2076 = vadd.f32 %v2044, %v1856
      %v2077 = vadd.f32 %v2045, %v1859
      %v2078 = vadd.f32 %v2046, %v1861
      %v2079 = vadd.f32 %v2047, %v1864
      %v2080 = vadd.f32 %v2048, %v1866
      %v2081 = vadd.f32 %v2049, %v1869
      %v2082 = vadd.f32 %v2050, %v1871
      %v2083 = vadd.f32 %v2051, %v1874
      %v2084 = vadd.f32 %v2052, %v1876
      %v2085 = vadd.f32 %v2053, %v1879
      %v2086 = vadd.f32 %v2054, %v1881
      %v2087 = vadd.f32 %v2055, %v1884
      %v2088 = vadd.f32 %v2056, %v1886
      %v2089 = vadd.f32 %v2057, %v1889
      %v2090 = vadd.f32 %v2058, %v1891
      %v2091 = vadd.f32 %v2059, %v1894
      %v2092 = vadd.f32 %v2060, %v1896
      %v2093 = vadd.f32 %v2061, %v1899
      %v2094 = vadd.f32 %v2062, %v1901
      %v2095 = vmax.f32 %v2063, 0.0
      %v2096 = vmax.f32 %v2064, 0.0
      %v2097 = vmax.f32 %v2065, 0.0
      %v2098 = vmax.f32 %v2066, 0.0
      %v2099 = vmax.f32 %v2067, 0.0
      %v2100 = vmax.f32 %v2068, 0.0
      %v2101 = vmax.f32 %v2069, 0.0
      %v2102 = vmax.f32 %v2070, 0.0
      %v2103 = vmax.f32 %v2071, 0.0
      %v2104 = vmax.f32 %v2072, 0.0
      %v2105 = vmax.f32 %v2073, 0.0
      %v2106 = vmax.f32 %v2074, 0.0
      %v2107 = vmax.f32 %v2075, 0.0
      %v2108 = vmax.f32 %v2076, 0.0
      %v2109 = vmax.f32 %v2077, 0.0
      %v2110 = vmax.f32 %v2078, 0.0
      %v2111 = vmax.f32 %v2079, 0.0
      %v2112 = vmax.f32 %v2080, 0.0
      %v2113 = vmax.f32 %v2081, 0.0
      %v2114 = vmax.f32 %v2082, 0.0
      %v2115 = vmax.f32 %v2083, 0.0
      %v2116 = vmax.f32 %v2084, 0.0
      %v2117 = vmax.f32 %v2085, 0.0
      %v2118 = vmax.f32 %v2086, 0.0
      %v2119 = vmax.f32 %v2087, 0.0
      %v2120 = vmax.f32 %v2088, 0.0
      %v2121 = vmax.f32 %v2089, 0.0
      %v2122 = vmax.f32 %v2090, 0.0
      %v2123 = vmax.f32 %v2091, 0.0
      %v2124 = vmax.f32 %v2092, 0.0
      %v2125 = vmax.f32 %v2093, 0.0
      %v2126 = vmax.f32 %v2094, 0.0
      %v2127 = vpack.c.bf16 %v2095, %v2095
      %v2128 = vpack.c.bf16 %v2096, %v2096
      %v2129 = vpack.c.bf16 %v2097, %v2097
      %v2130 = vpack.c.bf16 %v2098, %v2098
      %v2131 = vpack.c.bf16 %v2099, %v2099
      %v2132 = vpack.c.bf16 %v2100, %v2100
      %v2133 = vpack.c.bf16 %v2101, %v2101
      %v2134 = vpack.c.bf16 %v2102, %v2102
      %v2135 = vpack.c.bf16 %v2103, %v2103
      %v2136 = vpack.c.bf16 %v2104, %v2104
      %v2137 = vpack.c.bf16 %v2105, %v2105
      %v2138 = vpack.c.bf16 %v2106, %v2106
      %v2139 = vpack.c.bf16 %v2107, %v2107
      %v2140 = vpack.c.bf16 %v2108, %v2108
      %v2141 = vpack.c.bf16 %v2109, %v2109
      %v2142 = vpack.c.bf16 %v2110, %v2110
      %v2143 = vpack.c.bf16 %v2111, %v2111
      %v2144 = vpack.c.bf16 %v2112, %v2112
      %v2145 = vpack.c.bf16 %v2113, %v2113
      %v2146 = vpack.c.bf16 %v2114, %v2114
      %v2147 = vpack.c.bf16 %v2115, %v2115
      %v2148 = vpack.c.bf16 %v2116, %v2116
      %v2149 = vpack.c.bf16 %v2117, %v2117
      %v2150 = vpack.c.bf16 %v2118, %v2118
      %v2151 = vpack.c.bf16 %v2119, %v2119
      %v2152 = vpack.c.bf16 %v2120, %v2120
      %v2153 = vpack.c.bf16 %v2121, %v2121
      %v2154 = vpack.c.bf16 %v2122, %v2122
      %v2155 = vpack.c.bf16 %v2123, %v2123
      %v2156 = vpack.c.bf16 %v2124, %v2124
      %v2157 = vpack.c.bf16 %v2125, %v2125
      %v2158 = vpack.c.bf16 %v2126, %v2126
      %v2160 = vshrl.u32 %v2127, 16
      %v2162 = vrot.slane %v2160, 7
      %v2163 = vshll.u32 %v2127, 16
      %v2165 = vor.u32 %v2162, %v2163
      %v2166 = vrot.slane %v2162, 4
      %v2168 = vshrl.u32 %v2128, 16
      %v2170 = vrot.slane %v2168, 7
      %v2171 = vshll.u32 %v2128, 16
      %v2173 = vor.u32 %v2170, %v2171
      %v2174 = vsel %vm321, %v2166, %v2173
      %v2175 = vrot.slane %v2170, 4
      %v2177 = vshrl.u32 %v2129, 16
      %v2179 = vrot.slane %v2177, 7
      %v2180 = vshll.u32 %v2129, 16
      %v2182 = vor.u32 %v2179, %v2180
      %v2183 = vrot.slane %v2179, 4
      %v2185 = vshrl.u32 %v2130, 16
      %v2187 = vrot.slane %v2185, 7
      %v2188 = vshll.u32 %v2130, 16
      %v2190 = vor.u32 %v2187, %v2188
      %v2191 = vsel %vm321, %v2183, %v2190
      %v2192 = vrot.slane %v2187, 4
      %v2194 = vshrl.u32 %v2131, 16
      %v2196 = vrot.slane %v2194, 7
      %v2197 = vshll.u32 %v2131, 16
      %v2199 = vor.u32 %v2196, %v2197
      %v2200 = vrot.slane %v2196, 4
      %v2202 = vshrl.u32 %v2132, 16
      %v2204 = vrot.slane %v2202, 7
      %v2205 = vshll.u32 %v2132, 16
      %v2207 = vor.u32 %v2204, %v2205
      %v2208 = vsel %vm321, %v2200, %v2207
      %v2209 = vrot.slane %v2204, 4
      %v2211 = vshrl.u32 %v2133, 16
      %v2213 = vrot.slane %v2211, 7
      %v2214 = vshll.u32 %v2133, 16
      %v2216 = vor.u32 %v2213, %v2214
      %v2217 = vrot.slane %v2213, 4
      %v2219 = vshrl.u32 %v2134, 16
      %v2221 = vrot.slane %v2219, 7
      %v2222 = vshll.u32 %v2134, 16
      %v2224 = vor.u32 %v2221, %v2222
      %v2225 = vsel %vm321, %v2217, %v2224
      %v2226 = vrot.slane %v2221, 4
      %v2228 = vshrl.u32 %v2135, 16
      %v2230 = vrot.slane %v2228, 7
      %v2231 = vshll.u32 %v2135, 16
      %v2233 = vor.u32 %v2230, %v2231
      %v2234 = vrot.slane %v2230, 4
      %v2236 = vshrl.u32 %v2136, 16
      %v2238 = vrot.slane %v2236, 7
      %v2239 = vshll.u32 %v2136, 16
      %v2241 = vor.u32 %v2238, %v2239
      %v2242 = vsel %vm321, %v2234, %v2241
      %v2243 = vrot.slane %v2238, 4
      %v2245 = vshrl.u32 %v2137, 16
      %v2247 = vrot.slane %v2245, 7
      %v2248 = vshll.u32 %v2137, 16
      %v2250 = vor.u32 %v2247, %v2248
      %v2251 = vrot.slane %v2247, 4
      %v2253 = vshrl.u32 %v2138, 16
      %v2255 = vrot.slane %v2253, 7
      %v2256 = vshll.u32 %v2138, 16
      %v2258 = vor.u32 %v2255, %v2256
      %v2259 = vsel %vm321, %v2251, %v2258
      %v2260 = vrot.slane %v2255, 4
      %v2262 = vshrl.u32 %v2139, 16
      %v2264 = vrot.slane %v2262, 7
      %v2265 = vshll.u32 %v2139, 16
      %v2267 = vor.u32 %v2264, %v2265
      %v2268 = vrot.slane %v2264, 4
      %v2270 = vshrl.u32 %v2140, 16
      %v2272 = vrot.slane %v2270, 7
      %v2273 = vshll.u32 %v2140, 16
      %v2275 = vor.u32 %v2272, %v2273
      %v2276 = vsel %vm321, %v2268, %v2275
      %v2277 = vrot.slane %v2272, 4
      %v2279 = vshrl.u32 %v2141, 16
      %v2281 = vrot.slane %v2279, 7
      %v2282 = vshll.u32 %v2141, 16
      %v2284 = vor.u32 %v2281, %v2282
      %v2285 = vrot.slane %v2281, 4
      %v2287 = vshrl.u32 %v2142, 16
      %v2289 = vrot.slane %v2287, 7
      %v2290 = vshll.u32 %v2142, 16
      %v2292 = vor.u32 %v2289, %v2290
      %v2293 = vsel %vm321, %v2285, %v2292
      %v2294 = vrot.slane %v2289, 4
      %v2296 = vshrl.u32 %v2143, 16
      %v2298 = vrot.slane %v2296, 7
      %v2299 = vshll.u32 %v2143, 16
      %v2301 = vor.u32 %v2298, %v2299
      %v2302 = vrot.slane %v2298, 4
      %v2304 = vshrl.u32 %v2144, 16
      %v2306 = vrot.slane %v2304, 7
      %v2307 = vshll.u32 %v2144, 16
      %v2309 = vor.u32 %v2306, %v2307
      %v2310 = vsel %vm321, %v2302, %v2309
      %v2311 = vrot.slane %v2306, 4
      %v2313 = vshrl.u32 %v2145, 16
      %v2315 = vrot.slane %v2313, 7
      %v2316 = vshll.u32 %v2145, 16
      %v2318 = vor.u32 %v2315, %v2316
      %v2319 = vrot.slane %v2315, 4
      %v2321 = vshrl.u32 %v2146, 16
      %v2323 = vrot.slane %v2321, 7
      %v2324 = vshll.u32 %v2146, 16
      %v2326 = vor.u32 %v2323, %v2324
      %v2327 = vsel %vm321, %v2319, %v2326
      %v2328 = vrot.slane %v2323, 4
      %v2330 = vshrl.u32 %v2147, 16
      %v2332 = vrot.slane %v2330, 7
      %v2333 = vshll.u32 %v2147, 16
      %v2335 = vor.u32 %v2332, %v2333
      %v2336 = vrot.slane %v2332, 4
      %v2338 = vshrl.u32 %v2148, 16
      %v2340 = vrot.slane %v2338, 7
      %v2341 = vshll.u32 %v2148, 16
      %v2343 = vor.u32 %v2340, %v2341
      %v2344 = vsel %vm321, %v2336, %v2343
      %v2345 = vrot.slane %v2340, 4
      %v2347 = vshrl.u32 %v2149, 16
      %v2349 = vrot.slane %v2347, 7
      %v2350 = vshll.u32 %v2149, 16
      %v2352 = vor.u32 %v2349, %v2350
      %v2353 = vrot.slane %v2349, 4
      %v2355 = vshrl.u32 %v2150, 16
      %v2357 = vrot.slane %v2355, 7
      %v2358 = vshll.u32 %v2150, 16
      %v2360 = vor.u32 %v2357, %v2358
      %v2361 = vsel %vm321, %v2353, %v2360
      %v2362 = vrot.slane %v2357, 4
      %v2364 = vshrl.u32 %v2151, 16
      %v2366 = vrot.slane %v2364, 7
      %v2367 = vshll.u32 %v2151, 16
      %v2369 = vor.u32 %v2366, %v2367
      %v2370 = vrot.slane %v2366, 4
      %v2372 = vshrl.u32 %v2152, 16
      %v2374 = vrot.slane %v2372, 7
      %v2375 = vshll.u32 %v2152, 16
      %v2377 = vor.u32 %v2374, %v2375
      %v2378 = vsel %vm321, %v2370, %v2377
      %v2379 = vrot.slane %v2374, 4
      %v2381 = vshrl.u32 %v2153, 16
      %v2383 = vrot.slane %v2381, 7
      %v2384 = vshll.u32 %v2153, 16
      %v2386 = vor.u32 %v2383, %v2384
      %v2387 = vrot.slane %v2383, 4
      %v2389 = vshrl.u32 %v2154, 16
      %v2391 = vrot.slane %v2389, 7
      %v2392 = vshll.u32 %v2154, 16
      %v2394 = vor.u32 %v2391, %v2392
      %v2395 = vsel %vm321, %v2387, %v2394
      %v2396 = vrot.slane %v2391, 4
      %v2398 = vshrl.u32 %v2155, 16
      %v2400 = vrot.slane %v2398, 7
      %v2401 = vshll.u32 %v2155, 16
      %v2403 = vor.u32 %v2400, %v2401
      %v2404 = vrot.slane %v2400, 4
      %v2406 = vshrl.u32 %v2156, 16
      %v2408 = vrot.slane %v2406, 7
      %v2409 = vshll.u32 %v2156, 16
      %v2411 = vor.u32 %v2408, %v2409
      %v2412 = vsel %vm321, %v2404, %v2411
      %v2413 = vrot.slane %v2408, 4
      %v2415 = vshrl.u32 %v2157, 16
      %v2417 = vrot.slane %v2415, 7
      %v2418 = vshll.u32 %v2157, 16
      %v2420 = vor.u32 %v2417, %v2418
      %v2421 = vrot.slane %v2417, 4
      %v2423 = vshrl.u32 %v2158, 16
      %v2425 = vrot.slane %v2423, 7
      %v2426 = vshll.u32 %v2158, 16
      %v2428 = vor.u32 %v2425, %v2426
      %v2429 = vsel %vm321, %v2421, %v2428
      %v2430 = vrot.slane %v2425, 4
      %s2479 = scalar_lea.vmem [#allocation3], 12
      %v2480 = vld [vmem:[%s2479] sm:$0xf]
      %v2481 = vsel %vm645, %v2165, %v2480
      %2482 = vst [vmem:[%s2479] sm:$0xf] %v2481
      %2483 = vst.msk [vmem:[%s2479 + $0x4] sm:$0xf] %vm145, %v2174
      %v2484 = vld [vmem:[%s2479 + $0x8] sm:$0x1]
      %v2485 = vsel %vm651, %v2175, %v2484
      %2486 = vst [vmem:[%s2479 + $0x8] sm:$0x1] %v2485
      %v2487 = vld [vmem:[%s2479 + $0xc] sm:$0xf]
      %v2488 = vsel %vm645, %v2182, %v2487
      %2489 = vst [vmem:[%s2479 + $0xc] sm:$0xf] %v2488
      %2490 = vst.msk [vmem:[%s2479 + $0x10] sm:$0xf] %vm145, %v2191
      %v2491 = vld [vmem:[%s2479 + $0x14] sm:$0x1]
      %v2492 = vsel %vm651, %v2192, %v2491
      %2493 = vst [vmem:[%s2479 + $0x14] sm:$0x1] %v2492
      %v2494 = vld [vmem:[%s2479 + $0x18] sm:$0xf]
      %v2495 = vsel %vm645, %v2199, %v2494
      %2496 = vst [vmem:[%s2479 + $0x18] sm:$0xf] %v2495
      %2497 = vst.msk [vmem:[%s2479 + $0x1c] sm:$0xf] %vm145, %v2208
      %v2498 = vld [vmem:[%s2479 + $0x20] sm:$0x1]
      %v2499 = vsel %vm651, %v2209, %v2498
      %2500 = vst [vmem:[%s2479 + $0x20] sm:$0x1] %v2499
      %v2501 = vld [vmem:[%s2479 + $0x24] sm:$0xf]
      %v2502 = vsel %vm645, %v2216, %v2501
      %2503 = vst [vmem:[%s2479 + $0x24] sm:$0xf] %v2502
      %2504 = vst.msk [vmem:[%s2479 + $0x28] sm:$0xf] %vm145, %v2225
      %v2505 = vld [vmem:[%s2479 + $0x2c] sm:$0x1]
      %v2506 = vsel %vm651, %v2226, %v2505
      %2507 = vst [vmem:[%s2479 + $0x2c] sm:$0x1] %v2506
      %v2508 = vld [vmem:[%s2479 + $0x30] sm:$0xf]
      %v2509 = vsel %vm645, %v2233, %v2508
      %2510 = vst [vmem:[%s2479 + $0x30] sm:$0xf] %v2509
      %2511 = vst.msk [vmem:[%s2479 + $0x34] sm:$0xf] %vm145, %v2242
      %v2512 = vld [vmem:[%s2479 + $0x38] sm:$0x1]
      %v2513 = vsel %vm651, %v2243, %v2512
      %2514 = vst [vmem:[%s2479 + $0x38] sm:$0x1] %v2513
      %v2515 = vld [vmem:[%s2479 + $0x3c] sm:$0xf]
      %v2516 = vsel %vm645, %v2250, %v2515
      %2517 = vst [vmem:[%s2479 + $0x3c] sm:$0xf] %v2516
      %2518 = vst.msk [vmem:[%s2479 + $0x40] sm:$0xf] %vm145, %v2259
      %v2519 = vld [vmem:[%s2479 + $0x44] sm:$0x1]
      %v2520 = vsel %vm651, %v2260, %v2519
      %2521 = vst [vmem:[%s2479 + $0x44] sm:$0x1] %v2520
      %v2522 = vld [vmem:[%s2479 + $0x48] sm:$0xf]
      %v2523 = vsel %vm645, %v2267, %v2522
      %2524 = vst [vmem:[%s2479 + $0x48] sm:$0xf] %v2523
      %2525 = vst.msk [vmem:[%s2479 + $0x4c] sm:$0xf] %vm145, %v2276
      %v2526 = vld [vmem:[%s2479 + $0x50] sm:$0x1]
      %v2527 = vsel %vm651, %v2277, %v2526
      %2528 = vst [vmem:[%s2479 + $0x50] sm:$0x1] %v2527
      %v2529 = vld [vmem:[%s2479 + $0x54] sm:$0xf]
      %v2530 = vsel %vm645, %v2284, %v2529
      %2531 = vst [vmem:[%s2479 + $0x54] sm:$0xf] %v2530
      %2532 = vst.msk [vmem:[%s2479 + $0x58] sm:$0xf] %vm145, %v2293
      %v2533 = vld [vmem:[%s2479 + $0x5c] sm:$0x1]
      %v2534 = vsel %vm651, %v2294, %v2533
      %2535 = vst [vmem:[%s2479 + $0x5c] sm:$0x1] %v2534
      %v2536 = vld [vmem:[%s2479 + $0x60] sm:$0xf]
      %v2537 = vsel %vm645, %v2301, %v2536
      %2538 = vst [vmem:[%s2479 + $0x60] sm:$0xf] %v2537
      %2539 = vst.msk [vmem:[%s2479 + $0x64] sm:$0xf] %vm145, %v2310
      %v2540 = vld [vmem:[%s2479 + $0x68] sm:$0x1]
      %v2541 = vsel %vm651, %v2311, %v2540
      %2542 = vst [vmem:[%s2479 + $0x68] sm:$0x1] %v2541
      %v2543 = vld [vmem:[%s2479 + $0x6c] sm:$0xf]
      %v2544 = vsel %vm645, %v2318, %v2543
      %2545 = vst [vmem:[%s2479 + $0x6c] sm:$0xf] %v2544
      %2546 = vst.msk [vmem:[%s2479 + $0x70] sm:$0xf] %vm145, %v2327
      %v2547 = vld [vmem:[%s2479 + $0x74] sm:$0x1]
      %v2548 = vsel %vm651, %v2328, %v2547
      %2549 = vst [vmem:[%s2479 + $0x74] sm:$0x1] %v2548
      %v2550 = vld [vmem:[%s2479 + $0x78] sm:$0xf]
      %v2551 = vsel %vm645, %v2335, %v2550
      %2552 = vst [vmem:[%s2479 + $0x78] sm:$0xf] %v2551
      %2553 = vst.msk [vmem:[%s2479 + $0x7c] sm:$0xf] %vm145, %v2344
      %v2554 = vld [vmem:[%s2479 + $0x80] sm:$0x1]
      %v2555 = vsel %vm651, %v2345, %v2554
      %2556 = vst [vmem:[%s2479 + $0x80] sm:$0x1] %v2555
      %v2557 = vld [vmem:[%s2479 + $0x84] sm:$0xf]
      %v2558 = vsel %vm645, %v2352, %v2557
      %2559 = vst [vmem:[%s2479 + $0x84] sm:$0xf] %v2558
      %2560 = vst.msk [vmem:[%s2479 + $0x88] sm:$0xf] %vm145, %v2361
      %v2561 = vld [vmem:[%s2479 + $0x8c] sm:$0x1]
      %v2562 = vsel %vm651, %v2362, %v2561
      %2563 = vst [vmem:[%s2479 + $0x8c] sm:$0x1] %v2562
      %v2564 = vld [vmem:[%s2479 + $0x90] sm:$0xf]
      %v2565 = vsel %vm645, %v2369, %v2564
      %2566 = vst [vmem:[%s2479 + $0x90] sm:$0xf] %v2565
      %2567 = vst.msk [vmem:[%s2479 + $0x94] sm:$0xf] %vm145, %v2378
      %v2568 = vld [vmem:[%s2479 + $0x98] sm:$0x1]
      %v2569 = vsel %vm651, %v2379, %v2568
      %2570 = vst [vmem:[%s2479 + $0x98] sm:$0x1] %v2569
      %v2571 = vld [vmem:[%s2479 + $0x9c] sm:$0xf]
      %v2572 = vsel %vm645, %v2386, %v2571
      %2573 = vst [vmem:[%s2479 + $0x9c] sm:$0xf] %v2572
      %2574 = vst.msk [vmem:[%s2479 + $0xa0] sm:$0xf] %vm145, %v2395
      %v2575 = vld [vmem:[%s2479 + $0xa4] sm:$0x1]
      %v2576 = vsel %vm651, %v2396, %v2575
      %2577 = vst [vmem:[%s2479 + $0xa4] sm:$0x1] %v2576
      %v2578 = vld [vmem:[%s2479 + $0xa8] sm:$0xf]
      %v2579 = vsel %vm645, %v2403, %v2578
      %2580 = vst [vmem:[%s2479 + $0xa8] sm:$0xf] %v2579
      %2581 = vst.msk [vmem:[%s2479 + $0xac] sm:$0xf] %vm145, %v2412
      %v2582 = vld [vmem:[%s2479 + $0xb0] sm:$0x1]
      %v2583 = vsel %vm651, %v2413, %v2582
      %2584 = vst [vmem:[%s2479 + $0xb0] sm:$0x1] %v2583
      %v2585 = vld [vmem:[%s2479 + $0xb4] sm:$0xf]
      %v2586 = vsel %vm645, %v2420, %v2585
      %2587 = vst [vmem:[%s2479 + $0xb4] sm:$0xf] %v2586
      %2588 = vst.msk [vmem:[%s2479 + $0xb8] sm:$0xf] %vm145, %v2429
      %v2589 = vld [vmem:[%s2479 + $0xbc] sm:$0x1]
      %v2590 = vsel %vm651, %v2430, %v2589
      %2591 = vst [vmem:[%s2479 + $0xbc] sm:$0x1] %v2590
      loop: start=0, step=1, limit=9
      $region29: #{preprocess_forward.1} parent=27 // loop_pre_header
        _
      $region30: #{preprocess_forward.1} parent=27 // loop_header
        %s2593 = sphi 0, %s2597
        %p2594 = scmp.ge.s32.totalorder %s2593, 9
      $region31: #{preprocess_forward.1} parent=27 // loop_header_branch
        %2596 = sbr.rel (%p2594) target = $region35
      $region32: #{preprocess_forward.1} parent=27 // loop_body
        %s2598 = smul.u32 %s2593, 2
        %s2599 = sadd.s32 %s2598, 1
        %s2600 = smul.u32 %s2599, 48
        %s2601 = smul.addr %s2600, 4
        %s2602 = scalar_lea.vmem %s1, %s2601
        %v2603 = vld [vmem:[%s2602] sm:$0xff]
        %v2604 = vld [vmem:[%s2602 + $0x8] sm:$0xff]
        %v2605 = vld [vmem:[%s2602 + $0x10] sm:$0xff]
        %v2606 = vld [vmem:[%s2602 + $0x18] sm:$0xff]
        %v2607 = vld [vmem:[%s2602 + $0x20] sm:$0xff]
        %v2608 = vld [vmem:[%s2602 + $0x28] sm:$0xff]
        %v2609 = vld [vmem:[%s2602 + $0x30] sm:$0xff]
        %v2610 = vld [vmem:[%s2602 + $0x38] sm:$0xff]
        %v2611 = vld [vmem:[%s2602 + $0x40] sm:$0xff]
        %v2612 = vld [vmem:[%s2602 + $0x48] sm:$0xff]
        %v2613 = vld [vmem:[%s2602 + $0x50] sm:$0xff]
        %v2614 = vld [vmem:[%s2602 + $0x58] sm:$0xff]
        %v2615 = vld [vmem:[%s2602 + $0x60] sm:$0xff]
        %v2616 = vld [vmem:[%s2602 + $0x68] sm:$0xff]
        %v2617 = vld [vmem:[%s2602 + $0x70] sm:$0xff]
        %v2618 = vld [vmem:[%s2602 + $0x78] sm:$0xff]
        %v2619 = vld [vmem:[%s2602 + $0x80] sm:$0xff]
        %v2620 = vld [vmem:[%s2602 + $0x88] sm:$0xff]
        %v2621 = vld [vmem:[%s2602 + $0x90] sm:$0xff]
        %v2622 = vld [vmem:[%s2602 + $0x98] sm:$0xff]
        %v2623 = vld [vmem:[%s2602 + $0xa0] sm:$0xff]
        %v2624 = vld [vmem:[%s2602 + $0xa8] sm:$0xff]
        %v2625 = vld [vmem:[%s2602 + $0xb0] sm:$0xff]
        %v2626 = vld [vmem:[%s2602 + $0xb8] sm:$0xff]
        %v2627 = vld [vmem:[#allocation3] sm:$0xf]
        %v2628 = vld [vmem:[#allocation3 + $0x4] sm:$0xf]
        %v2629 = vld [vmem:[#allocation3 + $0x8] sm:$0x1]
        %v2630 = vld [vmem:[#allocation3 + $0xc] sm:$0xf]
        %v2631 = vld [vmem:[#allocation3 + $0x10] sm:$0xf]
        %v2632 = vld [vmem:[#allocation3 + $0x14] sm:$0x1]
        %v2633 = vld [vmem:[#allocation3 + $0x18] sm:$0xf]
        %v2634 = vld [vmem:[#allocation3 + $0x1c] sm:$0xf]
        %v2635 = vld [vmem:[#allocation3 + $0x20] sm:$0x1]
        %v2636 = vld [vmem:[#allocation3 + $0x24] sm:$0xf]
        %v2637 = vld [vmem:[#allocation3 + $0x28] sm:$0xf]
        %v2638 = vld [vmem:[#allocation3 + $0x2c] sm:$0x1]
        %v2639 = vld [vmem:[#allocation3 + $0x30] sm:$0xf]
        %v2640 = vld [vmem:[#allocation3 + $0x34] sm:$0xf]
        %v2641 = vld [vmem:[#allocation3 + $0x38] sm:$0x1]
        %v2642 = vld [vmem:[#allocation3 + $0x3c] sm:$0xf]
        %v2643 = vld [vmem:[#allocation3 + $0x40] sm:$0xf]
        %v2644 = vld [vmem:[#allocation3 + $0x44] sm:$0x1]
        %v2645 = vld [vmem:[#allocation3 + $0x48] sm:$0xf]
        %v2646 = vld [vmem:[#allocation3 + $0x4c] sm:$0xf]
        %v2647 = vld [vmem:[#allocation3 + $0x50] sm:$0x1]
        %v2648 = vld [vmem:[#allocation3 + $0x54] sm:$0xf]
        %v2649 = vld [vmem:[#allocation3 + $0x58] sm:$0xf]
        %v2650 = vld [vmem:[#allocation3 + $0x5c] sm:$0x1]
        %v2651 = vld [vmem:[#allocation3 + $0x60] sm:$0xf]
        %v2652 = vld [vmem:[#allocation3 + $0x64] sm:$0xf]
        %v2653 = vld [vmem:[#allocation3 + $0x68] sm:$0x1]
        %v2654 = vld [vmem:[#allocation3 + $0x6c] sm:$0xf]
        %v2655 = vld [vmem:[#allocation3 + $0x70] sm:$0xf]
        %v2656 = vld [vmem:[#allocation3 + $0x74] sm:$0x1]
        %v2657 = vld [vmem:[#allocation3 + $0x78] sm:$0xf]
        %v2658 = vld [vmem:[#allocation3 + $0x7c] sm:$0xf]
        %v2659 = vld [vmem:[#allocation3 + $0x80] sm:$0x1]
        %v2660 = vld [vmem:[#allocation3 + $0x84] sm:$0xf]
        %v2661 = vld [vmem:[#allocation3 + $0x88] sm:$0xf]
        %v2662 = vld [vmem:[#allocation3 + $0x8c] sm:$0x1]
        %v2663 = vld [vmem:[#allocation3 + $0x90] sm:$0xf]
        %v2664 = vld [vmem:[#allocation3 + $0x94] sm:$0xf]
        %v2665 = vld [vmem:[#allocation3 + $0x98] sm:$0x1]
        %v2666 = vld [vmem:[#allocation3 + $0x9c] sm:$0xf]
        %v2667 = vld [vmem:[#allocation3 + $0xa0] sm:$0xf]
        %v2668 = vld [vmem:[#allocation3 + $0xa4] sm:$0x1]
        %v2669 = vld [vmem:[#allocation3 + $0xa8] sm:$0xf]
        %v2670 = vld [vmem:[#allocation3 + $0xac] sm:$0xf]
        %v2671 = vld [vmem:[#allocation3 + $0xb0] sm:$0x1]
        %v2672 = vld [vmem:[#allocation3 + $0xb4] sm:$0xf]
        %v2673 = vld [vmem:[#allocation3 + $0xb8] sm:$0xf]
        %v2674 = vld [vmem:[#allocation3 + $0xbc] sm:$0x1]
        %v2675 = vld [vmem:[#allocation3 + $0xc0] sm:$0xf]
        %v2676 = vld [vmem:[#allocation3 + $0xc4] sm:$0xf]
        %v2677 = vld [vmem:[#allocation3 + $0xc8] sm:$0x1]
        %v2678 = vld [vmem:[#allocation3 + $0xcc] sm:$0xf]
        %v2679 = vld [vmem:[#allocation3 + $0xd0] sm:$0xf]
        %v2680 = vld [vmem:[#allocation3 + $0xd4] sm:$0x1]
        %v2717 = vunpack.c.l.b16 %v2627
        %v2718 = vunpack.c.l.b16 %v2628
        %v2719 = vunpack.c.l.b16 %v2630
        %v2720 = vunpack.c.l.b16 %v2631
        %v2721 = vunpack.c.l.b16 %v2633
        %v2722 = vunpack.c.l.b16 %v2634
        %v2723 = vunpack.c.l.b16 %v2636
        %v2724 = vunpack.c.l.b16 %v2637
        %v2725 = vunpack.c.l.b16 %v2639
        %v2726 = vunpack.c.l.b16 %v2640
        %v2727 = vunpack.c.l.b16 %v2642
        %v2728 = vunpack.c.l.b16 %v2643
        %v2729 = vunpack.c.l.b16 %v2645
        %v2730 = vunpack.c.l.b16 %v2646
        %v2731 = vunpack.c.l.b16 %v2648
        %v2732 = vunpack.c.l.b16 %v2649
        %v2733 = vunpack.c.l.b16 %v2651
        %v2734 = vunpack.c.l.b16 %v2652
        %v2735 = vunpack.c.l.b16 %v2654
        %v2736 = vunpack.c.l.b16 %v2655
        %v2737 = vunpack.c.l.b16 %v2657
        %v2738 = vunpack.c.l.b16 %v2658
        %v2739 = vunpack.c.l.b16 %v2660
        %v2740 = vunpack.c.l.b16 %v2661
        %v2741 = vunpack.c.l.b16 %v2663
        %v2742 = vunpack.c.l.b16 %v2664
        %v2743 = vunpack.c.l.b16 %v2666
        %v2744 = vunpack.c.l.b16 %v2667
        %v2745 = vunpack.c.l.b16 %v2669
        %v2746 = vunpack.c.l.b16 %v2670
        %v2747 = vunpack.c.l.b16 %v2672
        %v2748 = vunpack.c.l.b16 %v2673
        %v2749 = vunpack.c.l.b16 %v2675
        %v2750 = vunpack.c.l.b16 %v2676
        %v2751 = vunpack.c.l.b16 %v2678
        %v2752 = vunpack.c.l.b16 %v2679
        %v2753 = vpack.c.b16 %v2718, %v2717
        %v2754 = vpack.c.b16 %v2720, %v2719
        %v2755 = vpack.c.b16 %v2722, %v2721
        %v2756 = vpack.c.b16 %v2724, %v2723
        %v2757 = vpack.c.b16 %v2726, %v2725
        %v2758 = vpack.c.b16 %v2728, %v2727
        %v2759 = vpack.c.b16 %v2730, %v2729
        %v2760 = vpack.c.b16 %v2732, %v2731
        %v2761 = vpack.c.b16 %v2734, %v2733
        %v2762 = vpack.c.b16 %v2736, %v2735
        %v2763 = vpack.c.b16 %v2738, %v2737
        %v2764 = vpack.c.b16 %v2740, %v2739
        %v2765 = vpack.c.b16 %v2742, %v2741
        %v2766 = vpack.c.b16 %v2744, %v2743
        %v2767 = vpack.c.b16 %v2746, %v2745
        %v2768 = vpack.c.b16 %v2748, %v2747
        %v2769 = vpack.c.b16 %v2750, %v2749
        %v2770 = vpack.c.b16 %v2752, %v2751
        %v2789 = vunpack.c.l.b16 %v2629
        %v2790 = vunpack.c.l.b16 %v2632
        %v2791 = vunpack.c.l.b16 %v2635
        %v2792 = vunpack.c.l.b16 %v2638
        %v2793 = vunpack.c.l.b16 %v2641
        %v2794 = vunpack.c.l.b16 %v2644
        %v2795 = vunpack.c.l.b16 %v2647
        %v2796 = vunpack.c.l.b16 %v2650
        %v2797 = vunpack.c.l.b16 %v2653
        %v2798 = vunpack.c.l.b16 %v2656
        %v2799 = vunpack.c.l.b16 %v2659
        %v2800 = vunpack.c.l.b16 %v2662
        %v2801 = vunpack.c.l.b16 %v2665
        %v2802 = vunpack.c.l.b16 %v2668
        %v2803 = vunpack.c.l.b16 %v2671
        %v2804 = vunpack.c.l.b16 %v2674
        %v2805 = vunpack.c.l.b16 %v2677
        %v2806 = vunpack.c.l.b16 %v2680
        %v2807 = vpack.c.b16 %v2789, %v2789
        %v2808 = vpack.c.b16 %v2790, %v2790
        %v2809 = vpack.c.b16 %v2791, %v2791
        %v2810 = vpack.c.b16 %v2792, %v2792
        %v2811 = vpack.c.b16 %v2793, %v2793
        %v2812 = vpack.c.b16 %v2794, %v2794
        %v2813 = vpack.c.b16 %v2795, %v2795
        %v2814 = vpack.c.b16 %v2796, %v2796
        %v2815 = vpack.c.b16 %v2797, %v2797
        %v2816 = vpack.c.b16 %v2798, %v2798
        %v2817 = vpack.c.b16 %v2799, %v2799
        %v2818 = vpack.c.b16 %v2800, %v2800
        %v2819 = vpack.c.b16 %v2801, %v2801
        %v2820 = vpack.c.b16 %v2802, %v2802
        %v2821 = vpack.c.b16 %v2803, %v2803
        %v2822 = vpack.c.b16 %v2804, %v2804
        %v2823 = vpack.c.b16 %v2805, %v2805
        %v2824 = vpack.c.b16 %v2806, %v2806
        %v2826 = vshrl.u32 %v2753, 16
        %v2828 = vshll.u32 %v2753, 16
        %v2830 = vrot.slane %v2828, 1
        %v2831 = vor.u32 %v2826, %v2830
        %v2833 = vshll.u32 %v2807, 16
        %v2835 = vrot.slane %v2833, 1
        %v2836 = vsel %vm982, %v2831, %v2835
        %v2838 = vshrl.u32 %v2754, 16
        %v2840 = vshll.u32 %v2754, 16
        %v2842 = vrot.slane %v2840, 1
        %v2843 = vor.u32 %v2838, %v2842
        %v2845 = vshll.u32 %v2808, 16
        %v2847 = vrot.slane %v2845, 1
        %v2848 = vsel %vm982, %v2843, %v2847
        %v2850 = vshrl.u32 %v2755, 16
        %v2852 = vshll.u32 %v2755, 16
        %v2854 = vrot.slane %v2852, 1
        %v2855 = vor.u32 %v2850, %v2854
        %v2857 = vshll.u32 %v2809, 16
        %v2859 = vrot.slane %v2857, 1
        %v2860 = vsel %vm982, %v2855, %v2859
        %v2862 = vshrl.u32 %v2756, 16
        %v2864 = vshll.u32 %v2756, 16
        %v2866 = vrot.slane %v2864, 1
        %v2867 = vor.u32 %v2862, %v2866
        %v2869 = vshll.u32 %v2810, 16
        %v2871 = vrot.slane %v2869, 1
        %v2872 = vsel %vm982, %v2867, %v2871
        %v2874 = vshrl.u32 %v2757, 16
        %v2876 = vshll.u32 %v2757, 16
        %v2878 = vrot.slane %v2876, 1
        %v2879 = vor.u32 %v2874, %v2878
        %v2881 = vshll.u32 %v2811, 16
        %v2883 = vrot.slane %v2881, 1
        %v2884 = vsel %vm982, %v2879, %v2883
        %v2886 = vshrl.u32 %v2758, 16
        %v2888 = vshll.u32 %v2758, 16
        %v2890 = vrot.slane %v2888, 1
        %v2891 = vor.u32 %v2886, %v2890
        %v2893 = vshll.u32 %v2812, 16
        %v2895 = vrot.slane %v2893, 1
        %v2896 = vsel %vm982, %v2891, %v2895
        %v2898 = vshrl.u32 %v2759, 16
        %v2900 = vshll.u32 %v2759, 16
        %v2902 = vrot.slane %v2900, 1
        %v2903 = vor.u32 %v2898, %v2902
        %v2905 = vshll.u32 %v2813, 16
        %v2907 = vrot.slane %v2905, 1
        %v2908 = vsel %vm982, %v2903, %v2907
        %v2910 = vshrl.u32 %v2760, 16
        %v2912 = vshll.u32 %v2760, 16
        %v2914 = vrot.slane %v2912, 1
        %v2915 = vor.u32 %v2910, %v2914
        %v2917 = vshll.u32 %v2814, 16
        %v2919 = vrot.slane %v2917, 1
        %v2920 = vsel %vm982, %v2915, %v2919
        %v2922 = vshrl.u32 %v2761, 16
        %v2924 = vshll.u32 %v2761, 16
        %v2926 = vrot.slane %v2924, 1
        %v2927 = vor.u32 %v2922, %v2926
        %v2929 = vshll.u32 %v2815, 16
        %v2931 = vrot.slane %v2929, 1
        %v2932 = vsel %vm982, %v2927, %v2931
        %v2934 = vshrl.u32 %v2762, 16
        %v2936 = vshll.u32 %v2762, 16
        %v2938 = vrot.slane %v2936, 1
        %v2939 = vor.u32 %v2934, %v2938
        %v2941 = vshll.u32 %v2816, 16
        %v2943 = vrot.slane %v2941, 1
        %v2944 = vsel %vm982, %v2939, %v2943
        %v2946 = vshrl.u32 %v2763, 16
        %v2948 = vshll.u32 %v2763, 16
        %v2950 = vrot.slane %v2948, 1
        %v2951 = vor.u32 %v2946, %v2950
        %v2953 = vshll.u32 %v2817, 16
        %v2955 = vrot.slane %v2953, 1
        %v2956 = vsel %vm982, %v2951, %v2955
        %v2958 = vshrl.u32 %v2764, 16
        %v2960 = vshll.u32 %v2764, 16
        %v2962 = vrot.slane %v2960, 1
        %v2963 = vor.u32 %v2958, %v2962
        %v2965 = vshll.u32 %v2818, 16
        %v2967 = vrot.slane %v2965, 1
        %v2968 = vsel %vm982, %v2963, %v2967
        %v2970 = vshrl.u32 %v2765, 16
        %v2972 = vshll.u32 %v2765, 16
        %v2974 = vrot.slane %v2972, 1
        %v2975 = vor.u32 %v2970, %v2974
        %v2977 = vshll.u32 %v2819, 16
        %v2979 = vrot.slane %v2977, 1
        %v2980 = vsel %vm982, %v2975, %v2979
        %v2982 = vshrl.u32 %v2766, 16
        %v2984 = vshll.u32 %v2766, 16
        %v2986 = vrot.slane %v2984, 1
        %v2987 = vor.u32 %v2982, %v2986
        %v2989 = vshll.u32 %v2820, 16
        %v2991 = vrot.slane %v2989, 1
        %v2992 = vsel %vm982, %v2987, %v2991
        %v2994 = vshrl.u32 %v2767, 16
        %v2996 = vshll.u32 %v2767, 16
        %v2998 = vrot.slane %v2996, 1
        %v2999 = vor.u32 %v2994, %v2998
        %v3001 = vshll.u32 %v2821, 16
        %v3003 = vrot.slane %v3001, 1
        %v3004 = vsel %vm982, %v2999, %v3003
        %v3006 = vshrl.u32 %v2768, 16
        %v3008 = vshll.u32 %v2768, 16
        %v3010 = vrot.slane %v3008, 1
        %v3011 = vor.u32 %v3006, %v3010
        %v3013 = vshll.u32 %v2822, 16
        %v3015 = vrot.slane %v3013, 1
        %v3016 = vsel %vm982, %v3011, %v3015
        %v3018 = vshrl.u32 %v2769, 16
        %v3020 = vshll.u32 %v2769, 16
        %v3022 = vrot.slane %v3020, 1
        %v3023 = vor.u32 %v3018, %v3022
        %v3025 = vshll.u32 %v2823, 16
        %v3027 = vrot.slane %v3025, 1
        %v3028 = vsel %vm982, %v3023, %v3027
        %v3030 = vshrl.u32 %v2770, 16
        %v3032 = vshll.u32 %v2770, 16
        %v3034 = vrot.slane %v3032, 1
        %v3035 = vor.u32 %v3030, %v3034
        %v3037 = vshll.u32 %v2824, 16
        %v3039 = vrot.slane %v3037, 1
        %v3040 = vsel %vm982, %v3035, %v3039
        %3041 = vrot.lane.b32.xlu0 %v2836, 64
        %v3042 = vpop.permute.xlu0 %3041
        %3043 = vrot.lane.b32.xlu0 %v2848, 64
        %v3044 = vpop.permute.xlu0 %3043
        %3045 = vrot.lane.b32.xlu0 %v2860, 64
        %v3046 = vpop.permute.xlu0 %3045
        %3047 = vrot.lane.b32.xlu0 %v2872, 64
        %v3048 = vpop.permute.xlu0 %3047
        %3049 = vrot.lane.b32.xlu0 %v2884, 64
        %v3050 = vpop.permute.xlu0 %3049
        %3051 = vrot.lane.b32.xlu0 %v2896, 64
        %v3052 = vpop.permute.xlu0 %3051
        %3053 = vrot.lane.b32.xlu0 %v2908, 64
        %v3054 = vpop.permute.xlu0 %3053
        %3055 = vrot.lane.b32.xlu0 %v2920, 64
        %v3056 = vpop.permute.xlu0 %3055
        %3057 = vrot.lane.b32.xlu0 %v2932, 64
        %v3058 = vpop.permute.xlu0 %3057
        %3059 = vrot.lane.b32.xlu0 %v2944, 64
        %v3060 = vpop.permute.xlu0 %3059
        %3061 = vrot.lane.b32.xlu0 %v2956, 64
        %v3062 = vpop.permute.xlu0 %3061
        %3063 = vrot.lane.b32.xlu0 %v2968, 64
        %v3064 = vpop.permute.xlu0 %3063
        %3065 = vrot.lane.b32.xlu0 %v2980, 64
        %v3066 = vpop.permute.xlu0 %3065
        %3067 = vrot.lane.b32.xlu0 %v2992, 64
        %v3068 = vpop.permute.xlu0 %3067
        %3069 = vrot.lane.b32.xlu0 %v3004, 64
        %v3070 = vpop.permute.xlu0 %3069
        %3071 = vrot.lane.b32.xlu0 %v3016, 64
        %v3072 = vpop.permute.xlu0 %3071
        %3073 = vrot.lane.b32.xlu0 %v3028, 64
        %v3074 = vpop.permute.xlu0 %3073
        %3075 = vrot.lane.b32.xlu0 %v3040, 64
        %v3076 = vpop.permute.xlu0 %3075
        %v3077 = vrot.slane %v2753, 1
        %v3078 = vrot.slane %v2807, 1
        %v3079 = vsel %vm1235, %v3077, %v3078
        %v3080 = vrot.slane %v2754, 1
        %v3081 = vrot.slane %v2808, 1
        %v3082 = vsel %vm1235, %v3080, %v3081
        %v3083 = vrot.slane %v2755, 1
        %v3084 = vrot.slane %v2809, 1
        %v3085 = vsel %vm1235, %v3083, %v3084
        %v3086 = vrot.slane %v2756, 1
        %v3087 = vrot.slane %v2810, 1
        %v3088 = vsel %vm1235, %v3086, %v3087
        %v3089 = vrot.slane %v2757, 1
        %v3090 = vrot.slane %v2811, 1
        %v3091 = vsel %vm1235, %v3089, %v3090
        %v3092 = vrot.slane %v2758, 1
        %v3093 = vrot.slane %v2812, 1
        %v3094 = vsel %vm1235, %v3092, %v3093
        %v3095 = vrot.slane %v2759, 1
        %v3096 = vrot.slane %v2813, 1
        %v3097 = vsel %vm1235, %v3095, %v3096
        %v3098 = vrot.slane %v2760, 1
        %v3099 = vrot.slane %v2814, 1
        %v3100 = vsel %vm1235, %v3098, %v3099
        %v3101 = vrot.slane %v2761, 1
        %v3102 = vrot.slane %v2815, 1
        %v3103 = vsel %vm1235, %v3101, %v3102
        %v3104 = vrot.slane %v2762, 1
        %v3105 = vrot.slane %v2816, 1
        %v3106 = vsel %vm1235, %v3104, %v3105
        %v3107 = vrot.slane %v2763, 1
        %v3108 = vrot.slane %v2817, 1
        %v3109 = vsel %vm1235, %v3107, %v3108
        %v3110 = vrot.slane %v2764, 1
        %v3111 = vrot.slane %v2818, 1
        %v3112 = vsel %vm1235, %v3110, %v3111
        %v3113 = vrot.slane %v2765, 1
        %v3114 = vrot.slane %v2819, 1
        %v3115 = vsel %vm1235, %v3113, %v3114
        %v3116 = vrot.slane %v2766, 1
        %v3117 = vrot.slane %v2820, 1
        %v3118 = vsel %vm1235, %v3116, %v3117
        %v3119 = vrot.slane %v2767, 1
        %v3120 = vrot.slane %v2821, 1
        %v3121 = vsel %vm1235, %v3119, %v3120
        %v3122 = vrot.slane %v2768, 1
        %v3123 = vrot.slane %v2822, 1
        %v3124 = vsel %vm1235, %v3122, %v3123
        %v3125 = vrot.slane %v2769, 1
        %v3126 = vrot.slane %v2823, 1
        %v3127 = vsel %vm1235, %v3125, %v3126
        %v3128 = vrot.slane %v2770, 1
        %v3129 = vrot.slane %v2824, 1
        %v3130 = vsel %vm1235, %v3128, %v3129
        %v3132 = vsel %vm1290, %v2753, %v3042
        %v3135 = vsel %vm1290, %v2754, %v3044
        %v3138 = vsel %vm1290, %v2755, %v3046
        %v3141 = vsel %vm1290, %v2756, %v3048
        %v3144 = vsel %vm1290, %v2757, %v3050
        %v3147 = vsel %vm1290, %v2758, %v3052
        %v3150 = vsel %vm1290, %v2759, %v3054
        %v3153 = vsel %vm1290, %v2760, %v3056
        %v3156 = vsel %vm1290, %v2761, %v3058
        %v3159 = vsel %vm1290, %v2762, %v3060
        %v3162 = vsel %vm1290, %v2763, %v3062
        %v3165 = vsel %vm1290, %v2764, %v3064
        %v3168 = vsel %vm1290, %v2765, %v3066
        %v3171 = vsel %vm1290, %v2766, %v3068
        %v3174 = vsel %vm1290, %v2767, %v3070
        %v3177 = vsel %vm1290, %v2768, %v3072
        %v3180 = vsel %vm1290, %v2769, %v3074
        %v3183 = vsel %vm1290, %v2770, %v3076
        %v3209 = vunpack.c.l.b16 %v2603
        %v3210 = vunpack.c.h.b16 %v2603
        %v3211 = vunpack.c.l.b16 %v2604
        %v3212 = vunpack.c.h.b16 %v2604
        %v3213 = vunpack.c.l.b16 %v2605
        %v3214 = vunpack.c.h.b16 %v2605
        %v3215 = vunpack.c.l.b16 %v2606
        %v3216 = vunpack.c.h.b16 %v2606
        %v3217 = vunpack.c.l.b16 %v2607
        %v3218 = vunpack.c.h.b16 %v2607
        %v3219 = vunpack.c.l.b16 %v2608
        %v3220 = vunpack.c.h.b16 %v2608
        %v3221 = vunpack.c.l.b16 %v2609
        %v3222 = vunpack.c.h.b16 %v2609
        %v3223 = vunpack.c.l.b16 %v2610
        %v3224 = vunpack.c.h.b16 %v2610
        %v3225 = vunpack.c.l.b16 %v2611
        %v3226 = vunpack.c.h.b16 %v2611
        %v3227 = vunpack.c.l.b16 %v2612
        %v3228 = vunpack.c.h.b16 %v2612
        %v3229 = vunpack.c.l.b16 %v2613
        %v3230 = vunpack.c.h.b16 %v2613
        %v3231 = vunpack.c.l.b16 %v2614
        %v3232 = vunpack.c.h.b16 %v2614
        %v3233 = vunpack.c.l.b16 %v2615
        %v3234 = vunpack.c.h.b16 %v2615
        %v3235 = vunpack.c.l.b16 %v2616
        %v3236 = vunpack.c.h.b16 %v2616
        %v3237 = vunpack.c.l.b16 %v2617
        %v3238 = vunpack.c.h.b16 %v2617
        %v3239 = vunpack.c.l.b16 %v2618
        %v3240 = vunpack.c.h.b16 %v2618
        %v3241 = vunpack.c.l.b16 %v2619
        %v3242 = vunpack.c.h.b16 %v2619
        %v3243 = vunpack.c.l.b16 %v2620
        %v3244 = vunpack.c.h.b16 %v2620
        %v3245 = vunpack.c.l.b16 %v2621
        %v3246 = vunpack.c.h.b16 %v2621
        %v3247 = vunpack.c.l.b16 %v2622
        %v3248 = vunpack.c.h.b16 %v2622
        %v3249 = vunpack.c.l.b16 %v2623
        %v3250 = vunpack.c.h.b16 %v2623
        %v3251 = vunpack.c.l.b16 %v2624
        %v3252 = vunpack.c.h.b16 %v2624
        %v3253 = vunpack.c.l.b16 %v2625
        %v3254 = vunpack.c.h.b16 %v2625
        %v3255 = vunpack.c.l.b16 %v2626
        %v3256 = vunpack.c.h.b16 %v2626
        %v3257 = vpack.c.b16 %v3211, %v3209
        %v3258 = vpack.c.b16 %v3212, %v3210
        %v3259 = vpack.c.b16 %v3215, %v3213
        %v3260 = vpack.c.b16 %v3216, %v3214
        %v3261 = vpack.c.b16 %v3219, %v3217
        %v3262 = vpack.c.b16 %v3220, %v3218
        %v3263 = vpack.c.b16 %v3223, %v3221
        %v3264 = vpack.c.b16 %v3224, %v3222
        %v3265 = vpack.c.b16 %v3227, %v3225
        %v3266 = vpack.c.b16 %v3228, %v3226
        %v3267 = vpack.c.b16 %v3231, %v3229
        %v3268 = vpack.c.b16 %v3232, %v3230
        %v3269 = vpack.c.b16 %v3235, %v3233
        %v3270 = vpack.c.b16 %v3236, %v3234
        %v3271 = vpack.c.b16 %v3239, %v3237
        %v3272 = vpack.c.b16 %v3240, %v3238
        %v3273 = vpack.c.b16 %v3243, %v3241
        %v3274 = vpack.c.b16 %v3244, %v3242
        %v3275 = vpack.c.b16 %v3247, %v3245
        %v3276 = vpack.c.b16 %v3248, %v3246
        %v3277 = vpack.c.b16 %v3251, %v3249
        %v3278 = vpack.c.b16 %v3252, %v3250
        %v3279 = vpack.c.b16 %v3255, %v3253
        %v3280 = vpack.c.b16 %v3256, %v3254
        %v3306 = vsel %vm1290, %v3079, 0
        %v3309 = vsel %vm1290, %v3082, 0
        %v3312 = vsel %vm1290, %v3085, 0
        %v3315 = vsel %vm1290, %v3088, 0
        %v3318 = vsel %vm1290, %v3091, 0
        %v3321 = vsel %vm1290, %v3094, 0
        %v3324 = vsel %vm1290, %v3097, 0
        %v3327 = vsel %vm1290, %v3100, 0
        %v3330 = vsel %vm1290, %v3103, 0
        %v3333 = vsel %vm1290, %v3106, 0
        %v3336 = vsel %vm1290, %v3109, 0
        %v3339 = vsel %vm1290, %v3112, 0
        %v3342 = vsel %vm1290, %v3115, 0
        %v3345 = vsel %vm1290, %v3118, 0
        %v3348 = vsel %vm1290, %v3121, 0
        %v3351 = vsel %vm1290, %v3124, 0
        %v3354 = vsel %vm1290, %v3127, 0
        %v3357 = vsel %vm1290, %v3130, 0
        %3359 = vmatpush.bf16.msra.mxu0 %v3271
        %3360 = vmatpush.bf16.msra.mxu0 %v3269
        %3361 = vmatpush.bf16.msra.mxu0 %v3267
        %3362 = vmatpush.bf16.msra.mxu0 %v3265
        %3363 = vmatpush.bf16.msra.mxu0 %v3263
        %3364 = vmatpush.bf16.msra.mxu0 %v3261
        %3365 = vmatpush.bf16.msra.mxu0 %v3259
        %3366 = vmatpush.bf16.msra.mxu0 %v3257
        %3367 = vmatmul.bf16.gmra.mxu0 %v3132
        %v3368 = vpop.f32.mrf.mxu0
        %v3369 = vadd.f32 0.0, %v3368
        %v3370 = vpop.f32.mrf.mxu0
        %v3371 = vadd.f32 0.0, %v3370
        %3372 = vmatmul.bf16.gmra.mxu0 %v3135
        %v3373 = vpop.f32.mrf.mxu0
        %v3374 = vadd.f32 0.0, %v3373
        %v3375 = vpop.f32.mrf.mxu0
        %v3376 = vadd.f32 0.0, %v3375
        %3377 = vmatmul.bf16.gmra.mxu0 %v3138
        %v3378 = vpop.f32.mrf.mxu0
        %v3379 = vadd.f32 0.0, %v3378
        %v3380 = vpop.f32.mrf.mxu0
        %v3381 = vadd.f32 0.0, %v3380
        %3382 = vmatmul.bf16.gmra.mxu0 %v3141
        %v3383 = vpop.f32.mrf.mxu0
        %v3384 = vadd.f32 0.0, %v3383
        %v3385 = vpop.f32.mrf.mxu0
        %v3386 = vadd.f32 0.0, %v3385
        %3387 = vmatmul.bf16.gmra.mxu0 %v3144
        %v3388 = vpop.f32.mrf.mxu0
        %v3389 = vadd.f32 0.0, %v3388
        %v3390 = vpop.f32.mrf.mxu0
        %v3391 = vadd.f32 0.0, %v3390
        %3392 = vmatmul.bf16.gmra.mxu0 %v3147
        %v3393 = vpop.f32.mrf.mxu0
        %v3394 = vadd.f32 0.0, %v3393
        %v3395 = vpop.f32.mrf.mxu0
        %v3396 = vadd.f32 0.0, %v3395
        %3397 = vmatmul.bf16.gmra.mxu0 %v3150
        %v3398 = vpop.f32.mrf.mxu0
        %v3399 = vadd.f32 0.0, %v3398
        %v3400 = vpop.f32.mrf.mxu0
        %v3401 = vadd.f32 0.0, %v3400
        %3402 = vmatmul.bf16.gmra.mxu0 %v3153
        %v3403 = vpop.f32.mrf.mxu0
        %v3404 = vadd.f32 0.0, %v3403
        %v3405 = vpop.f32.mrf.mxu0
        %v3406 = vadd.f32 0.0, %v3405
        %3407 = vmatmul.bf16.gmra.mxu0 %v3156
        %v3408 = vpop.f32.mrf.mxu0
        %v3409 = vadd.f32 0.0, %v3408
        %v3410 = vpop.f32.mrf.mxu0
        %v3411 = vadd.f32 0.0, %v3410
        %3412 = vmatmul.bf16.gmra.mxu0 %v3159
        %v3413 = vpop.f32.mrf.mxu0
        %v3414 = vadd.f32 0.0, %v3413
        %v3415 = vpop.f32.mrf.mxu0
        %v3416 = vadd.f32 0.0, %v3415
        %3417 = vmatmul.bf16.gmra.mxu0 %v3162
        %v3418 = vpop.f32.mrf.mxu0
        %v3419 = vadd.f32 0.0, %v3418
        %v3420 = vpop.f32.mrf.mxu0
        %v3421 = vadd.f32 0.0, %v3420
        %3422 = vmatmul.bf16.gmra.mxu0 %v3165
        %v3423 = vpop.f32.mrf.mxu0
        %v3424 = vadd.f32 0.0, %v3423
        %v3425 = vpop.f32.mrf.mxu0
        %v3426 = vadd.f32 0.0, %v3425
        %3427 = vmatmul.bf16.gmra.mxu0 %v3168
        %v3428 = vpop.f32.mrf.mxu0
        %v3429 = vadd.f32 0.0, %v3428
        %v3430 = vpop.f32.mrf.mxu0
        %v3431 = vadd.f32 0.0, %v3430
        %3432 = vmatmul.bf16.gmra.mxu0 %v3171
        %v3433 = vpop.f32.mrf.mxu0
        %v3434 = vadd.f32 0.0, %v3433
        %v3435 = vpop.f32.mrf.mxu0
        %v3436 = vadd.f32 0.0, %v3435
        %3437 = vmatmul.bf16.gmra.mxu0 %v3174
        %v3438 = vpop.f32.mrf.mxu0
        %v3439 = vadd.f32 0.0, %v3438
        %v3440 = vpop.f32.mrf.mxu0
        %v3441 = vadd.f32 0.0, %v3440
        %3442 = vmatmul.bf16.gmra.mxu0 %v3177
        %v3443 = vpop.f32.mrf.mxu0
        %v3444 = vadd.f32 0.0, %v3443
        %v3445 = vpop.f32.mrf.mxu0
        %v3446 = vadd.f32 0.0, %v3445
        %3447 = vmatmul.bf16.gmra.mxu0 %v3180
        %v3448 = vpop.f32.mrf.mxu0
        %v3449 = vadd.f32 0.0, %v3448
        %v3450 = vpop.f32.mrf.mxu0
        %v3451 = vadd.f32 0.0, %v3450
        %3452 = vmatmul.bf16.gmra.mxu0 %v3183
        %v3453 = vpop.f32.mrf.mxu0
        %v3454 = vpop.f32.mrf.mxu0
        %3455 = vdwg.mxu0
        %3456 = vmatpush.bf16.msra.mxu0 0
        %3457 = vmatpush.bf16.msra.mxu0 0
        %3458 = vmatpush.bf16.msra.mxu0 0
        %3459 = vmatpush.bf16.msra.mxu0 0
        %3460 = vmatpush.bf16.msra.mxu0 %v3279
        %3461 = vmatpush.bf16.msra.mxu0 %v3277
        %3462 = vmatpush.bf16.msra.mxu0 %v3275
        %3463 = vmatpush.bf16.msra.mxu0 %v3273
        %3464 = vmatmul.bf16.gmra.mxu0 %v3306
        %v3465 = vpop.f32.mrf.mxu0
        %v3466 = vadd.f32 %v3369, %v3465
        %v3467 = vpop.f32.mrf.mxu0
        %v3468 = vadd.f32 %v3371, %v3467
        %3469 = vmatmul.bf16.gmra.mxu0 %v3309
        %v3470 = vpop.f32.mrf.mxu0
        %v3471 = vadd.f32 %v3374, %v3470
        %v3472 = vpop.f32.mrf.mxu0
        %v3473 = vadd.f32 %v3376, %v3472
        %3474 = vmatmul.bf16.gmra.mxu0 %v3312
        %v3475 = vpop.f32.mrf.mxu0
        %v3476 = vadd.f32 %v3379, %v3475
        %v3477 = vpop.f32.mrf.mxu0
        %v3478 = vadd.f32 %v3381, %v3477
        %3479 = vmatmul.bf16.gmra.mxu0 %v3315
        %v3480 = vpop.f32.mrf.mxu0
        %v3481 = vadd.f32 %v3384, %v3480
        %v3482 = vpop.f32.mrf.mxu0
        %v3483 = vadd.f32 %v3386, %v3482
        %3484 = vmatmul.bf16.gmra.mxu0 %v3318
        %v3485 = vpop.f32.mrf.mxu0
        %v3486 = vadd.f32 %v3389, %v3485
        %v3487 = vpop.f32.mrf.mxu0
        %v3488 = vadd.f32 %v3391, %v3487
        %3489 = vmatmul.bf16.gmra.mxu0 %v3321
        %v3490 = vpop.f32.mrf.mxu0
        %v3491 = vadd.f32 %v3394, %v3490
        %v3492 = vpop.f32.mrf.mxu0
        %v3493 = vadd.f32 %v3396, %v3492
        %3494 = vmatmul.bf16.gmra.mxu0 %v3324
        %v3495 = vpop.f32.mrf.mxu0
        %v3496 = vadd.f32 %v3399, %v3495
        %v3497 = vpop.f32.mrf.mxu0
        %v3498 = vadd.f32 %v3401, %v3497
        %3499 = vmatmul.bf16.gmra.mxu0 %v3327
        %v3500 = vpop.f32.mrf.mxu0
        %v3501 = vadd.f32 %v3404, %v3500
        %v3502 = vpop.f32.mrf.mxu0
        %v3503 = vadd.f32 %v3406, %v3502
        %3504 = vmatmul.bf16.gmra.mxu0 %v3330
        %v3505 = vpop.f32.mrf.mxu0
        %v3506 = vadd.f32 %v3409, %v3505
        %v3507 = vpop.f32.mrf.mxu0
        %v3508 = vadd.f32 %v3411, %v3507
        %3509 = vmatmul.bf16.gmra.mxu0 %v3333
        %v3510 = vpop.f32.mrf.mxu0
        %v3511 = vadd.f32 %v3414, %v3510
        %v3512 = vpop.f32.mrf.mxu0
        %v3513 = vadd.f32 %v3416, %v3512
        %3514 = vmatmul.bf16.gmra.mxu0 %v3336
        %v3515 = vpop.f32.mrf.mxu0
        %v3516 = vadd.f32 %v3419, %v3515
        %v3517 = vpop.f32.mrf.mxu0
        %v3518 = vadd.f32 %v3421, %v3517
        %3519 = vmatmul.bf16.gmra.mxu0 %v3339
        %v3520 = vpop.f32.mrf.mxu0
        %v3521 = vadd.f32 %v3424, %v3520
        %v3522 = vpop.f32.mrf.mxu0
        %v3523 = vadd.f32 %v3426, %v3522
        %3524 = vmatmul.bf16.gmra.mxu0 %v3342
        %v3525 = vpop.f32.mrf.mxu0
        %v3526 = vadd.f32 %v3429, %v3525
        %v3527 = vpop.f32.mrf.mxu0
        %v3528 = vadd.f32 %v3431, %v3527
        %3529 = vmatmul.bf16.gmra.mxu0 %v3345
        %v3530 = vpop.f32.mrf.mxu0
        %v3531 = vadd.f32 %v3434, %v3530
        %v3532 = vpop.f32.mrf.mxu0
        %v3533 = vadd.f32 %v3436, %v3532
        %3534 = vmatmul.bf16.gmra.mxu0 %v3348
        %v3535 = vpop.f32.mrf.mxu0
        %v3536 = vadd.f32 %v3439, %v3535
        %v3537 = vpop.f32.mrf.mxu0
        %v3538 = vadd.f32 %v3441, %v3537
        %3539 = vmatmul.bf16.gmra.mxu0 %v3351
        %v3540 = vpop.f32.mrf.mxu0
        %v3541 = vadd.f32 %v3444, %v3540
        %v3542 = vpop.f32.mrf.mxu0
        %v3543 = vadd.f32 %v3446, %v3542
        %3544 = vmatmul.bf16.gmra.mxu0 %v3354
        %v3545 = vpop.f32.mrf.mxu0
        %v3546 = vadd.f32 %v3449, %v3545
        %v3547 = vpop.f32.mrf.mxu0
        %v3548 = vadd.f32 %v3451, %v3547
        %3549 = vmatmul.bf16.gmra.mxu0 %v3357
        %v3550 = vpop.f32.mrf.mxu0
        %v3551 = vpop.f32.mrf.mxu0
        %3552 = vdwg.mxu0
        %3553 = vmatpush.bf16.msra.mxu0 %v3272
        %3554 = vmatpush.bf16.msra.mxu0 %v3270
        %3555 = vmatpush.bf16.msra.mxu0 %v3268
        %3556 = vmatpush.bf16.msra.mxu0 %v3266
        %3557 = vmatpush.bf16.msra.mxu0 %v3264
        %3558 = vmatpush.bf16.msra.mxu0 %v3262
        %3559 = vmatpush.bf16.msra.mxu0 %v3260
        %3560 = vmatpush.bf16.msra.mxu0 %v3258
        %3561 = vmatmul.bf16.gmra.mxu0 %v3132
        %v3562 = vpop.f32.mrf.mxu0
        %v3563 = vpop.f32.mrf.mxu0
        %3564 = vmatmul.bf16.gmra.mxu0 %v3135
        %v3565 = vpop.f32.mrf.mxu0
        %v3566 = vpop.f32.mrf.mxu0
        %3567 = vmatmul.bf16.gmra.mxu0 %v3138
        %v3568 = vpop.f32.mrf.mxu0
        %v3569 = vadd.f32 0.0, %v3568
        %v3570 = vpop.f32.mrf.mxu0
        %v3571 = vadd.f32 0.0, %v3570
        %3572 = vmatmul.bf16.gmra.mxu0 %v3141
        %v3573 = vpop.f32.mrf.mxu0
        %v3574 = vadd.f32 0.0, %v3573
        %v3575 = vpop.f32.mrf.mxu0
        %v3576 = vadd.f32 0.0, %v3575
        %3577 = vmatmul.bf16.gmra.mxu0 %v3144
        %v3578 = vpop.f32.mrf.mxu0
        %v3579 = vadd.f32 0.0, %v3578
        %v3580 = vpop.f32.mrf.mxu0
        %v3581 = vadd.f32 0.0, %v3580
        %3582 = vmatmul.bf16.gmra.mxu0 %v3147
        %v3583 = vpop.f32.mrf.mxu0
        %v3584 = vadd.f32 0.0, %v3583
        %v3585 = vpop.f32.mrf.mxu0
        %v3586 = vadd.f32 0.0, %v3585
        %3587 = vmatmul.bf16.gmra.mxu0 %v3150
        %v3588 = vpop.f32.mrf.mxu0
        %v3589 = vadd.f32 0.0, %v3588
        %v3590 = vpop.f32.mrf.mxu0
        %v3591 = vadd.f32 0.0, %v3590
        %3592 = vmatmul.bf16.gmra.mxu0 %v3153
        %v3593 = vpop.f32.mrf.mxu0
        %v3594 = vadd.f32 0.0, %v3593
        %v3595 = vpop.f32.mrf.mxu0
        %v3596 = vadd.f32 0.0, %v3595
        %3597 = vmatmul.bf16.gmra.mxu0 %v3156
        %v3598 = vpop.f32.mrf.mxu0
        %v3599 = vadd.f32 0.0, %v3598
        %v3600 = vpop.f32.mrf.mxu0
        %v3601 = vadd.f32 0.0, %v3600
        %3602 = vmatmul.bf16.gmra.mxu0 %v3159
        %v3603 = vpop.f32.mrf.mxu0
        %v3604 = vadd.f32 0.0, %v3603
        %v3605 = vpop.f32.mrf.mxu0
        %v3606 = vadd.f32 0.0, %v3605
        %3607 = vmatmul.bf16.gmra.mxu0 %v3162
        %v3608 = vpop.f32.mrf.mxu0
        %v3609 = vadd.f32 0.0, %v3608
        %v3610 = vpop.f32.mrf.mxu0
        %v3611 = vadd.f32 0.0, %v3610
        %3612 = vmatmul.bf16.gmra.mxu0 %v3165
        %v3613 = vpop.f32.mrf.mxu0
        %v3614 = vadd.f32 0.0, %v3613
        %v3615 = vpop.f32.mrf.mxu0
        %v3616 = vadd.f32 0.0, %v3615
        %3617 = vmatmul.bf16.gmra.mxu0 %v3168
        %v3618 = vpop.f32.mrf.mxu0
        %v3619 = vadd.f32 0.0, %v3618
        %v3620 = vpop.f32.mrf.mxu0
        %v3621 = vadd.f32 0.0, %v3620
        %3622 = vmatmul.bf16.gmra.mxu0 %v3171
        %v3623 = vpop.f32.mrf.mxu0
        %v3624 = vadd.f32 0.0, %v3623
        %v3625 = vpop.f32.mrf.mxu0
        %v3626 = vadd.f32 0.0, %v3625
        %3627 = vmatmul.bf16.gmra.mxu0 %v3174
        %v3628 = vpop.f32.mrf.mxu0
        %v3629 = vadd.f32 0.0, %v3628
        %v3630 = vpop.f32.mrf.mxu0
        %v3631 = vadd.f32 0.0, %v3630
        %3632 = vmatmul.bf16.gmra.mxu0 %v3177
        %v3633 = vpop.f32.mrf.mxu0
        %v3634 = vadd.f32 0.0, %v3633
        %v3635 = vpop.f32.mrf.mxu0
        %v3636 = vadd.f32 0.0, %v3635
        %3637 = vmatmul.bf16.gmra.mxu0 %v3180
        %v3638 = vpop.f32.mrf.mxu0
        %v3639 = vadd.f32 0.0, %v3638
        %v3640 = vpop.f32.mrf.mxu0
        %v3641 = vadd.f32 0.0, %v3640
        %3642 = vmatmul.bf16.gmra.mxu0 %v3183
        %v3643 = vpop.f32.mrf.mxu0
        %v3644 = vadd.f32 0.0, %v3643
        %v3645 = vpop.f32.mrf.mxu0
        %v3646 = vadd.f32 0.0, %v3645
        %3647 = vdwg.mxu0
        %3648 = vmatpush.bf16.msra.mxu0 0
        %3649 = vmatpush.bf16.msra.mxu0 0
        %3650 = vmatpush.bf16.msra.mxu0 0
        %3651 = vmatpush.bf16.msra.mxu0 0
        %3652 = vmatpush.bf16.msra.mxu0 %v3280
        %3653 = vmatpush.bf16.msra.mxu0 %v3278
        %3654 = vmatpush.bf16.msra.mxu0 %v3276
        %3655 = vmatpush.bf16.msra.mxu0 %v3274
        %3656 = vmatmul.bf16.gmra.mxu0 %v3306
        %v3657 = vpop.f32.mrf.mxu0
        %v3658 = vpop.f32.mrf.mxu0
        %3659 = vmatmul.bf16.gmra.mxu0 %v3309
        %v3660 = vpop.f32.mrf.mxu0
        %v3661 = vpop.f32.mrf.mxu0
        %3662 = vmatmul.bf16.gmra.mxu0 %v3312
        %v3663 = vpop.f32.mrf.mxu0
        %v3664 = vadd.f32 %v3569, %v3663
        %v3665 = vpop.f32.mrf.mxu0
        %v3666 = vadd.f32 %v3571, %v3665
        %3667 = vmatmul.bf16.gmra.mxu0 %v3315
        %v3668 = vpop.f32.mrf.mxu0
        %v3669 = vadd.f32 %v3574, %v3668
        %v3670 = vpop.f32.mrf.mxu0
        %v3671 = vadd.f32 %v3576, %v3670
        %3672 = vmatmul.bf16.gmra.mxu0 %v3318
        %v3673 = vpop.f32.mrf.mxu0
        %v3674 = vadd.f32 %v3579, %v3673
        %v3675 = vpop.f32.mrf.mxu0
        %v3676 = vadd.f32 %v3581, %v3675
        %3677 = vmatmul.bf16.gmra.mxu0 %v3321
        %v3678 = vpop.f32.mrf.mxu0
        %v3679 = vadd.f32 %v3584, %v3678
        %v3680 = vpop.f32.mrf.mxu0
        %v3681 = vadd.f32 %v3586, %v3680
        %3682 = vmatmul.bf16.gmra.mxu0 %v3324
        %v3683 = vpop.f32.mrf.mxu0
        %v3684 = vadd.f32 %v3589, %v3683
        %v3685 = vpop.f32.mrf.mxu0
        %v3686 = vadd.f32 %v3591, %v3685
        %3687 = vmatmul.bf16.gmra.mxu0 %v3327
        %v3688 = vpop.f32.mrf.mxu0
        %v3689 = vadd.f32 %v3594, %v3688
        %v3690 = vpop.f32.mrf.mxu0
        %v3691 = vadd.f32 %v3596, %v3690
        %3692 = vmatmul.bf16.gmra.mxu0 %v3330
        %v3693 = vpop.f32.mrf.mxu0
        %v3694 = vadd.f32 %v3599, %v3693
        %v3695 = vpop.f32.mrf.mxu0
        %v3696 = vadd.f32 %v3601, %v3695
        %3697 = vmatmul.bf16.gmra.mxu0 %v3333
        %v3698 = vpop.f32.mrf.mxu0
        %v3699 = vadd.f32 %v3604, %v3698
        %v3700 = vpop.f32.mrf.mxu0
        %v3701 = vadd.f32 %v3606, %v3700
        %3702 = vmatmul.bf16.gmra.mxu0 %v3336
        %v3703 = vpop.f32.mrf.mxu0
        %v3704 = vadd.f32 %v3609, %v3703
        %v3705 = vpop.f32.mrf.mxu0
        %v3706 = vadd.f32 %v3611, %v3705
        %3707 = vmatmul.bf16.gmra.mxu0 %v3339
        %v3708 = vpop.f32.mrf.mxu0
        %v3709 = vadd.f32 %v3614, %v3708
        %v3710 = vpop.f32.mrf.mxu0
        %v3711 = vadd.f32 %v3616, %v3710
        %3712 = vmatmul.bf16.gmra.mxu0 %v3342
        %v3713 = vpop.f32.mrf.mxu0
        %v3714 = vadd.f32 %v3619, %v3713
        %v3715 = vpop.f32.mrf.mxu0
        %v3716 = vadd.f32 %v3621, %v3715
        %3717 = vmatmul.bf16.gmra.mxu0 %v3345
        %v3718 = vpop.f32.mrf.mxu0
        %v3719 = vadd.f32 %v3624, %v3718
        %v3720 = vpop.f32.mrf.mxu0
        %v3721 = vadd.f32 %v3626, %v3720
        %3722 = vmatmul.bf16.gmra.mxu0 %v3348
        %v3723 = vpop.f32.mrf.mxu0
        %v3724 = vadd.f32 %v3629, %v3723
        %v3725 = vpop.f32.mrf.mxu0
        %v3726 = vadd.f32 %v3631, %v3725
        %3727 = vmatmul.bf16.gmra.mxu0 %v3351
        %v3728 = vpop.f32.mrf.mxu0
        %v3729 = vadd.f32 %v3634, %v3728
        %v3730 = vpop.f32.mrf.mxu0
        %v3731 = vadd.f32 %v3636, %v3730
        %3732 = vmatmul.bf16.gmra.mxu0 %v3354
        %v3733 = vpop.f32.mrf.mxu0
        %v3734 = vadd.f32 %v3639, %v3733
        %v3735 = vpop.f32.mrf.mxu0
        %v3736 = vadd.f32 %v3641, %v3735
        %3737 = vmatmul.bf16.gmra.mxu0 %v3357
        %v3738 = vpop.f32.mrf.mxu0
        %v3739 = vadd.f32 %v3644, %v3738
        %v3740 = vpop.f32.mrf.mxu0
        %v3741 = vadd.f32 %v3646, %v3740
        %3742 = vdwg.mxu0
        %3775 = vrot.lane.b32.xlu0 %v3471, 64
        %v3776 = vpop.permute.xlu0 %3775
        %3777 = vrot.lane.b32.xlu0 %v3473, 64
        %v3778 = vpop.permute.xlu0 %3777
        %3779 = vrot.lane.b32.xlu0 %v3476, 64
        %v3780 = vpop.permute.xlu0 %3779
        %3781 = vrot.lane.b32.xlu0 %v3478, 64
        %v3782 = vpop.permute.xlu0 %3781
        %3783 = vrot.lane.b32.xlu0 %v3481, 64
        %v3784 = vpop.permute.xlu0 %3783
        %3785 = vrot.lane.b32.xlu0 %v3483, 64
        %v3786 = vpop.permute.xlu0 %3785
        %3787 = vrot.lane.b32.xlu0 %v3486, 64
        %v3788 = vpop.permute.xlu0 %3787
        %3789 = vrot.lane.b32.xlu0 %v3488, 64
        %v3790 = vpop.permute.xlu0 %3789
        %3791 = vrot.lane.b32.xlu0 %v3491, 64
        %v3792 = vpop.permute.xlu0 %3791
        %3793 = vrot.lane.b32.xlu0 %v3493, 64
        %v3794 = vpop.permute.xlu0 %3793
        %3795 = vrot.lane.b32.xlu0 %v3496, 64
        %v3796 = vpop.permute.xlu0 %3795
        %3797 = vrot.lane.b32.xlu0 %v3498, 64
        %v3798 = vpop.permute.xlu0 %3797
        %3799 = vrot.lane.b32.xlu0 %v3501, 64
        %v3800 = vpop.permute.xlu0 %3799
        %3801 = vrot.lane.b32.xlu0 %v3503, 64
        %v3802 = vpop.permute.xlu0 %3801
        %3803 = vrot.lane.b32.xlu0 %v3506, 64
        %v3804 = vpop.permute.xlu0 %3803
        %3805 = vrot.lane.b32.xlu0 %v3508, 64
        %v3806 = vpop.permute.xlu0 %3805
        %3807 = vrot.lane.b32.xlu0 %v3511, 64
        %v3808 = vpop.permute.xlu0 %3807
        %3809 = vrot.lane.b32.xlu0 %v3513, 64
        %v3810 = vpop.permute.xlu0 %3809
        %3811 = vrot.lane.b32.xlu0 %v3516, 64
        %v3812 = vpop.permute.xlu0 %3811
        %3813 = vrot.lane.b32.xlu0 %v3518, 64
        %v3814 = vpop.permute.xlu0 %3813
        %3815 = vrot.lane.b32.xlu0 %v3521, 64
        %v3816 = vpop.permute.xlu0 %3815
        %3817 = vrot.lane.b32.xlu0 %v3523, 64
        %v3818 = vpop.permute.xlu0 %3817
        %3819 = vrot.lane.b32.xlu0 %v3526, 64
        %v3820 = vpop.permute.xlu0 %3819
        %3821 = vrot.lane.b32.xlu0 %v3528, 64
        %v3822 = vpop.permute.xlu0 %3821
        %3823 = vrot.lane.b32.xlu0 %v3531, 64
        %v3824 = vpop.permute.xlu0 %3823
        %3825 = vrot.lane.b32.xlu0 %v3533, 64
        %v3826 = vpop.permute.xlu0 %3825
        %3827 = vrot.lane.b32.xlu0 %v3536, 64
        %v3828 = vpop.permute.xlu0 %3827
        %3829 = vrot.lane.b32.xlu0 %v3538, 64
        %v3830 = vpop.permute.xlu0 %3829
        %3831 = vrot.lane.b32.xlu0 %v3541, 64
        %v3832 = vpop.permute.xlu0 %3831
        %3833 = vrot.lane.b32.xlu0 %v3543, 64
        %v3834 = vpop.permute.xlu0 %3833
        %3835 = vrot.lane.b32.xlu0 %v3546, 64
        %v3836 = vpop.permute.xlu0 %3835
        %3837 = vrot.lane.b32.xlu0 %v3548, 64
        %v3838 = vpop.permute.xlu0 %3837
        %v3871 = vadd.f32 %v3466, %v3776
        %v3872 = vadd.f32 %v3468, %v3778
        %v3873 = vadd.f32 %v3471, %v3780
        %v3874 = vadd.f32 %v3473, %v3782
        %v3875 = vadd.f32 %v3476, %v3784
        %v3876 = vadd.f32 %v3478, %v3786
        %v3877 = vadd.f32 %v3481, %v3788
        %v3878 = vadd.f32 %v3483, %v3790
        %v3879 = vadd.f32 %v3486, %v3792
        %v3880 = vadd.f32 %v3488, %v3794
        %v3881 = vadd.f32 %v3491, %v3796
        %v3882 = vadd.f32 %v3493, %v3798
        %v3883 = vadd.f32 %v3496, %v3800
        %v3884 = vadd.f32 %v3498, %v3802
        %v3885 = vadd.f32 %v3501, %v3804
        %v3886 = vadd.f32 %v3503, %v3806
        %v3887 = vadd.f32 %v3506, %v3808
        %v3888 = vadd.f32 %v3508, %v3810
        %v3889 = vadd.f32 %v3511, %v3812
        %v3890 = vadd.f32 %v3513, %v3814
        %v3891 = vadd.f32 %v3516, %v3816
        %v3892 = vadd.f32 %v3518, %v3818
        %v3893 = vadd.f32 %v3521, %v3820
        %v3894 = vadd.f32 %v3523, %v3822
        %v3895 = vadd.f32 %v3526, %v3824
        %v3896 = vadd.f32 %v3528, %v3826
        %v3897 = vadd.f32 %v3531, %v3828
        %v3898 = vadd.f32 %v3533, %v3830
        %v3899 = vadd.f32 %v3536, %v3832
        %v3900 = vadd.f32 %v3538, %v3834
        %v3901 = vadd.f32 %v3541, %v3836
        %v3902 = vadd.f32 %v3543, %v3838
        %v3903 = vadd.f32 %v3871, %v3664
        %v3904 = vadd.f32 %v3872, %v3666
        %v3905 = vadd.f32 %v3873, %v3669
        %v3906 = vadd.f32 %v3874, %v3671
        %v3907 = vadd.f32 %v3875, %v3674
        %v3908 = vadd.f32 %v3876, %v3676
        %v3909 = vadd.f32 %v3877, %v3679
        %v3910 = vadd.f32 %v3878, %v3681
        %v3911 = vadd.f32 %v3879, %v3684
        %v3912 = vadd.f32 %v3880, %v3686
        %v3913 = vadd.f32 %v3881, %v3689
        %v3914 = vadd.f32 %v3882, %v3691
        %v3915 = vadd.f32 %v3883, %v3694
        %v3916 = vadd.f32 %v3884, %v3696
        %v3917 = vadd.f32 %v3885, %v3699
        %v3918 = vadd.f32 %v3886, %v3701
        %v3919 = vadd.f32 %v3887, %v3704
        %v3920 = vadd.f32 %v3888, %v3706
        %v3921 = vadd.f32 %v3889, %v3709
        %v3922 = vadd.f32 %v3890, %v3711
        %v3923 = vadd.f32 %v3891, %v3714
        %v3924 = vadd.f32 %v3892, %v3716
        %v3925 = vadd.f32 %v3893, %v3719
        %v3926 = vadd.f32 %v3894, %v3721
        %v3927 = vadd.f32 %v3895, %v3724
        %v3928 = vadd.f32 %v3896, %v3726
        %v3929 = vadd.f32 %v3897, %v3729
        %v3930 = vadd.f32 %v3898, %v3731
        %v3931 = vadd.f32 %v3899, %v3734
        %v3932 = vadd.f32 %v3900, %v3736
        %v3933 = vadd.f32 %v3901, %v3739
        %v3934 = vadd.f32 %v3902, %v3741
        %v3935 = vmax.f32 %v3903, 0.0
        %v3936 = vmax.f32 %v3904, 0.0
        %v3937 = vmax.f32 %v3905, 0.0
        %v3938 = vmax.f32 %v3906, 0.0
        %v3939 = vmax.f32 %v3907, 0.0
        %v3940 = vmax.f32 %v3908, 0.0
        %v3941 = vmax.f32 %v3909, 0.0
        %v3942 = vmax.f32 %v3910, 0.0
        %v3943 = vmax.f32 %v3911, 0.0
        %v3944 = vmax.f32 %v3912, 0.0
        %v3945 = vmax.f32 %v3913, 0.0
        %v3946 = vmax.f32 %v3914, 0.0
        %v3947 = vmax.f32 %v3915, 0.0
        %v3948 = vmax.f32 %v3916, 0.0
        %v3949 = vmax.f32 %v3917, 0.0
        %v3950 = vmax.f32 %v3918, 0.0
        %v3951 = vmax.f32 %v3919, 0.0
        %v3952 = vmax.f32 %v3920, 0.0
        %v3953 = vmax.f32 %v3921, 0.0
        %v3954 = vmax.f32 %v3922, 0.0
        %v3955 = vmax.f32 %v3923, 0.0
        %v3956 = vmax.f32 %v3924, 0.0
        %v3957 = vmax.f32 %v3925, 0.0
        %v3958 = vmax.f32 %v3926, 0.0
        %v3959 = vmax.f32 %v3927, 0.0
        %v3960 = vmax.f32 %v3928, 0.0
        %v3961 = vmax.f32 %v3929, 0.0
        %v3962 = vmax.f32 %v3930, 0.0
        %v3963 = vmax.f32 %v3931, 0.0
        %v3964 = vmax.f32 %v3932, 0.0
        %v3965 = vmax.f32 %v3933, 0.0
        %v3966 = vmax.f32 %v3934, 0.0
        %v3967 = vpack.c.bf16 %v3935, %v3935
        %v3968 = vpack.c.bf16 %v3936, %v3936
        %v3969 = vpack.c.bf16 %v3937, %v3937
        %v3970 = vpack.c.bf16 %v3938, %v3938
        %v3971 = vpack.c.bf16 %v3939, %v3939
        %v3972 = vpack.c.bf16 %v3940, %v3940
        %v3973 = vpack.c.bf16 %v3941, %v3941
        %v3974 = vpack.c.bf16 %v3942, %v3942
        %v3975 = vpack.c.bf16 %v3943, %v3943
        %v3976 = vpack.c.bf16 %v3944, %v3944
        %v3977 = vpack.c.bf16 %v3945, %v3945
        %v3978 = vpack.c.bf16 %v3946, %v3946
        %v3979 = vpack.c.bf16 %v3947, %v3947
        %v3980 = vpack.c.bf16 %v3948, %v3948
        %v3981 = vpack.c.bf16 %v3949, %v3949
        %v3982 = vpack.c.bf16 %v3950, %v3950
        %v3983 = vpack.c.bf16 %v3951, %v3951
        %v3984 = vpack.c.bf16 %v3952, %v3952
        %v3985 = vpack.c.bf16 %v3953, %v3953
        %v3986 = vpack.c.bf16 %v3954, %v3954
        %v3987 = vpack.c.bf16 %v3955, %v3955
        %v3988 = vpack.c.bf16 %v3956, %v3956
        %v3989 = vpack.c.bf16 %v3957, %v3957
        %v3990 = vpack.c.bf16 %v3958, %v3958
        %v3991 = vpack.c.bf16 %v3959, %v3959
        %v3992 = vpack.c.bf16 %v3960, %v3960
        %v3993 = vpack.c.bf16 %v3961, %v3961
        %v3994 = vpack.c.bf16 %v3962, %v3962
        %v3995 = vpack.c.bf16 %v3963, %v3963
        %v3996 = vpack.c.bf16 %v3964, %v3964
        %v3997 = vpack.c.bf16 %v3965, %v3965
        %v3998 = vpack.c.bf16 %v3966, %v3966
        %v4000 = vshrl.u32 %v3967, 16
        %v4002 = vrot.slane %v4000, 7
        %v4003 = vshll.u32 %v3967, 16
        %v4005 = vor.u32 %v4002, %v4003
        %v4006 = vrot.slane %v4002, 4
        %v4008 = vshrl.u32 %v3968, 16
        %v4010 = vrot.slane %v4008, 7
        %v4011 = vshll.u32 %v3968, 16
        %v4013 = vor.u32 %v4010, %v4011
        %v4014 = vsel %vm321, %v4006, %v4013
        %v4015 = vrot.slane %v4010, 4
        %v4017 = vshrl.u32 %v3969, 16
        %v4019 = vrot.slane %v4017, 7
        %v4020 = vshll.u32 %v3969, 16
        %v4022 = vor.u32 %v4019, %v4020
        %v4023 = vrot.slane %v4019, 4
        %v4025 = vshrl.u32 %v3970, 16
        %v4027 = vrot.slane %v4025, 7
        %v4028 = vshll.u32 %v3970, 16
        %v4030 = vor.u32 %v4027, %v4028
        %v4031 = vsel %vm321, %v4023, %v4030
        %v4032 = vrot.slane %v4027, 4
        %v4034 = vshrl.u32 %v3971, 16
        %v4036 = vrot.slane %v4034, 7
        %v4037 = vshll.u32 %v3971, 16
        %v4039 = vor.u32 %v4036, %v4037
        %v4040 = vrot.slane %v4036, 4
        %v4042 = vshrl.u32 %v3972, 16
        %v4044 = vrot.slane %v4042, 7
        %v4045 = vshll.u32 %v3972, 16
        %v4047 = vor.u32 %v4044, %v4045
        %v4048 = vsel %vm321, %v4040, %v4047
        %v4049 = vrot.slane %v4044, 4
        %v4051 = vshrl.u32 %v3973, 16
        %v4053 = vrot.slane %v4051, 7
        %v4054 = vshll.u32 %v3973, 16
        %v4056 = vor.u32 %v4053, %v4054
        %v4057 = vrot.slane %v4053, 4
        %v4059 = vshrl.u32 %v3974, 16
        %v4061 = vrot.slane %v4059, 7
        %v4062 = vshll.u32 %v3974, 16
        %v4064 = vor.u32 %v4061, %v4062
        %v4065 = vsel %vm321, %v4057, %v4064
        %v4066 = vrot.slane %v4061, 4
        %v4068 = vshrl.u32 %v3975, 16
        %v4070 = vrot.slane %v4068, 7
        %v4071 = vshll.u32 %v3975, 16
        %v4073 = vor.u32 %v4070, %v4071
        %v4074 = vrot.slane %v4070, 4
        %v4076 = vshrl.u32 %v3976, 16
        %v4078 = vrot.slane %v4076, 7
        %v4079 = vshll.u32 %v3976, 16
        %v4081 = vor.u32 %v4078, %v4079
        %v4082 = vsel %vm321, %v4074, %v4081
        %v4083 = vrot.slane %v4078, 4
        %v4085 = vshrl.u32 %v3977, 16
        %v4087 = vrot.slane %v4085, 7
        %v4088 = vshll.u32 %v3977, 16
        %v4090 = vor.u32 %v4087, %v4088
        %v4091 = vrot.slane %v4087, 4
        %v4093 = vshrl.u32 %v3978, 16
        %v4095 = vrot.slane %v4093, 7
        %v4096 = vshll.u32 %v3978, 16
        %v4098 = vor.u32 %v4095, %v4096
        %v4099 = vsel %vm321, %v4091, %v4098
        %v4100 = vrot.slane %v4095, 4
        %v4102 = vshrl.u32 %v3979, 16
        %v4104 = vrot.slane %v4102, 7
        %v4105 = vshll.u32 %v3979, 16
        %v4107 = vor.u32 %v4104, %v4105
        %v4108 = vrot.slane %v4104, 4
        %v4110 = vshrl.u32 %v3980, 16
        %v4112 = vrot.slane %v4110, 7
        %v4113 = vshll.u32 %v3980, 16
        %v4115 = vor.u32 %v4112, %v4113
        %v4116 = vsel %vm321, %v4108, %v4115
        %v4117 = vrot.slane %v4112, 4
        %v4119 = vshrl.u32 %v3981, 16
        %v4121 = vrot.slane %v4119, 7
        %v4122 = vshll.u32 %v3981, 16
        %v4124 = vor.u32 %v4121, %v4122
        %v4125 = vrot.slane %v4121, 4
        %v4127 = vshrl.u32 %v3982, 16
        %v4129 = vrot.slane %v4127, 7
        %v4130 = vshll.u32 %v3982, 16
        %v4132 = vor.u32 %v4129, %v4130
        %v4133 = vsel %vm321, %v4125, %v4132
        %v4134 = vrot.slane %v4129, 4
        %v4136 = vshrl.u32 %v3983, 16
        %v4138 = vrot.slane %v4136, 7
        %v4139 = vshll.u32 %v3983, 16
        %v4141 = vor.u32 %v4138, %v4139
        %v4142 = vrot.slane %v4138, 4
        %v4144 = vshrl.u32 %v3984, 16
        %v4146 = vrot.slane %v4144, 7
        %v4147 = vshll.u32 %v3984, 16
        %v4149 = vor.u32 %v4146, %v4147
        %v4150 = vsel %vm321, %v4142, %v4149
        %v4151 = vrot.slane %v4146, 4
        %v4153 = vshrl.u32 %v3985, 16
        %v4155 = vrot.slane %v4153, 7
        %v4156 = vshll.u32 %v3985, 16
        %v4158 = vor.u32 %v4155, %v4156
        %v4159 = vrot.slane %v4155, 4
        %v4161 = vshrl.u32 %v3986, 16
        %v4163 = vrot.slane %v4161, 7
        %v4164 = vshll.u32 %v3986, 16
        %v4166 = vor.u32 %v4163, %v4164
        %v4167 = vsel %vm321, %v4159, %v4166
        %v4168 = vrot.slane %v4163, 4
        %v4170 = vshrl.u32 %v3987, 16
        %v4172 = vrot.slane %v4170, 7
        %v4173 = vshll.u32 %v3987, 16
        %v4175 = vor.u32 %v4172, %v4173
        %v4176 = vrot.slane %v4172, 4
        %v4178 = vshrl.u32 %v3988, 16
        %v4180 = vrot.slane %v4178, 7
        %v4181 = vshll.u32 %v3988, 16
        %v4183 = vor.u32 %v4180, %v4181
        %v4184 = vsel %vm321, %v4176, %v4183
        %v4185 = vrot.slane %v4180, 4
        %v4187 = vshrl.u32 %v3989, 16
        %v4189 = vrot.slane %v4187, 7
        %v4190 = vshll.u32 %v3989, 16
        %v4192 = vor.u32 %v4189, %v4190
        %v4193 = vrot.slane %v4189, 4
        %v4195 = vshrl.u32 %v3990, 16
        %v4197 = vrot.slane %v4195, 7
        %v4198 = vshll.u32 %v3990, 16
        %v4200 = vor.u32 %v4197, %v4198
        %v4201 = vsel %vm321, %v4193, %v4200
        %v4202 = vrot.slane %v4197, 4
        %v4204 = vshrl.u32 %v3991, 16
        %v4206 = vrot.slane %v4204, 7
        %v4207 = vshll.u32 %v3991, 16
        %v4209 = vor.u32 %v4206, %v4207
        %v4210 = vrot.slane %v4206, 4
        %v4212 = vshrl.u32 %v3992, 16
        %v4214 = vrot.slane %v4212, 7
        %v4215 = vshll.u32 %v3992, 16
        %v4217 = vor.u32 %v4214, %v4215
        %v4218 = vsel %vm321, %v4210, %v4217
        %v4219 = vrot.slane %v4214, 4
        %v4221 = vshrl.u32 %v3993, 16
        %v4223 = vrot.slane %v4221, 7
        %v4224 = vshll.u32 %v3993, 16
        %v4226 = vor.u32 %v4223, %v4224
        %v4227 = vrot.slane %v4223, 4
        %v4229 = vshrl.u32 %v3994, 16
        %v4231 = vrot.slane %v4229, 7
        %v4232 = vshll.u32 %v3994, 16
        %v4234 = vor.u32 %v4231, %v4232
        %v4235 = vsel %vm321, %v4227, %v4234
        %v4236 = vrot.slane %v4231, 4
        %v4238 = vshrl.u32 %v3995, 16
        %v4240 = vrot.slane %v4238, 7
        %v4241 = vshll.u32 %v3995, 16
        %v4243 = vor.u32 %v4240, %v4241
        %v4244 = vrot.slane %v4240, 4
        %v4246 = vshrl.u32 %v3996, 16
        %v4248 = vrot.slane %v4246, 7
        %v4249 = vshll.u32 %v3996, 16
        %v4251 = vor.u32 %v4248, %v4249
        %v4252 = vsel %vm321, %v4244, %v4251
        %v4253 = vrot.slane %v4248, 4
        %v4255 = vshrl.u32 %v3997, 16
        %v4257 = vrot.slane %v4255, 7
        %v4258 = vshll.u32 %v3997, 16
        %v4260 = vor.u32 %v4257, %v4258
        %v4261 = vrot.slane %v4257, 4
        %v4263 = vshrl.u32 %v3998, 16
        %v4265 = vrot.slane %v4263, 7
        %v4266 = vshll.u32 %v3998, 16
        %v4268 = vor.u32 %v4265, %v4266
        %v4269 = vsel %vm321, %v4261, %v4268
        %v4270 = vrot.slane %v4265, 4
        %v4319 = vld [vmem:[%s642] sm:$0xf]
        %v4320 = vsel %vm645, %v4005, %v4319
        %4321 = vst [vmem:[%s642] sm:$0xf] %v4320
        %4322 = vst.msk [vmem:[%s642 + $0x4] sm:$0xf] %vm145, %v4014
        %v4323 = vld [vmem:[%s642 + $0x8] sm:$0x1]
        %v4324 = vsel %vm651, %v4015, %v4323
        %4325 = vst [vmem:[%s642 + $0x8] sm:$0x1] %v4324
        %v4326 = vld [vmem:[%s642 + $0xc] sm:$0xf]
        %v4327 = vsel %vm645, %v4022, %v4326
        %4328 = vst [vmem:[%s642 + $0xc] sm:$0xf] %v4327
        %4329 = vst.msk [vmem:[%s642 + $0x10] sm:$0xf] %vm145, %v4031
        %v4330 = vld [vmem:[%s642 + $0x14] sm:$0x1]
        %v4331 = vsel %vm651, %v4032, %v4330
        %4332 = vst [vmem:[%s642 + $0x14] sm:$0x1] %v4331
        %v4333 = vld [vmem:[%s642 + $0x18] sm:$0xf]
        %v4334 = vsel %vm645, %v4039, %v4333
        %4335 = vst [vmem:[%s642 + $0x18] sm:$0xf] %v4334
        %4336 = vst.msk [vmem:[%s642 + $0x1c] sm:$0xf] %vm145, %v4048
        %v4337 = vld [vmem:[%s642 + $0x20] sm:$0x1]
        %v4338 = vsel %vm651, %v4049, %v4337
        %4339 = vst [vmem:[%s642 + $0x20] sm:$0x1] %v4338
        %v4340 = vld [vmem:[%s642 + $0x24] sm:$0xf]
        %v4341 = vsel %vm645, %v4056, %v4340
        %4342 = vst [vmem:[%s642 + $0x24] sm:$0xf] %v4341
        %4343 = vst.msk [vmem:[%s642 + $0x28] sm:$0xf] %vm145, %v4065
        %v4344 = vld [vmem:[%s642 + $0x2c] sm:$0x1]
        %v4345 = vsel %vm651, %v4066, %v4344
        %4346 = vst [vmem:[%s642 + $0x2c] sm:$0x1] %v4345
        %v4347 = vld [vmem:[%s642 + $0x30] sm:$0xf]
        %v4348 = vsel %vm645, %v4073, %v4347
        %4349 = vst [vmem:[%s642 + $0x30] sm:$0xf] %v4348
        %4350 = vst.msk [vmem:[%s642 + $0x34] sm:$0xf] %vm145, %v4082
        %v4351 = vld [vmem:[%s642 + $0x38] sm:$0x1]
        %v4352 = vsel %vm651, %v4083, %v4351
        %4353 = vst [vmem:[%s642 + $0x38] sm:$0x1] %v4352
        %v4354 = vld [vmem:[%s642 + $0x3c] sm:$0xf]
        %v4355 = vsel %vm645, %v4090, %v4354
        %4356 = vst [vmem:[%s642 + $0x3c] sm:$0xf] %v4355
        %4357 = vst.msk [vmem:[%s642 + $0x40] sm:$0xf] %vm145, %v4099
        %v4358 = vld [vmem:[%s642 + $0x44] sm:$0x1]
        %v4359 = vsel %vm651, %v4100, %v4358
        %4360 = vst [vmem:[%s642 + $0x44] sm:$0x1] %v4359
        %v4361 = vld [vmem:[%s642 + $0x48] sm:$0xf]
        %v4362 = vsel %vm645, %v4107, %v4361
        %4363 = vst [vmem:[%s642 + $0x48] sm:$0xf] %v4362
        %4364 = vst.msk [vmem:[%s642 + $0x4c] sm:$0xf] %vm145, %v4116
        %v4365 = vld [vmem:[%s642 + $0x50] sm:$0x1]
        %v4366 = vsel %vm651, %v4117, %v4365
        %4367 = vst [vmem:[%s642 + $0x50] sm:$0x1] %v4366
        %v4368 = vld [vmem:[%s642 + $0x54] sm:$0xf]
        %v4369 = vsel %vm645, %v4124, %v4368
        %4370 = vst [vmem:[%s642 + $0x54] sm:$0xf] %v4369
        %4371 = vst.msk [vmem:[%s642 + $0x58] sm:$0xf] %vm145, %v4133
        %v4372 = vld [vmem:[%s642 + $0x5c] sm:$0x1]
        %v4373 = vsel %vm651, %v4134, %v4372
        %4374 = vst [vmem:[%s642 + $0x5c] sm:$0x1] %v4373
        %v4375 = vld [vmem:[%s642 + $0x60] sm:$0xf]
        %v4376 = vsel %vm645, %v4141, %v4375
        %4377 = vst [vmem:[%s642 + $0x60] sm:$0xf] %v4376
        %4378 = vst.msk [vmem:[%s642 + $0x64] sm:$0xf] %vm145, %v4150
        %v4379 = vld [vmem:[%s642 + $0x68] sm:$0x1]
        %v4380 = vsel %vm651, %v4151, %v4379
        %4381 = vst [vmem:[%s642 + $0x68] sm:$0x1] %v4380
        %v4382 = vld [vmem:[%s642 + $0x6c] sm:$0xf]
        %v4383 = vsel %vm645, %v4158, %v4382
        %4384 = vst [vmem:[%s642 + $0x6c] sm:$0xf] %v4383
        %4385 = vst.msk [vmem:[%s642 + $0x70] sm:$0xf] %vm145, %v4167
        %v4386 = vld [vmem:[%s642 + $0x74] sm:$0x1]
        %v4387 = vsel %vm651, %v4168, %v4386
        %4388 = vst [vmem:[%s642 + $0x74] sm:$0x1] %v4387
        %v4389 = vld [vmem:[%s642 + $0x78] sm:$0xf]
        %v4390 = vsel %vm645, %v4175, %v4389
        %4391 = vst [vmem:[%s642 + $0x78] sm:$0xf] %v4390
        %4392 = vst.msk [vmem:[%s642 + $0x7c] sm:$0xf] %vm145, %v4184
        %v4393 = vld [vmem:[%s642 + $0x80] sm:$0x1]
        %v4394 = vsel %vm651, %v4185, %v4393
        %4395 = vst [vmem:[%s642 + $0x80] sm:$0x1] %v4394
        %v4396 = vld [vmem:[%s642 + $0x84] sm:$0xf]
        %v4397 = vsel %vm645, %v4192, %v4396
        %4398 = vst [vmem:[%s642 + $0x84] sm:$0xf] %v4397
        %4399 = vst.msk [vmem:[%s642 + $0x88] sm:$0xf] %vm145, %v4201
        %v4400 = vld [vmem:[%s642 + $0x8c] sm:$0x1]
        %v4401 = vsel %vm651, %v4202, %v4400
        %4402 = vst [vmem:[%s642 + $0x8c] sm:$0x1] %v4401
        %v4403 = vld [vmem:[%s642 + $0x90] sm:$0xf]
        %v4404 = vsel %vm645, %v4209, %v4403
        %4405 = vst [vmem:[%s642 + $0x90] sm:$0xf] %v4404
        %4406 = vst.msk [vmem:[%s642 + $0x94] sm:$0xf] %vm145, %v4218
        %v4407 = vld [vmem:[%s642 + $0x98] sm:$0x1]
        %v4408 = vsel %vm651, %v4219, %v4407
        %4409 = vst [vmem:[%s642 + $0x98] sm:$0x1] %v4408
        %v4410 = vld [vmem:[%s642 + $0x9c] sm:$0xf]
        %v4411 = vsel %vm645, %v4226, %v4410
        %4412 = vst [vmem:[%s642 + $0x9c] sm:$0xf] %v4411
        %4413 = vst.msk [vmem:[%s642 + $0xa0] sm:$0xf] %vm145, %v4235
        %v4414 = vld [vmem:[%s642 + $0xa4] sm:$0x1]
        %v4415 = vsel %vm651, %v4236, %v4414
        %4416 = vst [vmem:[%s642 + $0xa4] sm:$0x1] %v4415
        %v4417 = vld [vmem:[%s642 + $0xa8] sm:$0xf]
        %v4418 = vsel %vm645, %v4243, %v4417
        %4419 = vst [vmem:[%s642 + $0xa8] sm:$0xf] %v4418
        %4420 = vst.msk [vmem:[%s642 + $0xac] sm:$0xf] %vm145, %v4252
        %v4421 = vld [vmem:[%s642 + $0xb0] sm:$0x1]
        %v4422 = vsel %vm651, %v4253, %v4421
        %4423 = vst [vmem:[%s642 + $0xb0] sm:$0x1] %v4422
        %v4424 = vld [vmem:[%s642 + $0xb4] sm:$0xf]
        %v4425 = vsel %vm645, %v4260, %v4424
        %4426 = vst [vmem:[%s642 + $0xb4] sm:$0xf] %v4425
        %4427 = vst.msk [vmem:[%s642 + $0xb8] sm:$0xf] %vm145, %v4269
        %v4428 = vld [vmem:[%s642 + $0xbc] sm:$0x1]
        %v4429 = vsel %vm651, %v4270, %v4428
        %4430 = vst [vmem:[%s642 + $0xbc] sm:$0x1] %v4429
        %s4431 = sadd.s32 %s2598, 2
        %s4432 = smul.u32 %s4431, 48
        %s4433 = smul.addr %s4432, 4
        %s4434 = scalar_lea.vmem %s1, %s4433
        %v4435 = vld [vmem:[%s4434] sm:$0xff]
        %v4436 = vld [vmem:[%s4434 + $0x8] sm:$0xff]
        %v4437 = vld [vmem:[%s4434 + $0x10] sm:$0xff]
        %v4438 = vld [vmem:[%s4434 + $0x18] sm:$0xff]
        %v4439 = vld [vmem:[%s4434 + $0x20] sm:$0xff]
        %v4440 = vld [vmem:[%s4434 + $0x28] sm:$0xff]
        %v4441 = vld [vmem:[%s4434 + $0x30] sm:$0xff]
        %v4442 = vld [vmem:[%s4434 + $0x38] sm:$0xff]
        %v4443 = vld [vmem:[%s4434 + $0x40] sm:$0xff]
        %v4444 = vld [vmem:[%s4434 + $0x48] sm:$0xff]
        %v4445 = vld [vmem:[%s4434 + $0x50] sm:$0xff]
        %v4446 = vld [vmem:[%s4434 + $0x58] sm:$0xff]
        %v4447 = vld [vmem:[%s4434 + $0x60] sm:$0xff]
        %v4448 = vld [vmem:[%s4434 + $0x68] sm:$0xff]
        %v4449 = vld [vmem:[%s4434 + $0x70] sm:$0xff]
        %v4450 = vld [vmem:[%s4434 + $0x78] sm:$0xff]
        %v4451 = vld [vmem:[%s4434 + $0x80] sm:$0xff]
        %v4452 = vld [vmem:[%s4434 + $0x88] sm:$0xff]
        %v4453 = vld [vmem:[%s4434 + $0x90] sm:$0xff]
        %v4454 = vld [vmem:[%s4434 + $0x98] sm:$0xff]
        %v4455 = vld [vmem:[%s4434 + $0xa0] sm:$0xff]
        %v4456 = vld [vmem:[%s4434 + $0xa8] sm:$0xff]
        %v4457 = vld [vmem:[%s4434 + $0xb0] sm:$0xff]
        %v4458 = vld [vmem:[%s4434 + $0xb8] sm:$0xff]
        %v4459 = vld [vmem:[#allocation2] sm:$0xf]
        %v4460 = vld [vmem:[#allocation2 + $0x4] sm:$0xf]
        %v4461 = vld [vmem:[#allocation2 + $0x8] sm:$0x1]
        %v4462 = vld [vmem:[#allocation2 + $0xc] sm:$0xf]
        %v4463 = vld [vmem:[#allocation2 + $0x10] sm:$0xf]
        %v4464 = vld [vmem:[#allocation2 + $0x14] sm:$0x1]
        %v4465 = vld [vmem:[#allocation2 + $0x18] sm:$0xf]
        %v4466 = vld [vmem:[#allocation2 + $0x1c] sm:$0xf]
        %v4467 = vld [vmem:[#allocation2 + $0x20] sm:$0x1]
        %v4468 = vld [vmem:[#allocation2 + $0x24] sm:$0xf]
        %v4469 = vld [vmem:[#allocation2 + $0x28] sm:$0xf]
        %v4470 = vld [vmem:[#allocation2 + $0x2c] sm:$0x1]
        %v4471 = vld [vmem:[#allocation2 + $0x30] sm:$0xf]
        %v4472 = vld [vmem:[#allocation2 + $0x34] sm:$0xf]
        %v4473 = vld [vmem:[#allocation2 + $0x38] sm:$0x1]
        %v4474 = vld [vmem:[#allocation2 + $0x3c] sm:$0xf]
        %v4475 = vld [vmem:[#allocation2 + $0x40] sm:$0xf]
        %v4476 = vld [vmem:[#allocation2 + $0x44] sm:$0x1]
        %v4477 = vld [vmem:[#allocation2 + $0x48] sm:$0xf]
        %v4478 = vld [vmem:[#allocation2 + $0x4c] sm:$0xf]
        %v4479 = vld [vmem:[#allocation2 + $0x50] sm:$0x1]
        %v4480 = vld [vmem:[#allocation2 + $0x54] sm:$0xf]
        %v4481 = vld [vmem:[#allocation2 + $0x58] sm:$0xf]
        %v4482 = vld [vmem:[#allocation2 + $0x5c] sm:$0x1]
        %v4483 = vld [vmem:[#allocation2 + $0x60] sm:$0xf]
        %v4484 = vld [vmem:[#allocation2 + $0x64] sm:$0xf]
        %v4485 = vld [vmem:[#allocation2 + $0x68] sm:$0x1]
        %v4486 = vld [vmem:[#allocation2 + $0x6c] sm:$0xf]
        %v4487 = vld [vmem:[#allocation2 + $0x70] sm:$0xf]
        %v4488 = vld [vmem:[#allocation2 + $0x74] sm:$0x1]
        %v4489 = vld [vmem:[#allocation2 + $0x78] sm:$0xf]
        %v4490 = vld [vmem:[#allocation2 + $0x7c] sm:$0xf]
        %v4491 = vld [vmem:[#allocation2 + $0x80] sm:$0x1]
        %v4492 = vld [vmem:[#allocation2 + $0x84] sm:$0xf]
        %v4493 = vld [vmem:[#allocation2 + $0x88] sm:$0xf]
        %v4494 = vld [vmem:[#allocation2 + $0x8c] sm:$0x1]
        %v4495 = vld [vmem:[#allocation2 + $0x90] sm:$0xf]
        %v4496 = vld [vmem:[#allocation2 + $0x94] sm:$0xf]
        %v4497 = vld [vmem:[#allocation2 + $0x98] sm:$0x1]
        %v4498 = vld [vmem:[#allocation2 + $0x9c] sm:$0xf]
        %v4499 = vld [vmem:[#allocation2 + $0xa0] sm:$0xf]
        %v4500 = vld [vmem:[#allocation2 + $0xa4] sm:$0x1]
        %v4501 = vld [vmem:[#allocation2 + $0xa8] sm:$0xf]
        %v4502 = vld [vmem:[#allocation2 + $0xac] sm:$0xf]
        %v4503 = vld [vmem:[#allocation2 + $0xb0] sm:$0x1]
        %v4504 = vld [vmem:[#allocation2 + $0xb4] sm:$0xf]
        %v4505 = vld [vmem:[#allocation2 + $0xb8] sm:$0xf]
        %v4506 = vld [vmem:[#allocation2 + $0xbc] sm:$0x1]
        %v4507 = vld [vmem:[#allocation2 + $0xc0] sm:$0xf]
        %v4508 = vld [vmem:[#allocation2 + $0xc4] sm:$0xf]
        %v4509 = vld [vmem:[#allocation2 + $0xc8] sm:$0x1]
        %v4510 = vld [vmem:[#allocation2 + $0xcc] sm:$0xf]
        %v4511 = vld [vmem:[#allocation2 + $0xd0] sm:$0xf]
        %v4512 = vld [vmem:[#allocation2 + $0xd4] sm:$0x1]
        %v4549 = vunpack.c.l.b16 %v4459
        %v4550 = vunpack.c.l.b16 %v4460
        %v4551 = vunpack.c.l.b16 %v4462
        %v4552 = vunpack.c.l.b16 %v4463
        %v4553 = vunpack.c.l.b16 %v4465
        %v4554 = vunpack.c.l.b16 %v4466
        %v4555 = vunpack.c.l.b16 %v4468
        %v4556 = vunpack.c.l.b16 %v4469
        %v4557 = vunpack.c.l.b16 %v4471
        %v4558 = vunpack.c.l.b16 %v4472
        %v4559 = vunpack.c.l.b16 %v4474
        %v4560 = vunpack.c.l.b16 %v4475
        %v4561 = vunpack.c.l.b16 %v4477
        %v4562 = vunpack.c.l.b16 %v4478
        %v4563 = vunpack.c.l.b16 %v4480
        %v4564 = vunpack.c.l.b16 %v4481
        %v4565 = vunpack.c.l.b16 %v4483
        %v4566 = vunpack.c.l.b16 %v4484
        %v4567 = vunpack.c.l.b16 %v4486
        %v4568 = vunpack.c.l.b16 %v4487
        %v4569 = vunpack.c.l.b16 %v4489
        %v4570 = vunpack.c.l.b16 %v4490
        %v4571 = vunpack.c.l.b16 %v4492
        %v4572 = vunpack.c.l.b16 %v4493
        %v4573 = vunpack.c.l.b16 %v4495
        %v4574 = vunpack.c.l.b16 %v4496
        %v4575 = vunpack.c.l.b16 %v4498
        %v4576 = vunpack.c.l.b16 %v4499
        %v4577 = vunpack.c.l.b16 %v4501
        %v4578 = vunpack.c.l.b16 %v4502
        %v4579 = vunpack.c.l.b16 %v4504
        %v4580 = vunpack.c.l.b16 %v4505
        %v4581 = vunpack.c.l.b16 %v4507
        %v4582 = vunpack.c.l.b16 %v4508
        %v4583 = vunpack.c.l.b16 %v4510
        %v4584 = vunpack.c.l.b16 %v4511
        %v4585 = vpack.c.b16 %v4550, %v4549
        %v4586 = vpack.c.b16 %v4552, %v4551
        %v4587 = vpack.c.b16 %v4554, %v4553
        %v4588 = vpack.c.b16 %v4556, %v4555
        %v4589 = vpack.c.b16 %v4558, %v4557
        %v4590 = vpack.c.b16 %v4560, %v4559
        %v4591 = vpack.c.b16 %v4562, %v4561
        %v4592 = vpack.c.b16 %v4564, %v4563
        %v4593 = vpack.c.b16 %v4566, %v4565
        %v4594 = vpack.c.b16 %v4568, %v4567
        %v4595 = vpack.c.b16 %v4570, %v4569
        %v4596 = vpack.c.b16 %v4572, %v4571
        %v4597 = vpack.c.b16 %v4574, %v4573
        %v4598 = vpack.c.b16 %v4576, %v4575
        %v4599 = vpack.c.b16 %v4578, %v4577
        %v4600 = vpack.c.b16 %v4580, %v4579
        %v4601 = vpack.c.b16 %v4582, %v4581
        %v4602 = vpack.c.b16 %v4584, %v4583
        %v4621 = vunpack.c.l.b16 %v4461
        %v4622 = vunpack.c.l.b16 %v4464
        %v4623 = vunpack.c.l.b16 %v4467
        %v4624 = vunpack.c.l.b16 %v4470
        %v4625 = vunpack.c.l.b16 %v4473
        %v4626 = vunpack.c.l.b16 %v4476
        %v4627 = vunpack.c.l.b16 %v4479
        %v4628 = vunpack.c.l.b16 %v4482
        %v4629 = vunpack.c.l.b16 %v4485
        %v4630 = vunpack.c.l.b16 %v4488
        %v4631 = vunpack.c.l.b16 %v4491
        %v4632 = vunpack.c.l.b16 %v4494
        %v4633 = vunpack.c.l.b16 %v4497
        %v4634 = vunpack.c.l.b16 %v4500
        %v4635 = vunpack.c.l.b16 %v4503
        %v4636 = vunpack.c.l.b16 %v4506
        %v4637 = vunpack.c.l.b16 %v4509
        %v4638 = vunpack.c.l.b16 %v4512
        %v4639 = vpack.c.b16 %v4621, %v4621
        %v4640 = vpack.c.b16 %v4622, %v4622
        %v4641 = vpack.c.b16 %v4623, %v4623
        %v4642 = vpack.c.b16 %v4624, %v4624
        %v4643 = vpack.c.b16 %v4625, %v4625
        %v4644 = vpack.c.b16 %v4626, %v4626
        %v4645 = vpack.c.b16 %v4627, %v4627
        %v4646 = vpack.c.b16 %v4628, %v4628
        %v4647 = vpack.c.b16 %v4629, %v4629
        %v4648 = vpack.c.b16 %v4630, %v4630
        %v4649 = vpack.c.b16 %v4631, %v4631
        %v4650 = vpack.c.b16 %v4632, %v4632
        %v4651 = vpack.c.b16 %v4633, %v4633
        %v4652 = vpack.c.b16 %v4634, %v4634
        %v4653 = vpack.c.b16 %v4635, %v4635
        %v4654 = vpack.c.b16 %v4636, %v4636
        %v4655 = vpack.c.b16 %v4637, %v4637
        %v4656 = vpack.c.b16 %v4638, %v4638
        %v4658 = vshrl.u32 %v4585, 16
        %v4660 = vshll.u32 %v4585, 16
        %v4662 = vrot.slane %v4660, 1
        %v4663 = vor.u32 %v4658, %v4662
        %v4665 = vshll.u32 %v4639, 16
        %v4667 = vrot.slane %v4665, 1
        %v4668 = vsel %vm982, %v4663, %v4667
        %v4670 = vshrl.u32 %v4586, 16
        %v4672 = vshll.u32 %v4586, 16
        %v4674 = vrot.slane %v4672, 1
        %v4675 = vor.u32 %v4670, %v4674
        %v4677 = vshll.u32 %v4640, 16
        %v4679 = vrot.slane %v4677, 1
        %v4680 = vsel %vm982, %v4675, %v4679
        %v4682 = vshrl.u32 %v4587, 16
        %v4684 = vshll.u32 %v4587, 16
        %v4686 = vrot.slane %v4684, 1
        %v4687 = vor.u32 %v4682, %v4686
        %v4689 = vshll.u32 %v4641, 16
        %v4691 = vrot.slane %v4689, 1
        %v4692 = vsel %vm982, %v4687, %v4691
        %v4694 = vshrl.u32 %v4588, 16
        %v4696 = vshll.u32 %v4588, 16
        %v4698 = vrot.slane %v4696, 1
        %v4699 = vor.u32 %v4694, %v4698
        %v4701 = vshll.u32 %v4642, 16
        %v4703 = vrot.slane %v4701, 1
        %v4704 = vsel %vm982, %v4699, %v4703
        %v4706 = vshrl.u32 %v4589, 16
        %v4708 = vshll.u32 %v4589, 16
        %v4710 = vrot.slane %v4708, 1
        %v4711 = vor.u32 %v4706, %v4710
        %v4713 = vshll.u32 %v4643, 16
        %v4715 = vrot.slane %v4713, 1
        %v4716 = vsel %vm982, %v4711, %v4715
        %v4718 = vshrl.u32 %v4590, 16
        %v4720 = vshll.u32 %v4590, 16
        %v4722 = vrot.slane %v4720, 1
        %v4723 = vor.u32 %v4718, %v4722
        %v4725 = vshll.u32 %v4644, 16
        %v4727 = vrot.slane %v4725, 1
        %v4728 = vsel %vm982, %v4723, %v4727
        %v4730 = vshrl.u32 %v4591, 16
        %v4732 = vshll.u32 %v4591, 16
        %v4734 = vrot.slane %v4732, 1
        %v4735 = vor.u32 %v4730, %v4734
        %v4737 = vshll.u32 %v4645, 16
        %v4739 = vrot.slane %v4737, 1
        %v4740 = vsel %vm982, %v4735, %v4739
        %v4742 = vshrl.u32 %v4592, 16
        %v4744 = vshll.u32 %v4592, 16
        %v4746 = vrot.slane %v4744, 1
        %v4747 = vor.u32 %v4742, %v4746
        %v4749 = vshll.u32 %v4646, 16
        %v4751 = vrot.slane %v4749, 1
        %v4752 = vsel %vm982, %v4747, %v4751
        %v4754 = vshrl.u32 %v4593, 16
        %v4756 = vshll.u32 %v4593, 16
        %v4758 = vrot.slane %v4756, 1
        %v4759 = vor.u32 %v4754, %v4758
        %v4761 = vshll.u32 %v4647, 16
        %v4763 = vrot.slane %v4761, 1
        %v4764 = vsel %vm982, %v4759, %v4763
        %v4766 = vshrl.u32 %v4594, 16
        %v4768 = vshll.u32 %v4594, 16
        %v4770 = vrot.slane %v4768, 1
        %v4771 = vor.u32 %v4766, %v4770
        %v4773 = vshll.u32 %v4648, 16
        %v4775 = vrot.slane %v4773, 1
        %v4776 = vsel %vm982, %v4771, %v4775
        %v4778 = vshrl.u32 %v4595, 16
        %v4780 = vshll.u32 %v4595, 16
        %v4782 = vrot.slane %v4780, 1
        %v4783 = vor.u32 %v4778, %v4782
        %v4785 = vshll.u32 %v4649, 16
        %v4787 = vrot.slane %v4785, 1
        %v4788 = vsel %vm982, %v4783, %v4787
        %v4790 = vshrl.u32 %v4596, 16
        %v4792 = vshll.u32 %v4596, 16
        %v4794 = vrot.slane %v4792, 1
        %v4795 = vor.u32 %v4790, %v4794
        %v4797 = vshll.u32 %v4650, 16
        %v4799 = vrot.slane %v4797, 1
        %v4800 = vsel %vm982, %v4795, %v4799
        %v4802 = vshrl.u32 %v4597, 16
        %v4804 = vshll.u32 %v4597, 16
        %v4806 = vrot.slane %v4804, 1
        %v4807 = vor.u32 %v4802, %v4806
        %v4809 = vshll.u32 %v4651, 16
        %v4811 = vrot.slane %v4809, 1
        %v4812 = vsel %vm982, %v4807, %v4811
        %v4814 = vshrl.u32 %v4598, 16
        %v4816 = vshll.u32 %v4598, 16
        %v4818 = vrot.slane %v4816, 1
        %v4819 = vor.u32 %v4814, %v4818
        %v4821 = vshll.u32 %v4652, 16
        %v4823 = vrot.slane %v4821, 1
        %v4824 = vsel %vm982, %v4819, %v4823
        %v4826 = vshrl.u32 %v4599, 16
        %v4828 = vshll.u32 %v4599, 16
        %v4830 = vrot.slane %v4828, 1
        %v4831 = vor.u32 %v4826, %v4830
        %v4833 = vshll.u32 %v4653, 16
        %v4835 = vrot.slane %v4833, 1
        %v4836 = vsel %vm982, %v4831, %v4835
        %v4838 = vshrl.u32 %v4600, 16
        %v4840 = vshll.u32 %v4600, 16
        %v4842 = vrot.slane %v4840, 1
        %v4843 = vor.u32 %v4838, %v4842
        %v4845 = vshll.u32 %v4654, 16
        %v4847 = vrot.slane %v4845, 1
        %v4848 = vsel %vm982, %v4843, %v4847
        %v4850 = vshrl.u32 %v4601, 16
        %v4852 = vshll.u32 %v4601, 16
        %v4854 = vrot.slane %v4852, 1
        %v4855 = vor.u32 %v4850, %v4854
        %v4857 = vshll.u32 %v4655, 16
        %v4859 = vrot.slane %v4857, 1
        %v4860 = vsel %vm982, %v4855, %v4859
        %v4862 = vshrl.u32 %v4602, 16
        %v4864 = vshll.u32 %v4602, 16
        %v4866 = vrot.slane %v4864, 1
        %v4867 = vor.u32 %v4862, %v4866
        %v4869 = vshll.u32 %v4656, 16
        %v4871 = vrot.slane %v4869, 1
        %v4872 = vsel %vm982, %v4867, %v4871
        %4873 = vrot.lane.b32.xlu0 %v4668, 64
        %v4874 = vpop.permute.xlu0 %4873
        %4875 = vrot.lane.b32.xlu0 %v4680, 64
        %v4876 = vpop.permute.xlu0 %4875
        %4877 = vrot.lane.b32.xlu0 %v4692, 64
        %v4878 = vpop.permute.xlu0 %4877
        %4879 = vrot.lane.b32.xlu0 %v4704, 64
        %v4880 = vpop.permute.xlu0 %4879
        %4881 = vrot.lane.b32.xlu0 %v4716, 64
        %v4882 = vpop.permute.xlu0 %4881
        %4883 = vrot.lane.b32.xlu0 %v4728, 64
        %v4884 = vpop.permute.xlu0 %4883
        %4885 = vrot.lane.b32.xlu0 %v4740, 64
        %v4886 = vpop.permute.xlu0 %4885
        %4887 = vrot.lane.b32.xlu0 %v4752, 64
        %v4888 = vpop.permute.xlu0 %4887
        %4889 = vrot.lane.b32.xlu0 %v4764, 64
        %v4890 = vpop.permute.xlu0 %4889
        %4891 = vrot.lane.b32.xlu0 %v4776, 64
        %v4892 = vpop.permute.xlu0 %4891
        %4893 = vrot.lane.b32.xlu0 %v4788, 64
        %v4894 = vpop.permute.xlu0 %4893
        %4895 = vrot.lane.b32.xlu0 %v4800, 64
        %v4896 = vpop.permute.xlu0 %4895
        %4897 = vrot.lane.b32.xlu0 %v4812, 64
        %v4898 = vpop.permute.xlu0 %4897
        %4899 = vrot.lane.b32.xlu0 %v4824, 64
        %v4900 = vpop.permute.xlu0 %4899
        %4901 = vrot.lane.b32.xlu0 %v4836, 64
        %v4902 = vpop.permute.xlu0 %4901
        %4903 = vrot.lane.b32.xlu0 %v4848, 64
        %v4904 = vpop.permute.xlu0 %4903
        %4905 = vrot.lane.b32.xlu0 %v4860, 64
        %v4906 = vpop.permute.xlu0 %4905
        %4907 = vrot.lane.b32.xlu0 %v4872, 64
        %v4908 = vpop.permute.xlu0 %4907
        %v4909 = vrot.slane %v4585, 1
        %v4910 = vrot.slane %v4639, 1
        %v4911 = vsel %vm1235, %v4909, %v4910
        %v4912 = vrot.slane %v4586, 1
        %v4913 = vrot.slane %v4640, 1
        %v4914 = vsel %vm1235, %v4912, %v4913
        %v4915 = vrot.slane %v4587, 1
        %v4916 = vrot.slane %v4641, 1
        %v4917 = vsel %vm1235, %v4915, %v4916
        %v4918 = vrot.slane %v4588, 1
        %v4919 = vrot.slane %v4642, 1
        %v4920 = vsel %vm1235, %v4918, %v4919
        %v4921 = vrot.slane %v4589, 1
        %v4922 = vrot.slane %v4643, 1
        %v4923 = vsel %vm1235, %v4921, %v4922
        %v4924 = vrot.slane %v4590, 1
        %v4925 = vrot.slane %v4644, 1
        %v4926 = vsel %vm1235, %v4924, %v4925
        %v4927 = vrot.slane %v4591, 1
        %v4928 = vrot.slane %v4645, 1
        %v4929 = vsel %vm1235, %v4927, %v4928
        %v4930 = vrot.slane %v4592, 1
        %v4931 = vrot.slane %v4646, 1
        %v4932 = vsel %vm1235, %v4930, %v4931
        %v4933 = vrot.slane %v4593, 1
        %v4934 = vrot.slane %v4647, 1
        %v4935 = vsel %vm1235, %v4933, %v4934
        %v4936 = vrot.slane %v4594, 1
        %v4937 = vrot.slane %v4648, 1
        %v4938 = vsel %vm1235, %v4936, %v4937
        %v4939 = vrot.slane %v4595, 1
        %v4940 = vrot.slane %v4649, 1
        %v4941 = vsel %vm1235, %v4939, %v4940
        %v4942 = vrot.slane %v4596, 1
        %v4943 = vrot.slane %v4650, 1
        %v4944 = vsel %vm1235, %v4942, %v4943
        %v4945 = vrot.slane %v4597, 1
        %v4946 = vrot.slane %v4651, 1
        %v4947 = vsel %vm1235, %v4945, %v4946
        %v4948 = vrot.slane %v4598, 1
        %v4949 = vrot.slane %v4652, 1
        %v4950 = vsel %vm1235, %v4948, %v4949
        %v4951 = vrot.slane %v4599, 1
        %v4952 = vrot.slane %v4653, 1
        %v4953 = vsel %vm1235, %v4951, %v4952
        %v4954 = vrot.slane %v4600, 1
        %v4955 = vrot.slane %v4654, 1
        %v4956 = vsel %vm1235, %v4954, %v4955
        %v4957 = vrot.slane %v4601, 1
        %v4958 = vrot.slane %v4655, 1
        %v4959 = vsel %vm1235, %v4957, %v4958
        %v4960 = vrot.slane %v4602, 1
        %v4961 = vrot.slane %v4656, 1
        %v4962 = vsel %vm1235, %v4960, %v4961
        %v4964 = vsel %vm1290, %v4585, %v4874
        %v4967 = vsel %vm1290, %v4586, %v4876
        %v4970 = vsel %vm1290, %v4587, %v4878
        %v4973 = vsel %vm1290, %v4588, %v4880
        %v4976 = vsel %vm1290, %v4589, %v4882
        %v4979 = vsel %vm1290, %v4590, %v4884
        %v4982 = vsel %vm1290, %v4591, %v4886
        %v4985 = vsel %vm1290, %v4592, %v4888
        %v4988 = vsel %vm1290, %v4593, %v4890
        %v4991 = vsel %vm1290, %v4594, %v4892
        %v4994 = vsel %vm1290, %v4595, %v4894
        %v4997 = vsel %vm1290, %v4596, %v4896
        %v5000 = vsel %vm1290, %v4597, %v4898
        %v5003 = vsel %vm1290, %v4598, %v4900
        %v5006 = vsel %vm1290, %v4599, %v4902
        %v5009 = vsel %vm1290, %v4600, %v4904
        %v5012 = vsel %vm1290, %v4601, %v4906
        %v5015 = vsel %vm1290, %v4602, %v4908
        %v5041 = vunpack.c.l.b16 %v4435
        %v5042 = vunpack.c.h.b16 %v4435
        %v5043 = vunpack.c.l.b16 %v4436
        %v5044 = vunpack.c.h.b16 %v4436
        %v5045 = vunpack.c.l.b16 %v4437
        %v5046 = vunpack.c.h.b16 %v4437
        %v5047 = vunpack.c.l.b16 %v4438
        %v5048 = vunpack.c.h.b16 %v4438
        %v5049 = vunpack.c.l.b16 %v4439
        %v5050 = vunpack.c.h.b16 %v4439
        %v5051 = vunpack.c.l.b16 %v4440
        %v5052 = vunpack.c.h.b16 %v4440
        %v5053 = vunpack.c.l.b16 %v4441
        %v5054 = vunpack.c.h.b16 %v4441
        %v5055 = vunpack.c.l.b16 %v4442
        %v5056 = vunpack.c.h.b16 %v4442
        %v5057 = vunpack.c.l.b16 %v4443
        %v5058 = vunpack.c.h.b16 %v4443
        %v5059 = vunpack.c.l.b16 %v4444
        %v5060 = vunpack.c.h.b16 %v4444
        %v5061 = vunpack.c.l.b16 %v4445
        %v5062 = vunpack.c.h.b16 %v4445
        %v5063 = vunpack.c.l.b16 %v4446
        %v5064 = vunpack.c.h.b16 %v4446
        %v5065 = vunpack.c.l.b16 %v4447
        %v5066 = vunpack.c.h.b16 %v4447
        %v5067 = vunpack.c.l.b16 %v4448
        %v5068 = vunpack.c.h.b16 %v4448
        %v5069 = vunpack.c.l.b16 %v4449
        %v5070 = vunpack.c.h.b16 %v4449
        %v5071 = vunpack.c.l.b16 %v4450
        %v5072 = vunpack.c.h.b16 %v4450
        %v5073 = vunpack.c.l.b16 %v4451
        %v5074 = vunpack.c.h.b16 %v4451
        %v5075 = vunpack.c.l.b16 %v4452
        %v5076 = vunpack.c.h.b16 %v4452
        %v5077 = vunpack.c.l.b16 %v4453
        %v5078 = vunpack.c.h.b16 %v4453
        %v5079 = vunpack.c.l.b16 %v4454
        %v5080 = vunpack.c.h.b16 %v4454
        %v5081 = vunpack.c.l.b16 %v4455
        %v5082 = vunpack.c.h.b16 %v4455
        %v5083 = vunpack.c.l.b16 %v4456
        %v5084 = vunpack.c.h.b16 %v4456
        %v5085 = vunpack.c.l.b16 %v4457
        %v5086 = vunpack.c.h.b16 %v4457
        %v5087 = vunpack.c.l.b16 %v4458
        %v5088 = vunpack.c.h.b16 %v4458
        %v5089 = vpack.c.b16 %v5043, %v5041
        %v5090 = vpack.c.b16 %v5044, %v5042
        %v5091 = vpack.c.b16 %v5047, %v5045
        %v5092 = vpack.c.b16 %v5048, %v5046
        %v5093 = vpack.c.b16 %v5051, %v5049
        %v5094 = vpack.c.b16 %v5052, %v5050
        %v5095 = vpack.c.b16 %v5055, %v5053
        %v5096 = vpack.c.b16 %v5056, %v5054
        %v5097 = vpack.c.b16 %v5059, %v5057
        %v5098 = vpack.c.b16 %v5060, %v5058
        %v5099 = vpack.c.b16 %v5063, %v5061
        %v5100 = vpack.c.b16 %v5064, %v5062
        %v5101 = vpack.c.b16 %v5067, %v5065
        %v5102 = vpack.c.b16 %v5068, %v5066
        %v5103 = vpack.c.b16 %v5071, %v5069
        %v5104 = vpack.c.b16 %v5072, %v5070
        %v5105 = vpack.c.b16 %v5075, %v5073
        %v5106 = vpack.c.b16 %v5076, %v5074
        %v5107 = vpack.c.b16 %v5079, %v5077
        %v5108 = vpack.c.b16 %v5080, %v5078
        %v5109 = vpack.c.b16 %v5083, %v5081
        %v5110 = vpack.c.b16 %v5084, %v5082
        %v5111 = vpack.c.b16 %v5087, %v5085
        %v5112 = vpack.c.b16 %v5088, %v5086
        %v5138 = vsel %vm1290, %v4911, 0
        %v5141 = vsel %vm1290, %v4914, 0
        %v5144 = vsel %vm1290, %v4917, 0
        %v5147 = vsel %vm1290, %v4920, 0
        %v5150 = vsel %vm1290, %v4923, 0
        %v5153 = vsel %vm1290, %v4926, 0
        %v5156 = vsel %vm1290, %v4929, 0
        %v5159 = vsel %vm1290, %v4932, 0
        %v5162 = vsel %vm1290, %v4935, 0
        %v5165 = vsel %vm1290, %v4938, 0
        %v5168 = vsel %vm1290, %v4941, 0
        %v5171 = vsel %vm1290, %v4944, 0
        %v5174 = vsel %vm1290, %v4947, 0
        %v5177 = vsel %vm1290, %v4950, 0
        %v5180 = vsel %vm1290, %v4953, 0
        %v5183 = vsel %vm1290, %v4956, 0
        %v5186 = vsel %vm1290, %v4959, 0
        %v5189 = vsel %vm1290, %v4962, 0
        %5191 = vmatpush.bf16.msra.mxu0 %v5103
        %5192 = vmatpush.bf16.msra.mxu0 %v5101
        %5193 = vmatpush.bf16.msra.mxu0 %v5099
        %5194 = vmatpush.bf16.msra.mxu0 %v5097
        %5195 = vmatpush.bf16.msra.mxu0 %v5095
        %5196 = vmatpush.bf16.msra.mxu0 %v5093
        %5197 = vmatpush.bf16.msra.mxu0 %v5091
        %5198 = vmatpush.bf16.msra.mxu0 %v5089
        %5199 = vmatmul.bf16.gmra.mxu0 %v4964
        %v5200 = vpop.f32.mrf.mxu0
        %v5201 = vadd.f32 0.0, %v5200
        %v5202 = vpop.f32.mrf.mxu0
        %v5203 = vadd.f32 0.0, %v5202
        %5204 = vmatmul.bf16.gmra.mxu0 %v4967
        %v5205 = vpop.f32.mrf.mxu0
        %v5206 = vadd.f32 0.0, %v5205
        %v5207 = vpop.f32.mrf.mxu0
        %v5208 = vadd.f32 0.0, %v5207
        %5209 = vmatmul.bf16.gmra.mxu0 %v4970
        %v5210 = vpop.f32.mrf.mxu0
        %v5211 = vadd.f32 0.0, %v5210
        %v5212 = vpop.f32.mrf.mxu0
        %v5213 = vadd.f32 0.0, %v5212
        %5214 = vmatmul.bf16.gmra.mxu0 %v4973
        %v5215 = vpop.f32.mrf.mxu0
        %v5216 = vadd.f32 0.0, %v5215
        %v5217 = vpop.f32.mrf.mxu0
        %v5218 = vadd.f32 0.0, %v5217
        %5219 = vmatmul.bf16.gmra.mxu0 %v4976
        %v5220 = vpop.f32.mrf.mxu0
        %v5221 = vadd.f32 0.0, %v5220
        %v5222 = vpop.f32.mrf.mxu0
        %v5223 = vadd.f32 0.0, %v5222
        %5224 = vmatmul.bf16.gmra.mxu0 %v4979
        %v5225 = vpop.f32.mrf.mxu0
        %v5226 = vadd.f32 0.0, %v5225
        %v5227 = vpop.f32.mrf.mxu0
        %v5228 = vadd.f32 0.0, %v5227
        %5229 = vmatmul.bf16.gmra.mxu0 %v4982
        %v5230 = vpop.f32.mrf.mxu0
        %v5231 = vadd.f32 0.0, %v5230
        %v5232 = vpop.f32.mrf.mxu0
        %v5233 = vadd.f32 0.0, %v5232
        %5234 = vmatmul.bf16.gmra.mxu0 %v4985
        %v5235 = vpop.f32.mrf.mxu0
        %v5236 = vadd.f32 0.0, %v5235
        %v5237 = vpop.f32.mrf.mxu0
        %v5238 = vadd.f32 0.0, %v5237
        %5239 = vmatmul.bf16.gmra.mxu0 %v4988
        %v5240 = vpop.f32.mrf.mxu0
        %v5241 = vadd.f32 0.0, %v5240
        %v5242 = vpop.f32.mrf.mxu0
        %v5243 = vadd.f32 0.0, %v5242
        %5244 = vmatmul.bf16.gmra.mxu0 %v4991
        %v5245 = vpop.f32.mrf.mxu0
        %v5246 = vadd.f32 0.0, %v5245
        %v5247 = vpop.f32.mrf.mxu0
        %v5248 = vadd.f32 0.0, %v5247
        %5249 = vmatmul.bf16.gmra.mxu0 %v4994
        %v5250 = vpop.f32.mrf.mxu0
        %v5251 = vadd.f32 0.0, %v5250
        %v5252 = vpop.f32.mrf.mxu0
        %v5253 = vadd.f32 0.0, %v5252
        %5254 = vmatmul.bf16.gmra.mxu0 %v4997
        %v5255 = vpop.f32.mrf.mxu0
        %v5256 = vadd.f32 0.0, %v5255
        %v5257 = vpop.f32.mrf.mxu0
        %v5258 = vadd.f32 0.0, %v5257
        %5259 = vmatmul.bf16.gmra.mxu0 %v5000
        %v5260 = vpop.f32.mrf.mxu0
        %v5261 = vadd.f32 0.0, %v5260
        %v5262 = vpop.f32.mrf.mxu0
        %v5263 = vadd.f32 0.0, %v5262
        %5264 = vmatmul.bf16.gmra.mxu0 %v5003
        %v5265 = vpop.f32.mrf.mxu0
        %v5266 = vadd.f32 0.0, %v5265
        %v5267 = vpop.f32.mrf.mxu0
        %v5268 = vadd.f32 0.0, %v5267
        %5269 = vmatmul.bf16.gmra.mxu0 %v5006
        %v5270 = vpop.f32.mrf.mxu0
        %v5271 = vadd.f32 0.0, %v5270
        %v5272 = vpop.f32.mrf.mxu0
        %v5273 = vadd.f32 0.0, %v5272
        %5274 = vmatmul.bf16.gmra.mxu0 %v5009
        %v5275 = vpop.f32.mrf.mxu0
        %v5276 = vadd.f32 0.0, %v5275
        %v5277 = vpop.f32.mrf.mxu0
        %v5278 = vadd.f32 0.0, %v5277
        %5279 = vmatmul.bf16.gmra.mxu0 %v5012
        %v5280 = vpop.f32.mrf.mxu0
        %v5281 = vadd.f32 0.0, %v5280
        %v5282 = vpop.f32.mrf.mxu0
        %v5283 = vadd.f32 0.0, %v5282
        %5284 = vmatmul.bf16.gmra.mxu0 %v5015
        %v5285 = vpop.f32.mrf.mxu0
        %v5286 = vpop.f32.mrf.mxu0
        %5287 = vdwg.mxu0
        %5288 = vmatpush.bf16.msra.mxu0 0
        %5289 = vmatpush.bf16.msra.mxu0 0
        %5290 = vmatpush.bf16.msra.mxu0 0
        %5291 = vmatpush.bf16.msra.mxu0 0
        %5292 = vmatpush.bf16.msra.mxu0 %v5111
        %5293 = vmatpush.bf16.msra.mxu0 %v5109
        %5294 = vmatpush.bf16.msra.mxu0 %v5107
        %5295 = vmatpush.bf16.msra.mxu0 %v5105
        %5296 = vmatmul.bf16.gmra.mxu0 %v5138
        %v5297 = vpop.f32.mrf.mxu0
        %v5298 = vadd.f32 %v5201, %v5297
        %v5299 = vpop.f32.mrf.mxu0
        %v5300 = vadd.f32 %v5203, %v5299
        %5301 = vmatmul.bf16.gmra.mxu0 %v5141
        %v5302 = vpop.f32.mrf.mxu0
        %v5303 = vadd.f32 %v5206, %v5302
        %v5304 = vpop.f32.mrf.mxu0
        %v5305 = vadd.f32 %v5208, %v5304
        %5306 = vmatmul.bf16.gmra.mxu0 %v5144
        %v5307 = vpop.f32.mrf.mxu0
        %v5308 = vadd.f32 %v5211, %v5307
        %v5309 = vpop.f32.mrf.mxu0
        %v5310 = vadd.f32 %v5213, %v5309
        %5311 = vmatmul.bf16.gmra.mxu0 %v5147
        %v5312 = vpop.f32.mrf.mxu0
        %v5313 = vadd.f32 %v5216, %v5312
        %v5314 = vpop.f32.mrf.mxu0
        %v5315 = vadd.f32 %v5218, %v5314
        %5316 = vmatmul.bf16.gmra.mxu0 %v5150
        %v5317 = vpop.f32.mrf.mxu0
        %v5318 = vadd.f32 %v5221, %v5317
        %v5319 = vpop.f32.mrf.mxu0
        %v5320 = vadd.f32 %v5223, %v5319
        %5321 = vmatmul.bf16.gmra.mxu0 %v5153
        %v5322 = vpop.f32.mrf.mxu0
        %v5323 = vadd.f32 %v5226, %v5322
        %v5324 = vpop.f32.mrf.mxu0
        %v5325 = vadd.f32 %v5228, %v5324
        %5326 = vmatmul.bf16.gmra.mxu0 %v5156
        %v5327 = vpop.f32.mrf.mxu0
        %v5328 = vadd.f32 %v5231, %v5327
        %v5329 = vpop.f32.mrf.mxu0
        %v5330 = vadd.f32 %v5233, %v5329
        %5331 = vmatmul.bf16.gmra.mxu0 %v5159
        %v5332 = vpop.f32.mrf.mxu0
        %v5333 = vadd.f32 %v5236, %v5332
        %v5334 = vpop.f32.mrf.mxu0
        %v5335 = vadd.f32 %v5238, %v5334
        %5336 = vmatmul.bf16.gmra.mxu0 %v5162
        %v5337 = vpop.f32.mrf.mxu0
        %v5338 = vadd.f32 %v5241, %v5337
        %v5339 = vpop.f32.mrf.mxu0
        %v5340 = vadd.f32 %v5243, %v5339
        %5341 = vmatmul.bf16.gmra.mxu0 %v5165
        %v5342 = vpop.f32.mrf.mxu0
        %v5343 = vadd.f32 %v5246, %v5342
        %v5344 = vpop.f32.mrf.mxu0
        %v5345 = vadd.f32 %v5248, %v5344
        %5346 = vmatmul.bf16.gmra.mxu0 %v5168
        %v5347 = vpop.f32.mrf.mxu0
        %v5348 = vadd.f32 %v5251, %v5347
        %v5349 = vpop.f32.mrf.mxu0
        %v5350 = vadd.f32 %v5253, %v5349
        %5351 = vmatmul.bf16.gmra.mxu0 %v5171
        %v5352 = vpop.f32.mrf.mxu0
        %v5353 = vadd.f32 %v5256, %v5352
        %v5354 = vpop.f32.mrf.mxu0
        %v5355 = vadd.f32 %v5258, %v5354
        %5356 = vmatmul.bf16.gmra.mxu0 %v5174
        %v5357 = vpop.f32.mrf.mxu0
        %v5358 = vadd.f32 %v5261, %v5357
        %v5359 = vpop.f32.mrf.mxu0
        %v5360 = vadd.f32 %v5263, %v5359
        %5361 = vmatmul.bf16.gmra.mxu0 %v5177
        %v5362 = vpop.f32.mrf.mxu0
        %v5363 = vadd.f32 %v5266, %v5362
        %v5364 = vpop.f32.mrf.mxu0
        %v5365 = vadd.f32 %v5268, %v5364
        %5366 = vmatmul.bf16.gmra.mxu0 %v5180
        %v5367 = vpop.f32.mrf.mxu0
        %v5368 = vadd.f32 %v5271, %v5367
        %v5369 = vpop.f32.mrf.mxu0
        %v5370 = vadd.f32 %v5273, %v5369
        %5371 = vmatmul.bf16.gmra.mxu0 %v5183
        %v5372 = vpop.f32.mrf.mxu0
        %v5373 = vadd.f32 %v5276, %v5372
        %v5374 = vpop.f32.mrf.mxu0
        %v5375 = vadd.f32 %v5278, %v5374
        %5376 = vmatmul.bf16.gmra.mxu0 %v5186
        %v5377 = vpop.f32.mrf.mxu0
        %v5378 = vadd.f32 %v5281, %v5377
        %v5379 = vpop.f32.mrf.mxu0
        %v5380 = vadd.f32 %v5283, %v5379
        %5381 = vmatmul.bf16.gmra.mxu0 %v5189
        %v5382 = vpop.f32.mrf.mxu0
        %v5383 = vpop.f32.mrf.mxu0
        %5384 = vdwg.mxu0
        %5385 = vmatpush.bf16.msra.mxu0 %v5104
        %5386 = vmatpush.bf16.msra.mxu0 %v5102
        %5387 = vmatpush.bf16.msra.mxu0 %v5100
        %5388 = vmatpush.bf16.msra.mxu0 %v5098
        %5389 = vmatpush.bf16.msra.mxu0 %v5096
        %5390 = vmatpush.bf16.msra.mxu0 %v5094
        %5391 = vmatpush.bf16.msra.mxu0 %v5092
        %5392 = vmatpush.bf16.msra.mxu0 %v5090
        %5393 = vmatmul.bf16.gmra.mxu0 %v4964
        %v5394 = vpop.f32.mrf.mxu0
        %v5395 = vpop.f32.mrf.mxu0
        %5396 = vmatmul.bf16.gmra.mxu0 %v4967
        %v5397 = vpop.f32.mrf.mxu0
        %v5398 = vpop.f32.mrf.mxu0
        %5399 = vmatmul.bf16.gmra.mxu0 %v4970
        %v5400 = vpop.f32.mrf.mxu0
        %v5401 = vadd.f32 0.0, %v5400
        %v5402 = vpop.f32.mrf.mxu0
        %v5403 = vadd.f32 0.0, %v5402
        %5404 = vmatmul.bf16.gmra.mxu0 %v4973
        %v5405 = vpop.f32.mrf.mxu0
        %v5406 = vadd.f32 0.0, %v5405
        %v5407 = vpop.f32.mrf.mxu0
        %v5408 = vadd.f32 0.0, %v5407
        %5409 = vmatmul.bf16.gmra.mxu0 %v4976
        %v5410 = vpop.f32.mrf.mxu0
        %v5411 = vadd.f32 0.0, %v5410
        %v5412 = vpop.f32.mrf.mxu0
        %v5413 = vadd.f32 0.0, %v5412
        %5414 = vmatmul.bf16.gmra.mxu0 %v4979
        %v5415 = vpop.f32.mrf.mxu0
        %v5416 = vadd.f32 0.0, %v5415
        %v5417 = vpop.f32.mrf.mxu0
        %v5418 = vadd.f32 0.0, %v5417
        %5419 = vmatmul.bf16.gmra.mxu0 %v4982
        %v5420 = vpop.f32.mrf.mxu0
        %v5421 = vadd.f32 0.0, %v5420
        %v5422 = vpop.f32.mrf.mxu0
        %v5423 = vadd.f32 0.0, %v5422
        %5424 = vmatmul.bf16.gmra.mxu0 %v4985
        %v5425 = vpop.f32.mrf.mxu0
        %v5426 = vadd.f32 0.0, %v5425
        %v5427 = vpop.f32.mrf.mxu0
        %v5428 = vadd.f32 0.0, %v5427
        %5429 = vmatmul.bf16.gmra.mxu0 %v4988
        %v5430 = vpop.f32.mrf.mxu0
        %v5431 = vadd.f32 0.0, %v5430
        %v5432 = vpop.f32.mrf.mxu0
        %v5433 = vadd.f32 0.0, %v5432
        %5434 = vmatmul.bf16.gmra.mxu0 %v4991
        %v5435 = vpop.f32.mrf.mxu0
        %v5436 = vadd.f32 0.0, %v5435
        %v5437 = vpop.f32.mrf.mxu0
        %v5438 = vadd.f32 0.0, %v5437
        %5439 = vmatmul.bf16.gmra.mxu0 %v4994
        %v5440 = vpop.f32.mrf.mxu0
        %v5441 = vadd.f32 0.0, %v5440
        %v5442 = vpop.f32.mrf.mxu0
        %v5443 = vadd.f32 0.0, %v5442
        %5444 = vmatmul.bf16.gmra.mxu0 %v4997
        %v5445 = vpop.f32.mrf.mxu0
        %v5446 = vadd.f32 0.0, %v5445
        %v5447 = vpop.f32.mrf.mxu0
        %v5448 = vadd.f32 0.0, %v5447
        %5449 = vmatmul.bf16.gmra.mxu0 %v5000
        %v5450 = vpop.f32.mrf.mxu0
        %v5451 = vadd.f32 0.0, %v5450
        %v5452 = vpop.f32.mrf.mxu0
        %v5453 = vadd.f32 0.0, %v5452
        %5454 = vmatmul.bf16.gmra.mxu0 %v5003
        %v5455 = vpop.f32.mrf.mxu0
        %v5456 = vadd.f32 0.0, %v5455
        %v5457 = vpop.f32.mrf.mxu0
        %v5458 = vadd.f32 0.0, %v5457
        %5459 = vmatmul.bf16.gmra.mxu0 %v5006
        %v5460 = vpop.f32.mrf.mxu0
        %v5461 = vadd.f32 0.0, %v5460
        %v5462 = vpop.f32.mrf.mxu0
        %v5463 = vadd.f32 0.0, %v5462
        %5464 = vmatmul.bf16.gmra.mxu0 %v5009
        %v5465 = vpop.f32.mrf.mxu0
        %v5466 = vadd.f32 0.0, %v5465
        %v5467 = vpop.f32.mrf.mxu0
        %v5468 = vadd.f32 0.0, %v5467
        %5469 = vmatmul.bf16.gmra.mxu0 %v5012
        %v5470 = vpop.f32.mrf.mxu0
        %v5471 = vadd.f32 0.0, %v5470
        %v5472 = vpop.f32.mrf.mxu0
        %v5473 = vadd.f32 0.0, %v5472
        %5474 = vmatmul.bf16.gmra.mxu0 %v5015
        %v5475 = vpop.f32.mrf.mxu0
        %v5476 = vadd.f32 0.0, %v5475
        %v5477 = vpop.f32.mrf.mxu0
        %v5478 = vadd.f32 0.0, %v5477
        %5479 = vdwg.mxu0
        %5480 = vmatpush.bf16.msra.mxu0 0
        %5481 = vmatpush.bf16.msra.mxu0 0
        %5482 = vmatpush.bf16.msra.mxu0 0
        %5483 = vmatpush.bf16.msra.mxu0 0
        %5484 = vmatpush.bf16.msra.mxu0 %v5112
        %5485 = vmatpush.bf16.msra.mxu0 %v5110
        %5486 = vmatpush.bf16.msra.mxu0 %v5108
        %5487 = vmatpush.bf16.msra.mxu0 %v5106
        %5488 = vmatmul.bf16.gmra.mxu0 %v5138
        %v5489 = vpop.f32.mrf.mxu0
        %v5490 = vpop.f32.mrf.mxu0
        %5491 = vmatmul.bf16.gmra.mxu0 %v5141
        %v5492 = vpop.f32.mrf.mxu0
        %v5493 = vpop.f32.mrf.mxu0
        %5494 = vmatmul.bf16.gmra.mxu0 %v5144
        %v5495 = vpop.f32.mrf.mxu0
        %v5496 = vadd.f32 %v5401, %v5495
        %v5497 = vpop.f32.mrf.mxu0
        %v5498 = vadd.f32 %v5403, %v5497
        %5499 = vmatmul.bf16.gmra.mxu0 %v5147
        %v5500 = vpop.f32.mrf.mxu0
        %v5501 = vadd.f32 %v5406, %v5500
        %v5502 = vpop.f32.mrf.mxu0
        %v5503 = vadd.f32 %v5408, %v5502
        %5504 = vmatmul.bf16.gmra.mxu0 %v5150
        %v5505 = vpop.f32.mrf.mxu0
        %v5506 = vadd.f32 %v5411, %v5505
        %v5507 = vpop.f32.mrf.mxu0
        %v5508 = vadd.f32 %v5413, %v5507
        %5509 = vmatmul.bf16.gmra.mxu0 %v5153
        %v5510 = vpop.f32.mrf.mxu0
        %v5511 = vadd.f32 %v5416, %v5510
        %v5512 = vpop.f32.mrf.mxu0
        %v5513 = vadd.f32 %v5418, %v5512
        %5514 = vmatmul.bf16.gmra.mxu0 %v5156
        %v5515 = vpop.f32.mrf.mxu0
        %v5516 = vadd.f32 %v5421, %v5515
        %v5517 = vpop.f32.mrf.mxu0
        %v5518 = vadd.f32 %v5423, %v5517
        %5519 = vmatmul.bf16.gmra.mxu0 %v5159
        %v5520 = vpop.f32.mrf.mxu0
        %v5521 = vadd.f32 %v5426, %v5520
        %v5522 = vpop.f32.mrf.mxu0
        %v5523 = vadd.f32 %v5428, %v5522
        %5524 = vmatmul.bf16.gmra.mxu0 %v5162
        %v5525 = vpop.f32.mrf.mxu0
        %v5526 = vadd.f32 %v5431, %v5525
        %v5527 = vpop.f32.mrf.mxu0
        %v5528 = vadd.f32 %v5433, %v5527
        %5529 = vmatmul.bf16.gmra.mxu0 %v5165
        %v5530 = vpop.f32.mrf.mxu0
        %v5531 = vadd.f32 %v5436, %v5530
        %v5532 = vpop.f32.mrf.mxu0
        %v5533 = vadd.f32 %v5438, %v5532
        %5534 = vmatmul.bf16.gmra.mxu0 %v5168
        %v5535 = vpop.f32.mrf.mxu0
        %v5536 = vadd.f32 %v5441, %v5535
        %v5537 = vpop.f32.mrf.mxu0
        %v5538 = vadd.f32 %v5443, %v5537
        %5539 = vmatmul.bf16.gmra.mxu0 %v5171
        %v5540 = vpop.f32.mrf.mxu0
        %v5541 = vadd.f32 %v5446, %v5540
        %v5542 = vpop.f32.mrf.mxu0
        %v5543 = vadd.f32 %v5448, %v5542
        %5544 = vmatmul.bf16.gmra.mxu0 %v5174
        %v5545 = vpop.f32.mrf.mxu0
        %v5546 = vadd.f32 %v5451, %v5545
        %v5547 = vpop.f32.mrf.mxu0
        %v5548 = vadd.f32 %v5453, %v5547
        %5549 = vmatmul.bf16.gmra.mxu0 %v5177
        %v5550 = vpop.f32.mrf.mxu0
        %v5551 = vadd.f32 %v5456, %v5550
        %v5552 = vpop.f32.mrf.mxu0
        %v5553 = vadd.f32 %v5458, %v5552
        %5554 = vmatmul.bf16.gmra.mxu0 %v5180
        %v5555 = vpop.f32.mrf.mxu0
        %v5556 = vadd.f32 %v5461, %v5555
        %v5557 = vpop.f32.mrf.mxu0
        %v5558 = vadd.f32 %v5463, %v5557
        %5559 = vmatmul.bf16.gmra.mxu0 %v5183
        %v5560 = vpop.f32.mrf.mxu0
        %v5561 = vadd.f32 %v5466, %v5560
        %v5562 = vpop.f32.mrf.mxu0
        %v5563 = vadd.f32 %v5468, %v5562
        %5564 = vmatmul.bf16.gmra.mxu0 %v5186
        %v5565 = vpop.f32.mrf.mxu0
        %v5566 = vadd.f32 %v5471, %v5565
        %v5567 = vpop.f32.mrf.mxu0
        %v5568 = vadd.f32 %v5473, %v5567
        %5569 = vmatmul.bf16.gmra.mxu0 %v5189
        %v5570 = vpop.f32.mrf.mxu0
        %v5571 = vadd.f32 %v5476, %v5570
        %v5572 = vpop.f32.mrf.mxu0
        %v5573 = vadd.f32 %v5478, %v5572
        %5574 = vdwg.mxu0
        %5607 = vrot.lane.b32.xlu0 %v5303, 64
        %v5608 = vpop.permute.xlu0 %5607
        %5609 = vrot.lane.b32.xlu0 %v5305, 64
        %v5610 = vpop.permute.xlu0 %5609
        %5611 = vrot.lane.b32.xlu0 %v5308, 64
        %v5612 = vpop.permute.xlu0 %5611
        %5613 = vrot.lane.b32.xlu0 %v5310, 64
        %v5614 = vpop.permute.xlu0 %5613
        %5615 = vrot.lane.b32.xlu0 %v5313, 64
        %v5616 = vpop.permute.xlu0 %5615
        %5617 = vrot.lane.b32.xlu0 %v5315, 64
        %v5618 = vpop.permute.xlu0 %5617
        %5619 = vrot.lane.b32.xlu0 %v5318, 64
        %v5620 = vpop.permute.xlu0 %5619
        %5621 = vrot.lane.b32.xlu0 %v5320, 64
        %v5622 = vpop.permute.xlu0 %5621
        %5623 = vrot.lane.b32.xlu0 %v5323, 64
        %v5624 = vpop.permute.xlu0 %5623
        %5625 = vrot.lane.b32.xlu0 %v5325, 64
        %v5626 = vpop.permute.xlu0 %5625
        %5627 = vrot.lane.b32.xlu0 %v5328, 64
        %v5628 = vpop.permute.xlu0 %5627
        %5629 = vrot.lane.b32.xlu0 %v5330, 64
        %v5630 = vpop.permute.xlu0 %5629
        %5631 = vrot.lane.b32.xlu0 %v5333, 64
        %v5632 = vpop.permute.xlu0 %5631
        %5633 = vrot.lane.b32.xlu0 %v5335, 64
        %v5634 = vpop.permute.xlu0 %5633
        %5635 = vrot.lane.b32.xlu0 %v5338, 64
        %v5636 = vpop.permute.xlu0 %5635
        %5637 = vrot.lane.b32.xlu0 %v5340, 64
        %v5638 = vpop.permute.xlu0 %5637
        %5639 = vrot.lane.b32.xlu0 %v5343, 64
        %v5640 = vpop.permute.xlu0 %5639
        %5641 = vrot.lane.b32.xlu0 %v5345, 64
        %v5642 = vpop.permute.xlu0 %5641
        %5643 = vrot.lane.b32.xlu0 %v5348, 64
        %v5644 = vpop.permute.xlu0 %5643
        %5645 = vrot.lane.b32.xlu0 %v5350, 64
        %v5646 = vpop.permute.xlu0 %5645
        %5647 = vrot.lane.b32.xlu0 %v5353, 64
        %v5648 = vpop.permute.xlu0 %5647
        %5649 = vrot.lane.b32.xlu0 %v5355, 64
        %v5650 = vpop.permute.xlu0 %5649
        %5651 = vrot.lane.b32.xlu0 %v5358, 64
        %v5652 = vpop.permute.xlu0 %5651
        %5653 = vrot.lane.b32.xlu0 %v5360, 64
        %v5654 = vpop.permute.xlu0 %5653
        %5655 = vrot.lane.b32.xlu0 %v5363, 64
        %v5656 = vpop.permute.xlu0 %5655
        %5657 = vrot.lane.b32.xlu0 %v5365, 64
        %v5658 = vpop.permute.xlu0 %5657
        %5659 = vrot.lane.b32.xlu0 %v5368, 64
        %v5660 = vpop.permute.xlu0 %5659
        %5661 = vrot.lane.b32.xlu0 %v5370, 64
        %v5662 = vpop.permute.xlu0 %5661
        %5663 = vrot.lane.b32.xlu0 %v5373, 64
        %v5664 = vpop.permute.xlu0 %5663
        %5665 = vrot.lane.b32.xlu0 %v5375, 64
        %v5666 = vpop.permute.xlu0 %5665
        %5667 = vrot.lane.b32.xlu0 %v5378, 64
        %v5668 = vpop.permute.xlu0 %5667
        %5669 = vrot.lane.b32.xlu0 %v5380, 64
        %v5670 = vpop.permute.xlu0 %5669
        %v5703 = vadd.f32 %v5298, %v5608
        %v5704 = vadd.f32 %v5300, %v5610
        %v5705 = vadd.f32 %v5303, %v5612
        %v5706 = vadd.f32 %v5305, %v5614
        %v5707 = vadd.f32 %v5308, %v5616
        %v5708 = vadd.f32 %v5310, %v5618
        %v5709 = vadd.f32 %v5313, %v5620
        %v5710 = vadd.f32 %v5315, %v5622
        %v5711 = vadd.f32 %v5318, %v5624
        %v5712 = vadd.f32 %v5320, %v5626
        %v5713 = vadd.f32 %v5323, %v5628
        %v5714 = vadd.f32 %v5325, %v5630
        %v5715 = vadd.f32 %v5328, %v5632
        %v5716 = vadd.f32 %v5330, %v5634
        %v5717 = vadd.f32 %v5333, %v5636
        %v5718 = vadd.f32 %v5335, %v5638
        %v5719 = vadd.f32 %v5338, %v5640
        %v5720 = vadd.f32 %v5340, %v5642
        %v5721 = vadd.f32 %v5343, %v5644
        %v5722 = vadd.f32 %v5345, %v5646
        %v5723 = vadd.f32 %v5348, %v5648
        %v5724 = vadd.f32 %v5350, %v5650
        %v5725 = vadd.f32 %v5353, %v5652
        %v5726 = vadd.f32 %v5355, %v5654
        %v5727 = vadd.f32 %v5358, %v5656
        %v5728 = vadd.f32 %v5360, %v5658
        %v5729 = vadd.f32 %v5363, %v5660
        %v5730 = vadd.f32 %v5365, %v5662
        %v5731 = vadd.f32 %v5368, %v5664
        %v5732 = vadd.f32 %v5370, %v5666
        %v5733 = vadd.f32 %v5373, %v5668
        %v5734 = vadd.f32 %v5375, %v5670
        %v5735 = vadd.f32 %v5703, %v5496
        %v5736 = vadd.f32 %v5704, %v5498
        %v5737 = vadd.f32 %v5705, %v5501
        %v5738 = vadd.f32 %v5706, %v5503
        %v5739 = vadd.f32 %v5707, %v5506
        %v5740 = vadd.f32 %v5708, %v5508
        %v5741 = vadd.f32 %v5709, %v5511
        %v5742 = vadd.f32 %v5710, %v5513
        %v5743 = vadd.f32 %v5711, %v5516
        %v5744 = vadd.f32 %v5712, %v5518
        %v5745 = vadd.f32 %v5713, %v5521
        %v5746 = vadd.f32 %v5714, %v5523
        %v5747 = vadd.f32 %v5715, %v5526
        %v5748 = vadd.f32 %v5716, %v5528
        %v5749 = vadd.f32 %v5717, %v5531
        %v5750 = vadd.f32 %v5718, %v5533
        %v5751 = vadd.f32 %v5719, %v5536
        %v5752 = vadd.f32 %v5720, %v5538
        %v5753 = vadd.f32 %v5721, %v5541
        %v5754 = vadd.f32 %v5722, %v5543
        %v5755 = vadd.f32 %v5723, %v5546
        %v5756 = vadd.f32 %v5724, %v5548
        %v5757 = vadd.f32 %v5725, %v5551
        %v5758 = vadd.f32 %v5726, %v5553
        %v5759 = vadd.f32 %v5727, %v5556
        %v5760 = vadd.f32 %v5728, %v5558
        %v5761 = vadd.f32 %v5729, %v5561
        %v5762 = vadd.f32 %v5730, %v5563
        %v5763 = vadd.f32 %v5731, %v5566
        %v5764 = vadd.f32 %v5732, %v5568
        %v5765 = vadd.f32 %v5733, %v5571
        %v5766 = vadd.f32 %v5734, %v5573
        %v5767 = vmax.f32 %v5735, 0.0
        %v5768 = vmax.f32 %v5736, 0.0
        %v5769 = vmax.f32 %v5737, 0.0
        %v5770 = vmax.f32 %v5738, 0.0
        %v5771 = vmax.f32 %v5739, 0.0
        %v5772 = vmax.f32 %v5740, 0.0
        %v5773 = vmax.f32 %v5741, 0.0
        %v5774 = vmax.f32 %v5742, 0.0
        %v5775 = vmax.f32 %v5743, 0.0
        %v5776 = vmax.f32 %v5744, 0.0
        %v5777 = vmax.f32 %v5745, 0.0
        %v5778 = vmax.f32 %v5746, 0.0
        %v5779 = vmax.f32 %v5747, 0.0
        %v5780 = vmax.f32 %v5748, 0.0
        %v5781 = vmax.f32 %v5749, 0.0
        %v5782 = vmax.f32 %v5750, 0.0
        %v5783 = vmax.f32 %v5751, 0.0
        %v5784 = vmax.f32 %v5752, 0.0
        %v5785 = vmax.f32 %v5753, 0.0
        %v5786 = vmax.f32 %v5754, 0.0
        %v5787 = vmax.f32 %v5755, 0.0
        %v5788 = vmax.f32 %v5756, 0.0
        %v5789 = vmax.f32 %v5757, 0.0
        %v5790 = vmax.f32 %v5758, 0.0
        %v5791 = vmax.f32 %v5759, 0.0
        %v5792 = vmax.f32 %v5760, 0.0
        %v5793 = vmax.f32 %v5761, 0.0
        %v5794 = vmax.f32 %v5762, 0.0
        %v5795 = vmax.f32 %v5763, 0.0
        %v5796 = vmax.f32 %v5764, 0.0
        %v5797 = vmax.f32 %v5765, 0.0
        %v5798 = vmax.f32 %v5766, 0.0
        %v5799 = vpack.c.bf16 %v5767, %v5767
        %v5800 = vpack.c.bf16 %v5768, %v5768
        %v5801 = vpack.c.bf16 %v5769, %v5769
        %v5802 = vpack.c.bf16 %v5770, %v5770
        %v5803 = vpack.c.bf16 %v5771, %v5771
        %v5804 = vpack.c.bf16 %v5772, %v5772
        %v5805 = vpack.c.bf16 %v5773, %v5773
        %v5806 = vpack.c.bf16 %v5774, %v5774
        %v5807 = vpack.c.bf16 %v5775, %v5775
        %v5808 = vpack.c.bf16 %v5776, %v5776
        %v5809 = vpack.c.bf16 %v5777, %v5777
        %v5810 = vpack.c.bf16 %v5778, %v5778
        %v5811 = vpack.c.bf16 %v5779, %v5779
        %v5812 = vpack.c.bf16 %v5780, %v5780
        %v5813 = vpack.c.bf16 %v5781, %v5781
        %v5814 = vpack.c.bf16 %v5782, %v5782
        %v5815 = vpack.c.bf16 %v5783, %v5783
        %v5816 = vpack.c.bf16 %v5784, %v5784
        %v5817 = vpack.c.bf16 %v5785, %v5785
        %v5818 = vpack.c.bf16 %v5786, %v5786
        %v5819 = vpack.c.bf16 %v5787, %v5787
        %v5820 = vpack.c.bf16 %v5788, %v5788
        %v5821 = vpack.c.bf16 %v5789, %v5789
        %v5822 = vpack.c.bf16 %v5790, %v5790
        %v5823 = vpack.c.bf16 %v5791, %v5791
        %v5824 = vpack.c.bf16 %v5792, %v5792
        %v5825 = vpack.c.bf16 %v5793, %v5793
        %v5826 = vpack.c.bf16 %v5794, %v5794
        %v5827 = vpack.c.bf16 %v5795, %v5795
        %v5828 = vpack.c.bf16 %v5796, %v5796
        %v5829 = vpack.c.bf16 %v5797, %v5797
        %v5830 = vpack.c.bf16 %v5798, %v5798
        %v5832 = vshrl.u32 %v5799, 16
        %v5834 = vrot.slane %v5832, 7
        %v5835 = vshll.u32 %v5799, 16
        %v5837 = vor.u32 %v5834, %v5835
        %v5838 = vrot.slane %v5834, 4
        %v5840 = vshrl.u32 %v5800, 16
        %v5842 = vrot.slane %v5840, 7
        %v5843 = vshll.u32 %v5800, 16
        %v5845 = vor.u32 %v5842, %v5843
        %v5846 = vsel %vm321, %v5838, %v5845
        %v5847 = vrot.slane %v5842, 4
        %v5849 = vshrl.u32 %v5801, 16
        %v5851 = vrot.slane %v5849, 7
        %v5852 = vshll.u32 %v5801, 16
        %v5854 = vor.u32 %v5851, %v5852
        %v5855 = vrot.slane %v5851, 4
        %v5857 = vshrl.u32 %v5802, 16
        %v5859 = vrot.slane %v5857, 7
        %v5860 = vshll.u32 %v5802, 16
        %v5862 = vor.u32 %v5859, %v5860
        %v5863 = vsel %vm321, %v5855, %v5862
        %v5864 = vrot.slane %v5859, 4
        %v5866 = vshrl.u32 %v5803, 16
        %v5868 = vrot.slane %v5866, 7
        %v5869 = vshll.u32 %v5803, 16
        %v5871 = vor.u32 %v5868, %v5869
        %v5872 = vrot.slane %v5868, 4
        %v5874 = vshrl.u32 %v5804, 16
        %v5876 = vrot.slane %v5874, 7
        %v5877 = vshll.u32 %v5804, 16
        %v5879 = vor.u32 %v5876, %v5877
        %v5880 = vsel %vm321, %v5872, %v5879
        %v5881 = vrot.slane %v5876, 4
        %v5883 = vshrl.u32 %v5805, 16
        %v5885 = vrot.slane %v5883, 7
        %v5886 = vshll.u32 %v5805, 16
        %v5888 = vor.u32 %v5885, %v5886
        %v5889 = vrot.slane %v5885, 4
        %v5891 = vshrl.u32 %v5806, 16
        %v5893 = vrot.slane %v5891, 7
        %v5894 = vshll.u32 %v5806, 16
        %v5896 = vor.u32 %v5893, %v5894
        %v5897 = vsel %vm321, %v5889, %v5896
        %v5898 = vrot.slane %v5893, 4
        %v5900 = vshrl.u32 %v5807, 16
        %v5902 = vrot.slane %v5900, 7
        %v5903 = vshll.u32 %v5807, 16
        %v5905 = vor.u32 %v5902, %v5903
        %v5906 = vrot.slane %v5902, 4
        %v5908 = vshrl.u32 %v5808, 16
        %v5910 = vrot.slane %v5908, 7
        %v5911 = vshll.u32 %v5808, 16
        %v5913 = vor.u32 %v5910, %v5911
        %v5914 = vsel %vm321, %v5906, %v5913
        %v5915 = vrot.slane %v5910, 4
        %v5917 = vshrl.u32 %v5809, 16
        %v5919 = vrot.slane %v5917, 7
        %v5920 = vshll.u32 %v5809, 16
        %v5922 = vor.u32 %v5919, %v5920
        %v5923 = vrot.slane %v5919, 4
        %v5925 = vshrl.u32 %v5810, 16
        %v5927 = vrot.slane %v5925, 7
        %v5928 = vshll.u32 %v5810, 16
        %v5930 = vor.u32 %v5927, %v5928
        %v5931 = vsel %vm321, %v5923, %v5930
        %v5932 = vrot.slane %v5927, 4
        %v5934 = vshrl.u32 %v5811, 16
        %v5936 = vrot.slane %v5934, 7
        %v5937 = vshll.u32 %v5811, 16
        %v5939 = vor.u32 %v5936, %v5937
        %v5940 = vrot.slane %v5936, 4
        %v5942 = vshrl.u32 %v5812, 16
        %v5944 = vrot.slane %v5942, 7
        %v5945 = vshll.u32 %v5812, 16
        %v5947 = vor.u32 %v5944, %v5945
        %v5948 = vsel %vm321, %v5940, %v5947
        %v5949 = vrot.slane %v5944, 4
        %v5951 = vshrl.u32 %v5813, 16
        %v5953 = vrot.slane %v5951, 7
        %v5954 = vshll.u32 %v5813, 16
        %v5956 = vor.u32 %v5953, %v5954
        %v5957 = vrot.slane %v5953, 4
        %v5959 = vshrl.u32 %v5814, 16
        %v5961 = vrot.slane %v5959, 7
        %v5962 = vshll.u32 %v5814, 16
        %v5964 = vor.u32 %v5961, %v5962
        %v5965 = vsel %vm321, %v5957, %v5964
        %v5966 = vrot.slane %v5961, 4
        %v5968 = vshrl.u32 %v5815, 16
        %v5970 = vrot.slane %v5968, 7
        %v5971 = vshll.u32 %v5815, 16
        %v5973 = vor.u32 %v5970, %v5971
        %v5974 = vrot.slane %v5970, 4
        %v5976 = vshrl.u32 %v5816, 16
        %v5978 = vrot.slane %v5976, 7
        %v5979 = vshll.u32 %v5816, 16
        %v5981 = vor.u32 %v5978, %v5979
        %v5982 = vsel %vm321, %v5974, %v5981
        %v5983 = vrot.slane %v5978, 4
        %v5985 = vshrl.u32 %v5817, 16
        %v5987 = vrot.slane %v5985, 7
        %v5988 = vshll.u32 %v5817, 16
        %v5990 = vor.u32 %v5987, %v5988
        %v5991 = vrot.slane %v5987, 4
        %v5993 = vshrl.u32 %v5818, 16
        %v5995 = vrot.slane %v5993, 7
        %v5996 = vshll.u32 %v5818, 16
        %v5998 = vor.u32 %v5995, %v5996
        %v5999 = vsel %vm321, %v5991, %v5998
        %v6000 = vrot.slane %v5995, 4
        %v6002 = vshrl.u32 %v5819, 16
        %v6004 = vrot.slane %v6002, 7
        %v6005 = vshll.u32 %v5819, 16
        %v6007 = vor.u32 %v6004, %v6005
        %v6008 = vrot.slane %v6004, 4
        %v6010 = vshrl.u32 %v5820, 16
        %v6012 = vrot.slane %v6010, 7
        %v6013 = vshll.u32 %v5820, 16
        %v6015 = vor.u32 %v6012, %v6013
        %v6016 = vsel %vm321, %v6008, %v6015
        %v6017 = vrot.slane %v6012, 4
        %v6019 = vshrl.u32 %v5821, 16
        %v6021 = vrot.slane %v6019, 7
        %v6022 = vshll.u32 %v5821, 16
        %v6024 = vor.u32 %v6021, %v6022
        %v6025 = vrot.slane %v6021, 4
        %v6027 = vshrl.u32 %v5822, 16
        %v6029 = vrot.slane %v6027, 7
        %v6030 = vshll.u32 %v5822, 16
        %v6032 = vor.u32 %v6029, %v6030
        %v6033 = vsel %vm321, %v6025, %v6032
        %v6034 = vrot.slane %v6029, 4
        %v6036 = vshrl.u32 %v5823, 16
        %v6038 = vrot.slane %v6036, 7
        %v6039 = vshll.u32 %v5823, 16
        %v6041 = vor.u32 %v6038, %v6039
        %v6042 = vrot.slane %v6038, 4
        %v6044 = vshrl.u32 %v5824, 16
        %v6046 = vrot.slane %v6044, 7
        %v6047 = vshll.u32 %v5824, 16
        %v6049 = vor.u32 %v6046, %v6047
        %v6050 = vsel %vm321, %v6042, %v6049
        %v6051 = vrot.slane %v6046, 4
        %v6053 = vshrl.u32 %v5825, 16
        %v6055 = vrot.slane %v6053, 7
        %v6056 = vshll.u32 %v5825, 16
        %v6058 = vor.u32 %v6055, %v6056
        %v6059 = vrot.slane %v6055, 4
        %v6061 = vshrl.u32 %v5826, 16
        %v6063 = vrot.slane %v6061, 7
        %v6064 = vshll.u32 %v5826, 16
        %v6066 = vor.u32 %v6063, %v6064
        %v6067 = vsel %vm321, %v6059, %v6066
        %v6068 = vrot.slane %v6063, 4
        %v6070 = vshrl.u32 %v5827, 16
        %v6072 = vrot.slane %v6070, 7
        %v6073 = vshll.u32 %v5827, 16
        %v6075 = vor.u32 %v6072, %v6073
        %v6076 = vrot.slane %v6072, 4
        %v6078 = vshrl.u32 %v5828, 16
        %v6080 = vrot.slane %v6078, 7
        %v6081 = vshll.u32 %v5828, 16
        %v6083 = vor.u32 %v6080, %v6081
        %v6084 = vsel %vm321, %v6076, %v6083
        %v6085 = vrot.slane %v6080, 4
        %v6087 = vshrl.u32 %v5829, 16
        %v6089 = vrot.slane %v6087, 7
        %v6090 = vshll.u32 %v5829, 16
        %v6092 = vor.u32 %v6089, %v6090
        %v6093 = vrot.slane %v6089, 4
        %v6095 = vshrl.u32 %v5830, 16
        %v6097 = vrot.slane %v6095, 7
        %v6098 = vshll.u32 %v5830, 16
        %v6100 = vor.u32 %v6097, %v6098
        %v6101 = vsel %vm321, %v6093, %v6100
        %v6102 = vrot.slane %v6097, 4
        %v6151 = vld [vmem:[%s2479] sm:$0xf]
        %v6152 = vsel %vm645, %v5837, %v6151
        %6153 = vst [vmem:[%s2479] sm:$0xf] %v6152
        %6154 = vst.msk [vmem:[%s2479 + $0x4] sm:$0xf] %vm145, %v5846
        %v6155 = vld [vmem:[%s2479 + $0x8] sm:$0x1]
        %v6156 = vsel %vm651, %v5847, %v6155
        %6157 = vst [vmem:[%s2479 + $0x8] sm:$0x1] %v6156
        %v6158 = vld [vmem:[%s2479 + $0xc] sm:$0xf]
        %v6159 = vsel %vm645, %v5854, %v6158
        %6160 = vst [vmem:[%s2479 + $0xc] sm:$0xf] %v6159
        %6161 = vst.msk [vmem:[%s2479 + $0x10] sm:$0xf] %vm145, %v5863
        %v6162 = vld [vmem:[%s2479 + $0x14] sm:$0x1]
        %v6163 = vsel %vm651, %v5864, %v6162
        %6164 = vst [vmem:[%s2479 + $0x14] sm:$0x1] %v6163
        %v6165 = vld [vmem:[%s2479 + $0x18] sm:$0xf]
        %v6166 = vsel %vm645, %v5871, %v6165
        %6167 = vst [vmem:[%s2479 + $0x18] sm:$0xf] %v6166
        %6168 = vst.msk [vmem:[%s2479 + $0x1c] sm:$0xf] %vm145, %v5880
        %v6169 = vld [vmem:[%s2479 + $0x20] sm:$0x1]
        %v6170 = vsel %vm651, %v5881, %v6169
        %6171 = vst [vmem:[%s2479 + $0x20] sm:$0x1] %v6170
        %v6172 = vld [vmem:[%s2479 + $0x24] sm:$0xf]
        %v6173 = vsel %vm645, %v5888, %v6172
        %6174 = vst [vmem:[%s2479 + $0x24] sm:$0xf] %v6173
        %6175 = vst.msk [vmem:[%s2479 + $0x28] sm:$0xf] %vm145, %v5897
        %v6176 = vld [vmem:[%s2479 + $0x2c] sm:$0x1]
        %v6177 = vsel %vm651, %v5898, %v6176
        %6178 = vst [vmem:[%s2479 + $0x2c] sm:$0x1] %v6177
        %v6179 = vld [vmem:[%s2479 + $0x30] sm:$0xf]
        %v6180 = vsel %vm645, %v5905, %v6179
        %6181 = vst [vmem:[%s2479 + $0x30] sm:$0xf] %v6180
        %6182 = vst.msk [vmem:[%s2479 + $0x34] sm:$0xf] %vm145, %v5914
        %v6183 = vld [vmem:[%s2479 + $0x38] sm:$0x1]
        %v6184 = vsel %vm651, %v5915, %v6183
        %6185 = vst [vmem:[%s2479 + $0x38] sm:$0x1] %v6184
        %v6186 = vld [vmem:[%s2479 + $0x3c] sm:$0xf]
        %v6187 = vsel %vm645, %v5922, %v6186
        %6188 = vst [vmem:[%s2479 + $0x3c] sm:$0xf] %v6187
        %6189 = vst.msk [vmem:[%s2479 + $0x40] sm:$0xf] %vm145, %v5931
        %v6190 = vld [vmem:[%s2479 + $0x44] sm:$0x1]
        %v6191 = vsel %vm651, %v5932, %v6190
        %6192 = vst [vmem:[%s2479 + $0x44] sm:$0x1] %v6191
        %v6193 = vld [vmem:[%s2479 + $0x48] sm:$0xf]
        %v6194 = vsel %vm645, %v5939, %v6193
        %6195 = vst [vmem:[%s2479 + $0x48] sm:$0xf] %v6194
        %6196 = vst.msk [vmem:[%s2479 + $0x4c] sm:$0xf] %vm145, %v5948
        %v6197 = vld [vmem:[%s2479 + $0x50] sm:$0x1]
        %v6198 = vsel %vm651, %v5949, %v6197
        %6199 = vst [vmem:[%s2479 + $0x50] sm:$0x1] %v6198
        %v6200 = vld [vmem:[%s2479 + $0x54] sm:$0xf]
        %v6201 = vsel %vm645, %v5956, %v6200
        %6202 = vst [vmem:[%s2479 + $0x54] sm:$0xf] %v6201
        %6203 = vst.msk [vmem:[%s2479 + $0x58] sm:$0xf] %vm145, %v5965
        %v6204 = vld [vmem:[%s2479 + $0x5c] sm:$0x1]
        %v6205 = vsel %vm651, %v5966, %v6204
        %6206 = vst [vmem:[%s2479 + $0x5c] sm:$0x1] %v6205
        %v6207 = vld [vmem:[%s2479 + $0x60] sm:$0xf]
        %v6208 = vsel %vm645, %v5973, %v6207
        %6209 = vst [vmem:[%s2479 + $0x60] sm:$0xf] %v6208
        %6210 = vst.msk [vmem:[%s2479 + $0x64] sm:$0xf] %vm145, %v5982
        %v6211 = vld [vmem:[%s2479 + $0x68] sm:$0x1]
        %v6212 = vsel %vm651, %v5983, %v6211
        %6213 = vst [vmem:[%s2479 + $0x68] sm:$0x1] %v6212
        %v6214 = vld [vmem:[%s2479 + $0x6c] sm:$0xf]
        %v6215 = vsel %vm645, %v5990, %v6214
        %6216 = vst [vmem:[%s2479 + $0x6c] sm:$0xf] %v6215
        %6217 = vst.msk [vmem:[%s2479 + $0x70] sm:$0xf] %vm145, %v5999
        %v6218 = vld [vmem:[%s2479 + $0x74] sm:$0x1]
        %v6219 = vsel %vm651, %v6000, %v6218
        %6220 = vst [vmem:[%s2479 + $0x74] sm:$0x1] %v6219
        %v6221 = vld [vmem:[%s2479 + $0x78] sm:$0xf]
        %v6222 = vsel %vm645, %v6007, %v6221
        %6223 = vst [vmem:[%s2479 + $0x78] sm:$0xf] %v6222
        %6224 = vst.msk [vmem:[%s2479 + $0x7c] sm:$0xf] %vm145, %v6016
        %v6225 = vld [vmem:[%s2479 + $0x80] sm:$0x1]
        %v6226 = vsel %vm651, %v6017, %v6225
        %6227 = vst [vmem:[%s2479 + $0x80] sm:$0x1] %v6226
        %v6228 = vld [vmem:[%s2479 + $0x84] sm:$0xf]
        %v6229 = vsel %vm645, %v6024, %v6228
        %6230 = vst [vmem:[%s2479 + $0x84] sm:$0xf] %v6229
        %6231 = vst.msk [vmem:[%s2479 + $0x88] sm:$0xf] %vm145, %v6033
        %v6232 = vld [vmem:[%s2479 + $0x8c] sm:$0x1]
        %v6233 = vsel %vm651, %v6034, %v6232
        %6234 = vst [vmem:[%s2479 + $0x8c] sm:$0x1] %v6233
        %v6235 = vld [vmem:[%s2479 + $0x90] sm:$0xf]
        %v6236 = vsel %vm645, %v6041, %v6235
        %6237 = vst [vmem:[%s2479 + $0x90] sm:$0xf] %v6236
        %6238 = vst.msk [vmem:[%s2479 + $0x94] sm:$0xf] %vm145, %v6050
        %v6239 = vld [vmem:[%s2479 + $0x98] sm:$0x1]
        %v6240 = vsel %vm651, %v6051, %v6239
        %6241 = vst [vmem:[%s2479 + $0x98] sm:$0x1] %v6240
        %v6242 = vld [vmem:[%s2479 + $0x9c] sm:$0xf]
        %v6243 = vsel %vm645, %v6058, %v6242
        %6244 = vst [vmem:[%s2479 + $0x9c] sm:$0xf] %v6243
        %6245 = vst.msk [vmem:[%s2479 + $0xa0] sm:$0xf] %vm145, %v6067
        %v6246 = vld [vmem:[%s2479 + $0xa4] sm:$0x1]
        %v6247 = vsel %vm651, %v6068, %v6246
        %6248 = vst [vmem:[%s2479 + $0xa4] sm:$0x1] %v6247
        %v6249 = vld [vmem:[%s2479 + $0xa8] sm:$0xf]
        %v6250 = vsel %vm645, %v6075, %v6249
        %6251 = vst [vmem:[%s2479 + $0xa8] sm:$0xf] %v6250
        %6252 = vst.msk [vmem:[%s2479 + $0xac] sm:$0xf] %vm145, %v6084
        %v6253 = vld [vmem:[%s2479 + $0xb0] sm:$0x1]
        %v6254 = vsel %vm651, %v6085, %v6253
        %6255 = vst [vmem:[%s2479 + $0xb0] sm:$0x1] %v6254
        %v6256 = vld [vmem:[%s2479 + $0xb4] sm:$0xf]
        %v6257 = vsel %vm645, %v6092, %v6256
        %6258 = vst [vmem:[%s2479 + $0xb4] sm:$0xf] %v6257
        %6259 = vst.msk [vmem:[%s2479 + $0xb8] sm:$0xf] %vm145, %v6101
        %v6260 = vld [vmem:[%s2479 + $0xbc] sm:$0x1]
        %v6261 = vsel %vm651, %v6102, %v6260
        %6262 = vst [vmem:[%s2479 + $0xbc] sm:$0x1] %v6261
      $region33: #{preprocess_forward.1} parent=27 // loop_footer
        %s2597 = sadd.s32 1, %s2593
      $region34: #{preprocess_forward.1} parent=27 // loop_footer_branch
        %2592 = sbr.rel target = $region30
      $region35: #{preprocess_forward.1} parent=27 // loop_exit
        _
      %s6263 = scalar_lea.vmem %s1, 3648
      %v6264 = vld [vmem:[%s6263] sm:$0xff]
      %v6265 = vld [vmem:[%s6263 + $0x8] sm:$0xff]
      %v6266 = vld [vmem:[%s6263 + $0x10] sm:$0xff]
      %v6267 = vld [vmem:[%s6263 + $0x18] sm:$0xff]
      %v6268 = vld [vmem:[%s6263 + $0x20] sm:$0xff]
      %v6269 = vld [vmem:[%s6263 + $0x28] sm:$0xff]
      %v6270 = vld [vmem:[%s6263 + $0x30] sm:$0xff]
      %v6271 = vld [vmem:[%s6263 + $0x38] sm:$0xff]
      %v6272 = vld [vmem:[%s6263 + $0x40] sm:$0xff]
      %v6273 = vld [vmem:[%s6263 + $0x48] sm:$0xff]
      %v6274 = vld [vmem:[%s6263 + $0x50] sm:$0xff]
      %v6275 = vld [vmem:[%s6263 + $0x58] sm:$0xff]
      %v6276 = vld [vmem:[%s6263 + $0x60] sm:$0xff]
      %v6277 = vld [vmem:[%s6263 + $0x68] sm:$0xff]
      %v6278 = vld [vmem:[%s6263 + $0x70] sm:$0xff]
      %v6279 = vld [vmem:[%s6263 + $0x78] sm:$0xff]
      %v6280 = vld [vmem:[%s6263 + $0x80] sm:$0xff]
      %v6281 = vld [vmem:[%s6263 + $0x88] sm:$0xff]
      %v6282 = vld [vmem:[%s6263 + $0x90] sm:$0xff]
      %v6283 = vld [vmem:[%s6263 + $0x98] sm:$0xff]
      %v6284 = vld [vmem:[%s6263 + $0xa0] sm:$0xff]
      %v6285 = vld [vmem:[%s6263 + $0xa8] sm:$0xff]
      %v6286 = vld [vmem:[%s6263 + $0xb0] sm:$0xff]
      %v6287 = vld [vmem:[%s6263 + $0xb8] sm:$0xff]
      %v6288 = vld [vmem:[#allocation3] sm:$0xf]
      %v6289 = vld [vmem:[#allocation3 + $0x4] sm:$0xf]
      %v6290 = vld [vmem:[#allocation3 + $0x8] sm:$0x1]
      %v6291 = vld [vmem:[#allocation3 + $0xc] sm:$0xf]
      %v6292 = vld [vmem:[#allocation3 + $0x10] sm:$0xf]
      %v6293 = vld [vmem:[#allocation3 + $0x14] sm:$0x1]
      %v6294 = vld [vmem:[#allocation3 + $0x18] sm:$0xf]
      %v6295 = vld [vmem:[#allocation3 + $0x1c] sm:$0xf]
      %v6296 = vld [vmem:[#allocation3 + $0x20] sm:$0x1]
      %v6297 = vld [vmem:[#allocation3 + $0x24] sm:$0xf]
      %v6298 = vld [vmem:[#allocation3 + $0x28] sm:$0xf]
      %v6299 = vld [vmem:[#allocation3 + $0x2c] sm:$0x1]
      %v6300 = vld [vmem:[#allocation3 + $0x30] sm:$0xf]
      %v6301 = vld [vmem:[#allocation3 + $0x34] sm:$0xf]
      %v6302 = vld [vmem:[#allocation3 + $0x38] sm:$0x1]
      %v6303 = vld [vmem:[#allocation3 + $0x3c] sm:$0xf]
      %v6304 = vld [vmem:[#allocation3 + $0x40] sm:$0xf]
      %v6305 = vld [vmem:[#allocation3 + $0x44] sm:$0x1]
      %v6306 = vld [vmem:[#allocation3 + $0x48] sm:$0xf]
      %v6307 = vld [vmem:[#allocation3 + $0x4c] sm:$0xf]
      %v6308 = vld [vmem:[#allocation3 + $0x50] sm:$0x1]
      %v6309 = vld [vmem:[#allocation3 + $0x54] sm:$0xf]
      %v6310 = vld [vmem:[#allocation3 + $0x58] sm:$0xf]
      %v6311 = vld [vmem:[#allocation3 + $0x5c] sm:$0x1]
      %v6312 = vld [vmem:[#allocation3 + $0x60] sm:$0xf]
      %v6313 = vld [vmem:[#allocation3 + $0x64] sm:$0xf]
      %v6314 = vld [vmem:[#allocation3 + $0x68] sm:$0x1]
      %v6315 = vld [vmem:[#allocation3 + $0x6c] sm:$0xf]
      %v6316 = vld [vmem:[#allocation3 + $0x70] sm:$0xf]
      %v6317 = vld [vmem:[#allocation3 + $0x74] sm:$0x1]
      %v6318 = vld [vmem:[#allocation3 + $0x78] sm:$0xf]
      %v6319 = vld [vmem:[#allocation3 + $0x7c] sm:$0xf]
      %v6320 = vld [vmem:[#allocation3 + $0x80] sm:$0x1]
      %v6321 = vld [vmem:[#allocation3 + $0x84] sm:$0xf]
      %v6322 = vld [vmem:[#allocation3 + $0x88] sm:$0xf]
      %v6323 = vld [vmem:[#allocation3 + $0x8c] sm:$0x1]
      %v6324 = vld [vmem:[#allocation3 + $0x90] sm:$0xf]
      %v6325 = vld [vmem:[#allocation3 + $0x94] sm:$0xf]
      %v6326 = vld [vmem:[#allocation3 + $0x98] sm:$0x1]
      %v6327 = vld [vmem:[#allocation3 + $0x9c] sm:$0xf]
      %v6328 = vld [vmem:[#allocation3 + $0xa0] sm:$0xf]
      %v6329 = vld [vmem:[#allocation3 + $0xa4] sm:$0x1]
      %v6330 = vld [vmem:[#allocation3 + $0xa8] sm:$0xf]
      %v6331 = vld [vmem:[#allocation3 + $0xac] sm:$0xf]
      %v6332 = vld [vmem:[#allocation3 + $0xb0] sm:$0x1]
      %v6333 = vld [vmem:[#allocation3 + $0xb4] sm:$0xf]
      %v6334 = vld [vmem:[#allocation3 + $0xb8] sm:$0xf]
      %v6335 = vld [vmem:[#allocation3 + $0xbc] sm:$0x1]
      %v6336 = vld [vmem:[#allocation3 + $0xc0] sm:$0xf]
      %v6337 = vld [vmem:[#allocation3 + $0xc4] sm:$0xf]
      %v6338 = vld [vmem:[#allocation3 + $0xc8] sm:$0x1]
      %v6339 = vld [vmem:[#allocation3 + $0xcc] sm:$0xf]
      %v6340 = vld [vmem:[#allocation3 + $0xd0] sm:$0xf]
      %v6341 = vld [vmem:[#allocation3 + $0xd4] sm:$0x1]
      %v6378 = vunpack.c.l.b16 %v6288
      %v6379 = vunpack.c.l.b16 %v6289
      %v6380 = vunpack.c.l.b16 %v6291
      %v6381 = vunpack.c.l.b16 %v6292
      %v6382 = vunpack.c.l.b16 %v6294
      %v6383 = vunpack.c.l.b16 %v6295
      %v6384 = vunpack.c.l.b16 %v6297
      %v6385 = vunpack.c.l.b16 %v6298
      %v6386 = vunpack.c.l.b16 %v6300
      %v6387 = vunpack.c.l.b16 %v6301
      %v6388 = vunpack.c.l.b16 %v6303
      %v6389 = vunpack.c.l.b16 %v6304
      %v6390 = vunpack.c.l.b16 %v6306
      %v6391 = vunpack.c.l.b16 %v6307
      %v6392 = vunpack.c.l.b16 %v6309
      %v6393 = vunpack.c.l.b16 %v6310
      %v6394 = vunpack.c.l.b16 %v6312
      %v6395 = vunpack.c.l.b16 %v6313
      %v6396 = vunpack.c.l.b16 %v6315
      %v6397 = vunpack.c.l.b16 %v6316
      %v6398 = vunpack.c.l.b16 %v6318
      %v6399 = vunpack.c.l.b16 %v6319
      %v6400 = vunpack.c.l.b16 %v6321
      %v6401 = vunpack.c.l.b16 %v6322
      %v6402 = vunpack.c.l.b16 %v6324
      %v6403 = vunpack.c.l.b16 %v6325
      %v6404 = vunpack.c.l.b16 %v6327
      %v6405 = vunpack.c.l.b16 %v6328
      %v6406 = vunpack.c.l.b16 %v6330
      %v6407 = vunpack.c.l.b16 %v6331
      %v6408 = vunpack.c.l.b16 %v6333
      %v6409 = vunpack.c.l.b16 %v6334
      %v6410 = vunpack.c.l.b16 %v6336
      %v6411 = vunpack.c.l.b16 %v6337
      %v6412 = vunpack.c.l.b16 %v6339
      %v6413 = vunpack.c.l.b16 %v6340
      %v6414 = vpack.c.b16 %v6379, %v6378
      %v6415 = vpack.c.b16 %v6381, %v6380
      %v6416 = vpack.c.b16 %v6383, %v6382
      %v6417 = vpack.c.b16 %v6385, %v6384
      %v6418 = vpack.c.b16 %v6387, %v6386
      %v6419 = vpack.c.b16 %v6389, %v6388
      %v6420 = vpack.c.b16 %v6391, %v6390
      %v6421 = vpack.c.b16 %v6393, %v6392
      %v6422 = vpack.c.b16 %v6395, %v6394
      %v6423 = vpack.c.b16 %v6397, %v6396
      %v6424 = vpack.c.b16 %v6399, %v6398
      %v6425 = vpack.c.b16 %v6401, %v6400
      %v6426 = vpack.c.b16 %v6403, %v6402
      %v6427 = vpack.c.b16 %v6405, %v6404
      %v6428 = vpack.c.b16 %v6407, %v6406
      %v6429 = vpack.c.b16 %v6409, %v6408
      %v6430 = vpack.c.b16 %v6411, %v6410
      %v6431 = vpack.c.b16 %v6413, %v6412
      %v6450 = vunpack.c.l.b16 %v6290
      %v6451 = vunpack.c.l.b16 %v6293
      %v6452 = vunpack.c.l.b16 %v6296
      %v6453 = vunpack.c.l.b16 %v6299
      %v6454 = vunpack.c.l.b16 %v6302
      %v6455 = vunpack.c.l.b16 %v6305
      %v6456 = vunpack.c.l.b16 %v6308
      %v6457 = vunpack.c.l.b16 %v6311
      %v6458 = vunpack.c.l.b16 %v6314
      %v6459 = vunpack.c.l.b16 %v6317
      %v6460 = vunpack.c.l.b16 %v6320
      %v6461 = vunpack.c.l.b16 %v6323
      %v6462 = vunpack.c.l.b16 %v6326
      %v6463 = vunpack.c.l.b16 %v6329
      %v6464 = vunpack.c.l.b16 %v6332
      %v6465 = vunpack.c.l.b16 %v6335
      %v6466 = vunpack.c.l.b16 %v6338
      %v6467 = vunpack.c.l.b16 %v6341
      %v6468 = vpack.c.b16 %v6450, %v6450
      %v6469 = vpack.c.b16 %v6451, %v6451
      %v6470 = vpack.c.b16 %v6452, %v6452
      %v6471 = vpack.c.b16 %v6453, %v6453
      %v6472 = vpack.c.b16 %v6454, %v6454
      %v6473 = vpack.c.b16 %v6455, %v6455
      %v6474 = vpack.c.b16 %v6456, %v6456
      %v6475 = vpack.c.b16 %v6457, %v6457
      %v6476 = vpack.c.b16 %v6458, %v6458
      %v6477 = vpack.c.b16 %v6459, %v6459
      %v6478 = vpack.c.b16 %v6460, %v6460
      %v6479 = vpack.c.b16 %v6461, %v6461
      %v6480 = vpack.c.b16 %v6462, %v6462
      %v6481 = vpack.c.b16 %v6463, %v6463
      %v6482 = vpack.c.b16 %v6464, %v6464
      %v6483 = vpack.c.b16 %v6465, %v6465
      %v6484 = vpack.c.b16 %v6466, %v6466
      %v6485 = vpack.c.b16 %v6467, %v6467
      %v6487 = vshrl.u32 %v6414, 16
      %v6489 = vshll.u32 %v6414, 16
      %v6491 = vrot.slane %v6489, 1
      %v6492 = vor.u32 %v6487, %v6491
      %v6494 = vshll.u32 %v6468, 16
      %v6496 = vrot.slane %v6494, 1
      %v6497 = vsel %vm982, %v6492, %v6496
      %v6499 = vshrl.u32 %v6415, 16
      %v6501 = vshll.u32 %v6415, 16
      %v6503 = vrot.slane %v6501, 1
      %v6504 = vor.u32 %v6499, %v6503
      %v6506 = vshll.u32 %v6469, 16
      %v6508 = vrot.slane %v6506, 1
      %v6509 = vsel %vm982, %v6504, %v6508
      %v6511 = vshrl.u32 %v6416, 16
      %v6513 = vshll.u32 %v6416, 16
      %v6515 = vrot.slane %v6513, 1
      %v6516 = vor.u32 %v6511, %v6515
      %v6518 = vshll.u32 %v6470, 16
      %v6520 = vrot.slane %v6518, 1
      %v6521 = vsel %vm982, %v6516, %v6520
      %v6523 = vshrl.u32 %v6417, 16
      %v6525 = vshll.u32 %v6417, 16
      %v6527 = vrot.slane %v6525, 1
      %v6528 = vor.u32 %v6523, %v6527
      %v6530 = vshll.u32 %v6471, 16
      %v6532 = vrot.slane %v6530, 1
      %v6533 = vsel %vm982, %v6528, %v6532
      %v6535 = vshrl.u32 %v6418, 16
      %v6537 = vshll.u32 %v6418, 16
      %v6539 = vrot.slane %v6537, 1
      %v6540 = vor.u32 %v6535, %v6539
      %v6542 = vshll.u32 %v6472, 16
      %v6544 = vrot.slane %v6542, 1
      %v6545 = vsel %vm982, %v6540, %v6544
      %v6547 = vshrl.u32 %v6419, 16
      %v6549 = vshll.u32 %v6419, 16
      %v6551 = vrot.slane %v6549, 1
      %v6552 = vor.u32 %v6547, %v6551
      %v6554 = vshll.u32 %v6473, 16
      %v6556 = vrot.slane %v6554, 1
      %v6557 = vsel %vm982, %v6552, %v6556
      %v6559 = vshrl.u32 %v6420, 16
      %v6561 = vshll.u32 %v6420, 16
      %v6563 = vrot.slane %v6561, 1
      %v6564 = vor.u32 %v6559, %v6563
      %v6566 = vshll.u32 %v6474, 16
      %v6568 = vrot.slane %v6566, 1
      %v6569 = vsel %vm982, %v6564, %v6568
      %v6571 = vshrl.u32 %v6421, 16
      %v6573 = vshll.u32 %v6421, 16
      %v6575 = vrot.slane %v6573, 1
      %v6576 = vor.u32 %v6571, %v6575
      %v6578 = vshll.u32 %v6475, 16
      %v6580 = vrot.slane %v6578, 1
      %v6581 = vsel %vm982, %v6576, %v6580
      %v6583 = vshrl.u32 %v6422, 16
      %v6585 = vshll.u32 %v6422, 16
      %v6587 = vrot.slane %v6585, 1
      %v6588 = vor.u32 %v6583, %v6587
      %v6590 = vshll.u32 %v6476, 16
      %v6592 = vrot.slane %v6590, 1
      %v6593 = vsel %vm982, %v6588, %v6592
      %v6595 = vshrl.u32 %v6423, 16
      %v6597 = vshll.u32 %v6423, 16
      %v6599 = vrot.slane %v6597, 1
      %v6600 = vor.u32 %v6595, %v6599
      %v6602 = vshll.u32 %v6477, 16
      %v6604 = vrot.slane %v6602, 1
      %v6605 = vsel %vm982, %v6600, %v6604
      %v6607 = vshrl.u32 %v6424, 16
      %v6609 = vshll.u32 %v6424, 16
      %v6611 = vrot.slane %v6609, 1
      %v6612 = vor.u32 %v6607, %v6611
      %v6614 = vshll.u32 %v6478, 16
      %v6616 = vrot.slane %v6614, 1
      %v6617 = vsel %vm982, %v6612, %v6616
      %v6619 = vshrl.u32 %v6425, 16
      %v6621 = vshll.u32 %v6425, 16
      %v6623 = vrot.slane %v6621, 1
      %v6624 = vor.u32 %v6619, %v6623
      %v6626 = vshll.u32 %v6479, 16
      %v6628 = vrot.slane %v6626, 1
      %v6629 = vsel %vm982, %v6624, %v6628
      %v6631 = vshrl.u32 %v6426, 16
      %v6633 = vshll.u32 %v6426, 16
      %v6635 = vrot.slane %v6633, 1
      %v6636 = vor.u32 %v6631, %v6635
      %v6638 = vshll.u32 %v6480, 16
      %v6640 = vrot.slane %v6638, 1
      %v6641 = vsel %vm982, %v6636, %v6640
      %v6643 = vshrl.u32 %v6427, 16
      %v6645 = vshll.u32 %v6427, 16
      %v6647 = vrot.slane %v6645, 1
      %v6648 = vor.u32 %v6643, %v6647
      %v6650 = vshll.u32 %v6481, 16
      %v6652 = vrot.slane %v6650, 1
      %v6653 = vsel %vm982, %v6648, %v6652
      %v6655 = vshrl.u32 %v6428, 16
      %v6657 = vshll.u32 %v6428, 16
      %v6659 = vrot.slane %v6657, 1
      %v6660 = vor.u32 %v6655, %v6659
      %v6662 = vshll.u32 %v6482, 16
      %v6664 = vrot.slane %v6662, 1
      %v6665 = vsel %vm982, %v6660, %v6664
      %v6667 = vshrl.u32 %v6429, 16
      %v6669 = vshll.u32 %v6429, 16
      %v6671 = vrot.slane %v6669, 1
      %v6672 = vor.u32 %v6667, %v6671
      %v6674 = vshll.u32 %v6483, 16
      %v6676 = vrot.slane %v6674, 1
      %v6677 = vsel %vm982, %v6672, %v6676
      %v6679 = vshrl.u32 %v6430, 16
      %v6681 = vshll.u32 %v6430, 16
      %v6683 = vrot.slane %v6681, 1
      %v6684 = vor.u32 %v6679, %v6683
      %v6686 = vshll.u32 %v6484, 16
      %v6688 = vrot.slane %v6686, 1
      %v6689 = vsel %vm982, %v6684, %v6688
      %v6691 = vshrl.u32 %v6431, 16
      %v6693 = vshll.u32 %v6431, 16
      %v6695 = vrot.slane %v6693, 1
      %v6696 = vor.u32 %v6691, %v6695
      %v6698 = vshll.u32 %v6485, 16
      %v6700 = vrot.slane %v6698, 1
      %v6701 = vsel %vm982, %v6696, %v6700
      %6702 = vrot.lane.b32.xlu0 %v6497, 64
      %v6703 = vpop.permute.xlu0 %6702
      %6704 = vrot.lane.b32.xlu0 %v6509, 64
      %v6705 = vpop.permute.xlu0 %6704
      %6706 = vrot.lane.b32.xlu0 %v6521, 64
      %v6707 = vpop.permute.xlu0 %6706
      %6708 = vrot.lane.b32.xlu0 %v6533, 64
      %v6709 = vpop.permute.xlu0 %6708
      %6710 = vrot.lane.b32.xlu0 %v6545, 64
      %v6711 = vpop.permute.xlu0 %6710
      %6712 = vrot.lane.b32.xlu0 %v6557, 64
      %v6713 = vpop.permute.xlu0 %6712
      %6714 = vrot.lane.b32.xlu0 %v6569, 64
      %v6715 = vpop.permute.xlu0 %6714
      %6716 = vrot.lane.b32.xlu0 %v6581, 64
      %v6717 = vpop.permute.xlu0 %6716
      %6718 = vrot.lane.b32.xlu0 %v6593, 64
      %v6719 = vpop.permute.xlu0 %6718
      %6720 = vrot.lane.b32.xlu0 %v6605, 64
      %v6721 = vpop.permute.xlu0 %6720
      %6722 = vrot.lane.b32.xlu0 %v6617, 64
      %v6723 = vpop.permute.xlu0 %6722
      %6724 = vrot.lane.b32.xlu0 %v6629, 64
      %v6725 = vpop.permute.xlu0 %6724
      %6726 = vrot.lane.b32.xlu0 %v6641, 64
      %v6727 = vpop.permute.xlu0 %6726
      %6728 = vrot.lane.b32.xlu0 %v6653, 64
      %v6729 = vpop.permute.xlu0 %6728
      %6730 = vrot.lane.b32.xlu0 %v6665, 64
      %v6731 = vpop.permute.xlu0 %6730
      %6732 = vrot.lane.b32.xlu0 %v6677, 64
      %v6733 = vpop.permute.xlu0 %6732
      %6734 = vrot.lane.b32.xlu0 %v6689, 64
      %v6735 = vpop.permute.xlu0 %6734
      %6736 = vrot.lane.b32.xlu0 %v6701, 64
      %v6737 = vpop.permute.xlu0 %6736
      %v6738 = vrot.slane %v6414, 1
      %v6739 = vrot.slane %v6468, 1
      %v6740 = vsel %vm1235, %v6738, %v6739
      %v6741 = vrot.slane %v6415, 1
      %v6742 = vrot.slane %v6469, 1
      %v6743 = vsel %vm1235, %v6741, %v6742
      %v6744 = vrot.slane %v6416, 1
      %v6745 = vrot.slane %v6470, 1
      %v6746 = vsel %vm1235, %v6744, %v6745
      %v6747 = vrot.slane %v6417, 1
      %v6748 = vrot.slane %v6471, 1
      %v6749 = vsel %vm1235, %v6747, %v6748
      %v6750 = vrot.slane %v6418, 1
      %v6751 = vrot.slane %v6472, 1
      %v6752 = vsel %vm1235, %v6750, %v6751
      %v6753 = vrot.slane %v6419, 1
      %v6754 = vrot.slane %v6473, 1
      %v6755 = vsel %vm1235, %v6753, %v6754
      %v6756 = vrot.slane %v6420, 1
      %v6757 = vrot.slane %v6474, 1
      %v6758 = vsel %vm1235, %v6756, %v6757
      %v6759 = vrot.slane %v6421, 1
      %v6760 = vrot.slane %v6475, 1
      %v6761 = vsel %vm1235, %v6759, %v6760
      %v6762 = vrot.slane %v6422, 1
      %v6763 = vrot.slane %v6476, 1
      %v6764 = vsel %vm1235, %v6762, %v6763
      %v6765 = vrot.slane %v6423, 1
      %v6766 = vrot.slane %v6477, 1
      %v6767 = vsel %vm1235, %v6765, %v6766
      %v6768 = vrot.slane %v6424, 1
      %v6769 = vrot.slane %v6478, 1
      %v6770 = vsel %vm1235, %v6768, %v6769
      %v6771 = vrot.slane %v6425, 1
      %v6772 = vrot.slane %v6479, 1
      %v6773 = vsel %vm1235, %v6771, %v6772
      %v6774 = vrot.slane %v6426, 1
      %v6775 = vrot.slane %v6480, 1
      %v6776 = vsel %vm1235, %v6774, %v6775
      %v6777 = vrot.slane %v6427, 1
      %v6778 = vrot.slane %v6481, 1
      %v6779 = vsel %vm1235, %v6777, %v6778
      %v6780 = vrot.slane %v6428, 1
      %v6781 = vrot.slane %v6482, 1
      %v6782 = vsel %vm1235, %v6780, %v6781
      %v6783 = vrot.slane %v6429, 1
      %v6784 = vrot.slane %v6483, 1
      %v6785 = vsel %vm1235, %v6783, %v6784
      %v6786 = vrot.slane %v6430, 1
      %v6787 = vrot.slane %v6484, 1
      %v6788 = vsel %vm1235, %v6786, %v6787
      %v6789 = vrot.slane %v6431, 1
      %v6790 = vrot.slane %v6485, 1
      %v6791 = vsel %vm1235, %v6789, %v6790
      %v6793 = vsel %vm1290, %v6414, %v6703
      %v6796 = vsel %vm1290, %v6415, %v6705
      %v6799 = vsel %vm1290, %v6416, %v6707
      %v6802 = vsel %vm1290, %v6417, %v6709
      %v6805 = vsel %vm1290, %v6418, %v6711
      %v6808 = vsel %vm1290, %v6419, %v6713
      %v6811 = vsel %vm1290, %v6420, %v6715
      %v6814 = vsel %vm1290, %v6421, %v6717
      %v6817 = vsel %vm1290, %v6422, %v6719
      %v6820 = vsel %vm1290, %v6423, %v6721
      %v6823 = vsel %vm1290, %v6424, %v6723
      %v6826 = vsel %vm1290, %v6425, %v6725
      %v6829 = vsel %vm1290, %v6426, %v6727
      %v6832 = vsel %vm1290, %v6427, %v6729
      %v6835 = vsel %vm1290, %v6428, %v6731
      %v6838 = vsel %vm1290, %v6429, %v6733
      %v6841 = vsel %vm1290, %v6430, %v6735
      %v6844 = vsel %vm1290, %v6431, %v6737
      %v6870 = vunpack.c.l.b16 %v6264
      %v6871 = vunpack.c.h.b16 %v6264
      %v6872 = vunpack.c.l.b16 %v6265
      %v6873 = vunpack.c.h.b16 %v6265
      %v6874 = vunpack.c.l.b16 %v6266
      %v6875 = vunpack.c.h.b16 %v6266
      %v6876 = vunpack.c.l.b16 %v6267
      %v6877 = vunpack.c.h.b16 %v6267
      %v6878 = vunpack.c.l.b16 %v6268
      %v6879 = vunpack.c.h.b16 %v6268
      %v6880 = vunpack.c.l.b16 %v6269
      %v6881 = vunpack.c.h.b16 %v6269
      %v6882 = vunpack.c.l.b16 %v6270
      %v6883 = vunpack.c.h.b16 %v6270
      %v6884 = vunpack.c.l.b16 %v6271
      %v6885 = vunpack.c.h.b16 %v6271
      %v6886 = vunpack.c.l.b16 %v6272
      %v6887 = vunpack.c.h.b16 %v6272
      %v6888 = vunpack.c.l.b16 %v6273
      %v6889 = vunpack.c.h.b16 %v6273
      %v6890 = vunpack.c.l.b16 %v6274
      %v6891 = vunpack.c.h.b16 %v6274
      %v6892 = vunpack.c.l.b16 %v6275
      %v6893 = vunpack.c.h.b16 %v6275
      %v6894 = vunpack.c.l.b16 %v6276
      %v6895 = vunpack.c.h.b16 %v6276
      %v6896 = vunpack.c.l.b16 %v6277
      %v6897 = vunpack.c.h.b16 %v6277
      %v6898 = vunpack.c.l.b16 %v6278
      %v6899 = vunpack.c.h.b16 %v6278
      %v6900 = vunpack.c.l.b16 %v6279
      %v6901 = vunpack.c.h.b16 %v6279
      %v6902 = vunpack.c.l.b16 %v6280
      %v6903 = vunpack.c.h.b16 %v6280
      %v6904 = vunpack.c.l.b16 %v6281
      %v6905 = vunpack.c.h.b16 %v6281
      %v6906 = vunpack.c.l.b16 %v6282
      %v6907 = vunpack.c.h.b16 %v6282
      %v6908 = vunpack.c.l.b16 %v6283
      %v6909 = vunpack.c.h.b16 %v6283
      %v6910 = vunpack.c.l.b16 %v6284
      %v6911 = vunpack.c.h.b16 %v6284
      %v6912 = vunpack.c.l.b16 %v6285
      %v6913 = vunpack.c.h.b16 %v6285
      %v6914 = vunpack.c.l.b16 %v6286
      %v6915 = vunpack.c.h.b16 %v6286
      %v6916 = vunpack.c.l.b16 %v6287
      %v6917 = vunpack.c.h.b16 %v6287
      %v6918 = vpack.c.b16 %v6872, %v6870
      %v6919 = vpack.c.b16 %v6873, %v6871
      %v6920 = vpack.c.b16 %v6876, %v6874
      %v6921 = vpack.c.b16 %v6877, %v6875
      %v6922 = vpack.c.b16 %v6880, %v6878
      %v6923 = vpack.c.b16 %v6881, %v6879
      %v6924 = vpack.c.b16 %v6884, %v6882
      %v6925 = vpack.c.b16 %v6885, %v6883
      %v6926 = vpack.c.b16 %v6888, %v6886
      %v6927 = vpack.c.b16 %v6889, %v6887
      %v6928 = vpack.c.b16 %v6892, %v6890
      %v6929 = vpack.c.b16 %v6893, %v6891
      %v6930 = vpack.c.b16 %v6896, %v6894
      %v6931 = vpack.c.b16 %v6897, %v6895
      %v6932 = vpack.c.b16 %v6900, %v6898
      %v6933 = vpack.c.b16 %v6901, %v6899
      %v6934 = vpack.c.b16 %v6904, %v6902
      %v6935 = vpack.c.b16 %v6905, %v6903
      %v6936 = vpack.c.b16 %v6908, %v6906
      %v6937 = vpack.c.b16 %v6909, %v6907
      %v6938 = vpack.c.b16 %v6912, %v6910
      %v6939 = vpack.c.b16 %v6913, %v6911
      %v6940 = vpack.c.b16 %v6916, %v6914
      %v6941 = vpack.c.b16 %v6917, %v6915
      %v6967 = vsel %vm1290, %v6740, 0
      %v6970 = vsel %vm1290, %v6743, 0
      %v6973 = vsel %vm1290, %v6746, 0
      %v6976 = vsel %vm1290, %v6749, 0
      %v6979 = vsel %vm1290, %v6752, 0
      %v6982 = vsel %vm1290, %v6755, 0
      %v6985 = vsel %vm1290, %v6758, 0
      %v6988 = vsel %vm1290, %v6761, 0
      %v6991 = vsel %vm1290, %v6764, 0
      %v6994 = vsel %vm1290, %v6767, 0
      %v6997 = vsel %vm1290, %v6770, 0
      %v7000 = vsel %vm1290, %v6773, 0
      %v7003 = vsel %vm1290, %v6776, 0
      %v7006 = vsel %vm1290, %v6779, 0
      %v7009 = vsel %vm1290, %v6782, 0
      %v7012 = vsel %vm1290, %v6785, 0
      %v7015 = vsel %vm1290, %v6788, 0
      %v7018 = vsel %vm1290, %v6791, 0
      %7020 = vmatpush.bf16.msra.mxu0 %v6932
      %7021 = vmatpush.bf16.msra.mxu0 %v6930
      %7022 = vmatpush.bf16.msra.mxu0 %v6928
      %7023 = vmatpush.bf16.msra.mxu0 %v6926
      %7024 = vmatpush.bf16.msra.mxu0 %v6924
      %7025 = vmatpush.bf16.msra.mxu0 %v6922
      %7026 = vmatpush.bf16.msra.mxu0 %v6920
      %7027 = vmatpush.bf16.msra.mxu0 %v6918
      %7028 = vmatmul.bf16.gmra.mxu0 %v6793
      %v7029 = vpop.f32.mrf.mxu0
      %v7030 = vadd.f32 0.0, %v7029
      %v7031 = vpop.f32.mrf.mxu0
      %v7032 = vadd.f32 0.0, %v7031
      %7033 = vmatmul.bf16.gmra.mxu0 %v6796
      %v7034 = vpop.f32.mrf.mxu0
      %v7035 = vadd.f32 0.0, %v7034
      %v7036 = vpop.f32.mrf.mxu0
      %v7037 = vadd.f32 0.0, %v7036
      %7038 = vmatmul.bf16.gmra.mxu0 %v6799
      %v7039 = vpop.f32.mrf.mxu0
      %v7040 = vadd.f32 0.0, %v7039
      %v7041 = vpop.f32.mrf.mxu0
      %v7042 = vadd.f32 0.0, %v7041
      %7043 = vmatmul.bf16.gmra.mxu0 %v6802
      %v7044 = vpop.f32.mrf.mxu0
      %v7045 = vadd.f32 0.0, %v7044
      %v7046 = vpop.f32.mrf.mxu0
      %v7047 = vadd.f32 0.0, %v7046
      %7048 = vmatmul.bf16.gmra.mxu0 %v6805
      %v7049 = vpop.f32.mrf.mxu0
      %v7050 = vadd.f32 0.0, %v7049
      %v7051 = vpop.f32.mrf.mxu0
      %v7052 = vadd.f32 0.0, %v7051
      %7053 = vmatmul.bf16.gmra.mxu0 %v6808
      %v7054 = vpop.f32.mrf.mxu0
      %v7055 = vadd.f32 0.0, %v7054
      %v7056 = vpop.f32.mrf.mxu0
      %v7057 = vadd.f32 0.0, %v7056
      %7058 = vmatmul.bf16.gmra.mxu0 %v6811
      %v7059 = vpop.f32.mrf.mxu0
      %v7060 = vadd.f32 0.0, %v7059
      %v7061 = vpop.f32.mrf.mxu0
      %v7062 = vadd.f32 0.0, %v7061
      %7063 = vmatmul.bf16.gmra.mxu0 %v6814
      %v7064 = vpop.f32.mrf.mxu0
      %v7065 = vadd.f32 0.0, %v7064
      %v7066 = vpop.f32.mrf.mxu0
      %v7067 = vadd.f32 0.0, %v7066
      %7068 = vmatmul.bf16.gmra.mxu0 %v6817
      %v7069 = vpop.f32.mrf.mxu0
      %v7070 = vadd.f32 0.0, %v7069
      %v7071 = vpop.f32.mrf.mxu0
      %v7072 = vadd.f32 0.0, %v7071
      %7073 = vmatmul.bf16.gmra.mxu0 %v6820
      %v7074 = vpop.f32.mrf.mxu0
      %v7075 = vadd.f32 0.0, %v7074
      %v7076 = vpop.f32.mrf.mxu0
      %v7077 = vadd.f32 0.0, %v7076
      %7078 = vmatmul.bf16.gmra.mxu0 %v6823
      %v7079 = vpop.f32.mrf.mxu0
      %v7080 = vadd.f32 0.0, %v7079
      %v7081 = vpop.f32.mrf.mxu0
      %v7082 = vadd.f32 0.0, %v7081
      %7083 = vmatmul.bf16.gmra.mxu0 %v6826
      %v7084 = vpop.f32.mrf.mxu0
      %v7085 = vadd.f32 0.0, %v7084
      %v7086 = vpop.f32.mrf.mxu0
      %v7087 = vadd.f32 0.0, %v7086
      %7088 = vmatmul.bf16.gmra.mxu0 %v6829
      %v7089 = vpop.f32.mrf.mxu0
      %v7090 = vadd.f32 0.0, %v7089
      %v7091 = vpop.f32.mrf.mxu0
      %v7092 = vadd.f32 0.0, %v7091
      %7093 = vmatmul.bf16.gmra.mxu0 %v6832
      %v7094 = vpop.f32.mrf.mxu0
      %v7095 = vadd.f32 0.0, %v7094
      %v7096 = vpop.f32.mrf.mxu0
      %v7097 = vadd.f32 0.0, %v7096
      %7098 = vmatmul.bf16.gmra.mxu0 %v6835
      %v7099 = vpop.f32.mrf.mxu0
      %v7100 = vadd.f32 0.0, %v7099
      %v7101 = vpop.f32.mrf.mxu0
      %v7102 = vadd.f32 0.0, %v7101
      %7103 = vmatmul.bf16.gmra.mxu0 %v6838
      %v7104 = vpop.f32.mrf.mxu0
      %v7105 = vadd.f32 0.0, %v7104
      %v7106 = vpop.f32.mrf.mxu0
      %v7107 = vadd.f32 0.0, %v7106
      %7108 = vmatmul.bf16.gmra.mxu0 %v6841
      %v7109 = vpop.f32.mrf.mxu0
      %v7110 = vadd.f32 0.0, %v7109
      %v7111 = vpop.f32.mrf.mxu0
      %v7112 = vadd.f32 0.0, %v7111
      %7113 = vmatmul.bf16.gmra.mxu0 %v6844
      %v7114 = vpop.f32.mrf.mxu0
      %v7115 = vpop.f32.mrf.mxu0
      %7116 = vdwg.mxu0
      %7117 = vmatpush.bf16.msra.mxu0 0
      %7118 = vmatpush.bf16.msra.mxu0 0
      %7119 = vmatpush.bf16.msra.mxu0 0
      %7120 = vmatpush.bf16.msra.mxu0 0
      %7121 = vmatpush.bf16.msra.mxu0 %v6940
      %7122 = vmatpush.bf16.msra.mxu0 %v6938
      %7123 = vmatpush.bf16.msra.mxu0 %v6936
      %7124 = vmatpush.bf16.msra.mxu0 %v6934
      %7125 = vmatmul.bf16.gmra.mxu0 %v6967
      %v7126 = vpop.f32.mrf.mxu0
      %v7127 = vadd.f32 %v7030, %v7126
      %v7128 = vpop.f32.mrf.mxu0
      %v7129 = vadd.f32 %v7032, %v7128
      %7130 = vmatmul.bf16.gmra.mxu0 %v6970
      %v7131 = vpop.f32.mrf.mxu0
      %v7132 = vadd.f32 %v7035, %v7131
      %v7133 = vpop.f32.mrf.mxu0
      %v7134 = vadd.f32 %v7037, %v7133
      %7135 = vmatmul.bf16.gmra.mxu0 %v6973
      %v7136 = vpop.f32.mrf.mxu0
      %v7137 = vadd.f32 %v7040, %v7136
      %v7138 = vpop.f32.mrf.mxu0
      %v7139 = vadd.f32 %v7042, %v7138
      %7140 = vmatmul.bf16.gmra.mxu0 %v6976
      %v7141 = vpop.f32.mrf.mxu0
      %v7142 = vadd.f32 %v7045, %v7141
      %v7143 = vpop.f32.mrf.mxu0
      %v7144 = vadd.f32 %v7047, %v7143
      %7145 = vmatmul.bf16.gmra.mxu0 %v6979
      %v7146 = vpop.f32.mrf.mxu0
      %v7147 = vadd.f32 %v7050, %v7146
      %v7148 = vpop.f32.mrf.mxu0
      %v7149 = vadd.f32 %v7052, %v7148
      %7150 = vmatmul.bf16.gmra.mxu0 %v6982
      %v7151 = vpop.f32.mrf.mxu0
      %v7152 = vadd.f32 %v7055, %v7151
      %v7153 = vpop.f32.mrf.mxu0
      %v7154 = vadd.f32 %v7057, %v7153
      %7155 = vmatmul.bf16.gmra.mxu0 %v6985
      %v7156 = vpop.f32.mrf.mxu0
      %v7157 = vadd.f32 %v7060, %v7156
      %v7158 = vpop.f32.mrf.mxu0
      %v7159 = vadd.f32 %v7062, %v7158
      %7160 = vmatmul.bf16.gmra.mxu0 %v6988
      %v7161 = vpop.f32.mrf.mxu0
      %v7162 = vadd.f32 %v7065, %v7161
      %v7163 = vpop.f32.mrf.mxu0
      %v7164 = vadd.f32 %v7067, %v7163
      %7165 = vmatmul.bf16.gmra.mxu0 %v6991
      %v7166 = vpop.f32.mrf.mxu0
      %v7167 = vadd.f32 %v7070, %v7166
      %v7168 = vpop.f32.mrf.mxu0
      %v7169 = vadd.f32 %v7072, %v7168
      %7170 = vmatmul.bf16.gmra.mxu0 %v6994
      %v7171 = vpop.f32.mrf.mxu0
      %v7172 = vadd.f32 %v7075, %v7171
      %v7173 = vpop.f32.mrf.mxu0
      %v7174 = vadd.f32 %v7077, %v7173
      %7175 = vmatmul.bf16.gmra.mxu0 %v6997
      %v7176 = vpop.f32.mrf.mxu0
      %v7177 = vadd.f32 %v7080, %v7176
      %v7178 = vpop.f32.mrf.mxu0
      %v7179 = vadd.f32 %v7082, %v7178
      %7180 = vmatmul.bf16.gmra.mxu0 %v7000
      %v7181 = vpop.f32.mrf.mxu0
      %v7182 = vadd.f32 %v7085, %v7181
      %v7183 = vpop.f32.mrf.mxu0
      %v7184 = vadd.f32 %v7087, %v7183
      %7185 = vmatmul.bf16.gmra.mxu0 %v7003
      %v7186 = vpop.f32.mrf.mxu0
      %v7187 = vadd.f32 %v7090, %v7186
      %v7188 = vpop.f32.mrf.mxu0
      %v7189 = vadd.f32 %v7092, %v7188
      %7190 = vmatmul.bf16.gmra.mxu0 %v7006
      %v7191 = vpop.f32.mrf.mxu0
      %v7192 = vadd.f32 %v7095, %v7191
      %v7193 = vpop.f32.mrf.mxu0
      %v7194 = vadd.f32 %v7097, %v7193
      %7195 = vmatmul.bf16.gmra.mxu0 %v7009
      %v7196 = vpop.f32.mrf.mxu0
      %v7197 = vadd.f32 %v7100, %v7196
      %v7198 = vpop.f32.mrf.mxu0
      %v7199 = vadd.f32 %v7102, %v7198
      %7200 = vmatmul.bf16.gmra.mxu0 %v7012
      %v7201 = vpop.f32.mrf.mxu0
      %v7202 = vadd.f32 %v7105, %v7201
      %v7203 = vpop.f32.mrf.mxu0
      %v7204 = vadd.f32 %v7107, %v7203
      %7205 = vmatmul.bf16.gmra.mxu0 %v7015
      %v7206 = vpop.f32.mrf.mxu0
      %v7207 = vadd.f32 %v7110, %v7206
      %v7208 = vpop.f32.mrf.mxu0
      %v7209 = vadd.f32 %v7112, %v7208
      %7210 = vmatmul.bf16.gmra.mxu0 %v7018
      %v7211 = vpop.f32.mrf.mxu0
      %v7212 = vpop.f32.mrf.mxu0
      %7213 = vdwg.mxu0
      %7214 = vmatpush.bf16.msra.mxu0 %v6933
      %7215 = vmatpush.bf16.msra.mxu0 %v6931
      %7216 = vmatpush.bf16.msra.mxu0 %v6929
      %7217 = vmatpush.bf16.msra.mxu0 %v6927
      %7218 = vmatpush.bf16.msra.mxu0 %v6925
      %7219 = vmatpush.bf16.msra.mxu0 %v6923
      %7220 = vmatpush.bf16.msra.mxu0 %v6921
      %7221 = vmatpush.bf16.msra.mxu0 %v6919
      %7222 = vmatmul.bf16.gmra.mxu0 %v6793
      %v7223 = vpop.f32.mrf.mxu0
      %v7224 = vpop.f32.mrf.mxu0
      %7225 = vmatmul.bf16.gmra.mxu0 %v6796
      %v7226 = vpop.f32.mrf.mxu0
      %v7227 = vpop.f32.mrf.mxu0
      %7228 = vmatmul.bf16.gmra.mxu0 %v6799
      %v7229 = vpop.f32.mrf.mxu0
      %v7230 = vadd.f32 0.0, %v7229
      %v7231 = vpop.f32.mrf.mxu0
      %v7232 = vadd.f32 0.0, %v7231
      %7233 = vmatmul.bf16.gmra.mxu0 %v6802
      %v7234 = vpop.f32.mrf.mxu0
      %v7235 = vadd.f32 0.0, %v7234
      %v7236 = vpop.f32.mrf.mxu0
      %v7237 = vadd.f32 0.0, %v7236
      %7238 = vmatmul.bf16.gmra.mxu0 %v6805
      %v7239 = vpop.f32.mrf.mxu0
      %v7240 = vadd.f32 0.0, %v7239
      %v7241 = vpop.f32.mrf.mxu0
      %v7242 = vadd.f32 0.0, %v7241
      %7243 = vmatmul.bf16.gmra.mxu0 %v6808
      %v7244 = vpop.f32.mrf.mxu0
      %v7245 = vadd.f32 0.0, %v7244
      %v7246 = vpop.f32.mrf.mxu0
      %v7247 = vadd.f32 0.0, %v7246
      %7248 = vmatmul.bf16.gmra.mxu0 %v6811
      %v7249 = vpop.f32.mrf.mxu0
      %v7250 = vadd.f32 0.0, %v7249
      %v7251 = vpop.f32.mrf.mxu0
      %v7252 = vadd.f32 0.0, %v7251
      %7253 = vmatmul.bf16.gmra.mxu0 %v6814
      %v7254 = vpop.f32.mrf.mxu0
      %v7255 = vadd.f32 0.0, %v7254
      %v7256 = vpop.f32.mrf.mxu0
      %v7257 = vadd.f32 0.0, %v7256
      %7258 = vmatmul.bf16.gmra.mxu0 %v6817
      %v7259 = vpop.f32.mrf.mxu0
      %v7260 = vadd.f32 0.0, %v7259
      %v7261 = vpop.f32.mrf.mxu0
      %v7262 = vadd.f32 0.0, %v7261
      %7263 = vmatmul.bf16.gmra.mxu0 %v6820
      %v7264 = vpop.f32.mrf.mxu0
      %v7265 = vadd.f32 0.0, %v7264
      %v7266 = vpop.f32.mrf.mxu0
      %v7267 = vadd.f32 0.0, %v7266
      %7268 = vmatmul.bf16.gmra.mxu0 %v6823
      %v7269 = vpop.f32.mrf.mxu0
      %v7270 = vadd.f32 0.0, %v7269
      %v7271 = vpop.f32.mrf.mxu0
      %v7272 = vadd.f32 0.0, %v7271
      %7273 = vmatmul.bf16.gmra.mxu0 %v6826
      %v7274 = vpop.f32.mrf.mxu0
      %v7275 = vadd.f32 0.0, %v7274
      %v7276 = vpop.f32.mrf.mxu0
      %v7277 = vadd.f32 0.0, %v7276
      %7278 = vmatmul.bf16.gmra.mxu0 %v6829
      %v7279 = vpop.f32.mrf.mxu0
      %v7280 = vadd.f32 0.0, %v7279
      %v7281 = vpop.f32.mrf.mxu0
      %v7282 = vadd.f32 0.0, %v7281
      %7283 = vmatmul.bf16.gmra.mxu0 %v6832
      %v7284 = vpop.f32.mrf.mxu0
      %v7285 = vadd.f32 0.0, %v7284
      %v7286 = vpop.f32.mrf.mxu0
      %v7287 = vadd.f32 0.0, %v7286
      %7288 = vmatmul.bf16.gmra.mxu0 %v6835
      %v7289 = vpop.f32.mrf.mxu0
      %v7290 = vadd.f32 0.0, %v7289
      %v7291 = vpop.f32.mrf.mxu0
      %v7292 = vadd.f32 0.0, %v7291
      %7293 = vmatmul.bf16.gmra.mxu0 %v6838
      %v7294 = vpop.f32.mrf.mxu0
      %v7295 = vadd.f32 0.0, %v7294
      %v7296 = vpop.f32.mrf.mxu0
      %v7297 = vadd.f32 0.0, %v7296
      %7298 = vmatmul.bf16.gmra.mxu0 %v6841
      %v7299 = vpop.f32.mrf.mxu0
      %v7300 = vadd.f32 0.0, %v7299
      %v7301 = vpop.f32.mrf.mxu0
      %v7302 = vadd.f32 0.0, %v7301
      %7303 = vmatmul.bf16.gmra.mxu0 %v6844
      %v7304 = vpop.f32.mrf.mxu0
      %v7305 = vadd.f32 0.0, %v7304
      %v7306 = vpop.f32.mrf.mxu0
      %v7307 = vadd.f32 0.0, %v7306
      %7308 = vdwg.mxu0
      %7309 = vmatpush.bf16.msra.mxu0 0
      %7310 = vmatpush.bf16.msra.mxu0 0
      %7311 = vmatpush.bf16.msra.mxu0 0
      %7312 = vmatpush.bf16.msra.mxu0 0
      %7313 = vmatpush.bf16.msra.mxu0 %v6941
      %7314 = vmatpush.bf16.msra.mxu0 %v6939
      %7315 = vmatpush.bf16.msra.mxu0 %v6937
      %7316 = vmatpush.bf16.msra.mxu0 %v6935
      %7317 = vmatmul.bf16.gmra.mxu0 %v6967
      %v7318 = vpop.f32.mrf.mxu0
      %v7319 = vpop.f32.mrf.mxu0
      %7320 = vmatmul.bf16.gmra.mxu0 %v6970
      %v7321 = vpop.f32.mrf.mxu0
      %v7322 = vpop.f32.mrf.mxu0
      %7323 = vmatmul.bf16.gmra.mxu0 %v6973
      %v7324 = vpop.f32.mrf.mxu0
      %v7325 = vadd.f32 %v7230, %v7324
      %v7326 = vpop.f32.mrf.mxu0
      %v7327 = vadd.f32 %v7232, %v7326
      %7328 = vmatmul.bf16.gmra.mxu0 %v6976
      %v7329 = vpop.f32.mrf.mxu0
      %v7330 = vadd.f32 %v7235, %v7329
      %v7331 = vpop.f32.mrf.mxu0
      %v7332 = vadd.f32 %v7237, %v7331
      %7333 = vmatmul.bf16.gmra.mxu0 %v6979
      %v7334 = vpop.f32.mrf.mxu0
      %v7335 = vadd.f32 %v7240, %v7334
      %v7336 = vpop.f32.mrf.mxu0
      %v7337 = vadd.f32 %v7242, %v7336
      %7338 = vmatmul.bf16.gmra.mxu0 %v6982
      %v7339 = vpop.f32.mrf.mxu0
      %v7340 = vadd.f32 %v7245, %v7339
      %v7341 = vpop.f32.mrf.mxu0
      %v7342 = vadd.f32 %v7247, %v7341
      %7343 = vmatmul.bf16.gmra.mxu0 %v6985
      %v7344 = vpop.f32.mrf.mxu0
      %v7345 = vadd.f32 %v7250, %v7344
      %v7346 = vpop.f32.mrf.mxu0
      %v7347 = vadd.f32 %v7252, %v7346
      %7348 = vmatmul.bf16.gmra.mxu0 %v6988
      %v7349 = vpop.f32.mrf.mxu0
      %v7350 = vadd.f32 %v7255, %v7349
      %v7351 = vpop.f32.mrf.mxu0
      %v7352 = vadd.f32 %v7257, %v7351
      %7353 = vmatmul.bf16.gmra.mxu0 %v6991
      %v7354 = vpop.f32.mrf.mxu0
      %v7355 = vadd.f32 %v7260, %v7354
      %v7356 = vpop.f32.mrf.mxu0
      %v7357 = vadd.f32 %v7262, %v7356
      %7358 = vmatmul.bf16.gmra.mxu0 %v6994
      %v7359 = vpop.f32.mrf.mxu0
      %v7360 = vadd.f32 %v7265, %v7359
      %v7361 = vpop.f32.mrf.mxu0
      %v7362 = vadd.f32 %v7267, %v7361
      %7363 = vmatmul.bf16.gmra.mxu0 %v6997
      %v7364 = vpop.f32.mrf.mxu0
      %v7365 = vadd.f32 %v7270, %v7364
      %v7366 = vpop.f32.mrf.mxu0
      %v7367 = vadd.f32 %v7272, %v7366
      %7368 = vmatmul.bf16.gmra.mxu0 %v7000
      %v7369 = vpop.f32.mrf.mxu0
      %v7370 = vadd.f32 %v7275, %v7369
      %v7371 = vpop.f32.mrf.mxu0
      %v7372 = vadd.f32 %v7277, %v7371
      %7373 = vmatmul.bf16.gmra.mxu0 %v7003
      %v7374 = vpop.f32.mrf.mxu0
      %v7375 = vadd.f32 %v7280, %v7374
      %v7376 = vpop.f32.mrf.mxu0
      %v7377 = vadd.f32 %v7282, %v7376
      %7378 = vmatmul.bf16.gmra.mxu0 %v7006
      %v7379 = vpop.f32.mrf.mxu0
      %v7380 = vadd.f32 %v7285, %v7379
      %v7381 = vpop.f32.mrf.mxu0
      %v7382 = vadd.f32 %v7287, %v7381
      %7383 = vmatmul.bf16.gmra.mxu0 %v7009
      %v7384 = vpop.f32.mrf.mxu0
      %v7385 = vadd.f32 %v7290, %v7384
      %v7386 = vpop.f32.mrf.mxu0
      %v7387 = vadd.f32 %v7292, %v7386
      %7388 = vmatmul.bf16.gmra.mxu0 %v7012
      %v7389 = vpop.f32.mrf.mxu0
      %v7390 = vadd.f32 %v7295, %v7389
      %v7391 = vpop.f32.mrf.mxu0
      %v7392 = vadd.f32 %v7297, %v7391
      %7393 = vmatmul.bf16.gmra.mxu0 %v7015
      %v7394 = vpop.f32.mrf.mxu0
      %v7395 = vadd.f32 %v7300, %v7394
      %v7396 = vpop.f32.mrf.mxu0
      %v7397 = vadd.f32 %v7302, %v7396
      %7398 = vmatmul.bf16.gmra.mxu0 %v7018
      %v7399 = vpop.f32.mrf.mxu0
      %v7400 = vadd.f32 %v7305, %v7399
      %v7401 = vpop.f32.mrf.mxu0
      %v7402 = vadd.f32 %v7307, %v7401
      %7403 = vdwg.mxu0
      %7436 = vrot.lane.b32.xlu0 %v7132, 64
      %v7437 = vpop.permute.xlu0 %7436
      %7438 = vrot.lane.b32.xlu0 %v7134, 64
      %v7439 = vpop.permute.xlu0 %7438
      %7440 = vrot.lane.b32.xlu0 %v7137, 64
      %v7441 = vpop.permute.xlu0 %7440
      %7442 = vrot.lane.b32.xlu0 %v7139, 64
      %v7443 = vpop.permute.xlu0 %7442
      %7444 = vrot.lane.b32.xlu0 %v7142, 64
      %v7445 = vpop.permute.xlu0 %7444
      %7446 = vrot.lane.b32.xlu0 %v7144, 64
      %v7447 = vpop.permute.xlu0 %7446
      %7448 = vrot.lane.b32.xlu0 %v7147, 64
      %v7449 = vpop.permute.xlu0 %7448
      %7450 = vrot.lane.b32.xlu0 %v7149, 64
      %v7451 = vpop.permute.xlu0 %7450
      %7452 = vrot.lane.b32.xlu0 %v7152, 64
      %v7453 = vpop.permute.xlu0 %7452
      %7454 = vrot.lane.b32.xlu0 %v7154, 64
      %v7455 = vpop.permute.xlu0 %7454
      %7456 = vrot.lane.b32.xlu0 %v7157, 64
      %v7457 = vpop.permute.xlu0 %7456
      %7458 = vrot.lane.b32.xlu0 %v7159, 64
      %v7459 = vpop.permute.xlu0 %7458
      %7460 = vrot.lane.b32.xlu0 %v7162, 64
      %v7461 = vpop.permute.xlu0 %7460
      %7462 = vrot.lane.b32.xlu0 %v7164, 64
      %v7463 = vpop.permute.xlu0 %7462
      %7464 = vrot.lane.b32.xlu0 %v7167, 64
      %v7465 = vpop.permute.xlu0 %7464
      %7466 = vrot.lane.b32.xlu0 %v7169, 64
      %v7467 = vpop.permute.xlu0 %7466
      %7468 = vrot.lane.b32.xlu0 %v7172, 64
      %v7469 = vpop.permute.xlu0 %7468
      %7470 = vrot.lane.b32.xlu0 %v7174, 64
      %v7471 = vpop.permute.xlu0 %7470
      %7472 = vrot.lane.b32.xlu0 %v7177, 64
      %v7473 = vpop.permute.xlu0 %7472
      %7474 = vrot.lane.b32.xlu0 %v7179, 64
      %v7475 = vpop.permute.xlu0 %7474
      %7476 = vrot.lane.b32.xlu0 %v7182, 64
      %v7477 = vpop.permute.xlu0 %7476
      %7478 = vrot.lane.b32.xlu0 %v7184, 64
      %v7479 = vpop.permute.xlu0 %7478
      %7480 = vrot.lane.b32.xlu0 %v7187, 64
      %v7481 = vpop.permute.xlu0 %7480
      %7482 = vrot.lane.b32.xlu0 %v7189, 64
      %v7483 = vpop.permute.xlu0 %7482
      %7484 = vrot.lane.b32.xlu0 %v7192, 64
      %v7485 = vpop.permute.xlu0 %7484
      %7486 = vrot.lane.b32.xlu0 %v7194, 64
      %v7487 = vpop.permute.xlu0 %7486
      %7488 = vrot.lane.b32.xlu0 %v7197, 64
      %v7489 = vpop.permute.xlu0 %7488
      %7490 = vrot.lane.b32.xlu0 %v7199, 64
      %v7491 = vpop.permute.xlu0 %7490
      %7492 = vrot.lane.b32.xlu0 %v7202, 64
      %v7493 = vpop.permute.xlu0 %7492
      %7494 = vrot.lane.b32.xlu0 %v7204, 64
      %v7495 = vpop.permute.xlu0 %7494
      %7496 = vrot.lane.b32.xlu0 %v7207, 64
      %v7497 = vpop.permute.xlu0 %7496
      %7498 = vrot.lane.b32.xlu0 %v7209, 64
      %v7499 = vpop.permute.xlu0 %7498
      %v7532 = vadd.f32 %v7127, %v7437
      %v7533 = vadd.f32 %v7129, %v7439
      %v7534 = vadd.f32 %v7132, %v7441
      %v7535 = vadd.f32 %v7134, %v7443
      %v7536 = vadd.f32 %v7137, %v7445
      %v7537 = vadd.f32 %v7139, %v7447
      %v7538 = vadd.f32 %v7142, %v7449
      %v7539 = vadd.f32 %v7144, %v7451
      %v7540 = vadd.f32 %v7147, %v7453
      %v7541 = vadd.f32 %v7149, %v7455
      %v7542 = vadd.f32 %v7152, %v7457
      %v7543 = vadd.f32 %v7154, %v7459
      %v7544 = vadd.f32 %v7157, %v7461
      %v7545 = vadd.f32 %v7159, %v7463
      %v7546 = vadd.f32 %v7162, %v7465
      %v7547 = vadd.f32 %v7164, %v7467
      %v7548 = vadd.f32 %v7167, %v7469
      %v7549 = vadd.f32 %v7169, %v7471
      %v7550 = vadd.f32 %v7172, %v7473
      %v7551 = vadd.f32 %v7174, %v7475
      %v7552 = vadd.f32 %v7177, %v7477
      %v7553 = vadd.f32 %v7179, %v7479
      %v7554 = vadd.f32 %v7182, %v7481
      %v7555 = vadd.f32 %v7184, %v7483
      %v7556 = vadd.f32 %v7187, %v7485
      %v7557 = vadd.f32 %v7189, %v7487
      %v7558 = vadd.f32 %v7192, %v7489
      %v7559 = vadd.f32 %v7194, %v7491
      %v7560 = vadd.f32 %v7197, %v7493
      %v7561 = vadd.f32 %v7199, %v7495
      %v7562 = vadd.f32 %v7202, %v7497
      %v7563 = vadd.f32 %v7204, %v7499
      %v7564 = vadd.f32 %v7532, %v7325
      %v7565 = vadd.f32 %v7533, %v7327
      %v7566 = vadd.f32 %v7534, %v7330
      %v7567 = vadd.f32 %v7535, %v7332
      %v7568 = vadd.f32 %v7536, %v7335
      %v7569 = vadd.f32 %v7537, %v7337
      %v7570 = vadd.f32 %v7538, %v7340
      %v7571 = vadd.f32 %v7539, %v7342
      %v7572 = vadd.f32 %v7540, %v7345
      %v7573 = vadd.f32 %v7541, %v7347
      %v7574 = vadd.f32 %v7542, %v7350
      %v7575 = vadd.f32 %v7543, %v7352
      %v7576 = vadd.f32 %v7544, %v7355
      %v7577 = vadd.f32 %v7545, %v7357
      %v7578 = vadd.f32 %v7546, %v7360
      %v7579 = vadd.f32 %v7547, %v7362
      %v7580 = vadd.f32 %v7548, %v7365
      %v7581 = vadd.f32 %v7549, %v7367
      %v7582 = vadd.f32 %v7550, %v7370
      %v7583 = vadd.f32 %v7551, %v7372
      %v7584 = vadd.f32 %v7552, %v7375
      %v7585 = vadd.f32 %v7553, %v7377
      %v7586 = vadd.f32 %v7554, %v7380
      %v7587 = vadd.f32 %v7555, %v7382
      %v7588 = vadd.f32 %v7556, %v7385
      %v7589 = vadd.f32 %v7557, %v7387
      %v7590 = vadd.f32 %v7558, %v7390
      %v7591 = vadd.f32 %v7559, %v7392
      %v7592 = vadd.f32 %v7560, %v7395
      %v7593 = vadd.f32 %v7561, %v7397
      %v7594 = vadd.f32 %v7562, %v7400
      %v7595 = vadd.f32 %v7563, %v7402
      %v7596 = vld [vmem:[%s138] sm:$0xff]
      %v7597 = vld [vmem:[%s138 + $0x8] sm:$0xff]
      %v7598 = vld [vmem:[%s138 + $0x10] sm:$0xff]
      %v7599 = vld [vmem:[%s138 + $0x18] sm:$0xff]
      %v7600 = vld [vmem:[%s138 + $0x20] sm:$0xff]
      %v7601 = vld [vmem:[%s138 + $0x28] sm:$0xff]
      %v7602 = vld [vmem:[%s138 + $0x30] sm:$0xff]
      %v7603 = vld [vmem:[%s138 + $0x38] sm:$0xff]
      %v7604 = vld [vmem:[%s138 + $0x40] sm:$0xff]
      %v7605 = vld [vmem:[%s138 + $0x48] sm:$0xff]
      %v7606 = vld [vmem:[%s138 + $0x50] sm:$0xff]
      %v7607 = vld [vmem:[%s138 + $0x58] sm:$0xff]
      %v7608 = vld [vmem:[%s138 + $0x60] sm:$0xff]
      %v7609 = vld [vmem:[%s138 + $0x68] sm:$0xff]
      %v7610 = vld [vmem:[%s138 + $0x70] sm:$0xff]
      %v7611 = vld [vmem:[%s138 + $0x78] sm:$0xff]
      %v7612 = vld [vmem:[%s138 + $0x80] sm:$0xff]
      %v7613 = vld [vmem:[%s138 + $0x88] sm:$0xff]
      %v7614 = vld [vmem:[%s138 + $0x90] sm:$0xff]
      %v7615 = vld [vmem:[%s138 + $0x98] sm:$0xff]
      %v7616 = vld [vmem:[%s138 + $0xa0] sm:$0xff]
      %v7617 = vld [vmem:[%s138 + $0xa8] sm:$0xff]
      %v7618 = vld [vmem:[%s138 + $0xb0] sm:$0xff]
      %v7619 = vld [vmem:[%s138 + $0xb8] sm:$0xff]
      %v7620 = vld [vmem:[%s138 + $0xc0] sm:$0xff]
      %v7621 = vld [vmem:[%s138 + $0xc8] sm:$0xff]
      %v7622 = vld [vmem:[%s138 + $0xd0] sm:$0xff]
      %v7623 = vld [vmem:[%s138 + $0xd8] sm:$0xff]
      %v7624 = vld [vmem:[%s138 + $0xe0] sm:$0xff]
      %v7625 = vld [vmem:[%s138 + $0xe8] sm:$0xff]
      %v7626 = vld [vmem:[%s138 + $0xf0] sm:$0xff]
      %v7627 = vld [vmem:[%s138 + $0xf8] sm:$0xff]
      %v7628 = vadd.f32 %v7564, %v7596
      %v7629 = vadd.f32 %v7565, %v7597
      %v7630 = vadd.f32 %v7566, %v7598
      %v7631 = vadd.f32 %v7567, %v7599
      %v7632 = vadd.f32 %v7568, %v7600
      %v7633 = vadd.f32 %v7569, %v7601
      %v7634 = vadd.f32 %v7570, %v7602
      %v7635 = vadd.f32 %v7571, %v7603
      %v7636 = vadd.f32 %v7572, %v7604
      %v7637 = vadd.f32 %v7573, %v7605
      %v7638 = vadd.f32 %v7574, %v7606
      %v7639 = vadd.f32 %v7575, %v7607
      %v7640 = vadd.f32 %v7576, %v7608
      %v7641 = vadd.f32 %v7577, %v7609
      %v7642 = vadd.f32 %v7578, %v7610
      %v7643 = vadd.f32 %v7579, %v7611
      %v7644 = vadd.f32 %v7580, %v7612
      %v7645 = vadd.f32 %v7581, %v7613
      %v7646 = vadd.f32 %v7582, %v7614
      %v7647 = vadd.f32 %v7583, %v7615
      %v7648 = vadd.f32 %v7584, %v7616
      %v7649 = vadd.f32 %v7585, %v7617
      %v7650 = vadd.f32 %v7586, %v7618
      %v7651 = vadd.f32 %v7587, %v7619
      %v7652 = vadd.f32 %v7588, %v7620
      %v7653 = vadd.f32 %v7589, %v7621
      %v7654 = vadd.f32 %v7590, %v7622
      %v7655 = vadd.f32 %v7591, %v7623
      %v7656 = vadd.f32 %v7592, %v7624
      %v7657 = vadd.f32 %v7593, %v7625
      %v7658 = vadd.f32 %v7594, %v7626
      %v7659 = vadd.f32 %v7595, %v7627
      %7660 = vst.msk [vmem:[%s143] sm:$0xff] %vm1290, %v7628
      %7661 = vst.msk [vmem:[%s143 + $0x8] sm:$0xff] %vm1290, %v7629
      %7662 = vst.msk [vmem:[%s143 + $0x10] sm:$0xff] %vm1290, %v7630
      %7663 = vst.msk [vmem:[%s143 + $0x18] sm:$0xff] %vm1290, %v7631
      %7664 = vst.msk [vmem:[%s143 + $0x20] sm:$0xff] %vm1290, %v7632
      %7665 = vst.msk [vmem:[%s143 + $0x28] sm:$0xff] %vm1290, %v7633
      %7666 = vst.msk [vmem:[%s143 + $0x30] sm:$0xff] %vm1290, %v7634
      %7667 = vst.msk [vmem:[%s143 + $0x38] sm:$0xff] %vm1290, %v7635
      %7668 = vst.msk [vmem:[%s143 + $0x40] sm:$0xff] %vm1290, %v7636
      %7669 = vst.msk [vmem:[%s143 + $0x48] sm:$0xff] %vm1290, %v7637
      %7670 = vst.msk [vmem:[%s143 + $0x50] sm:$0xff] %vm1290, %v7638
      %7671 = vst.msk [vmem:[%s143 + $0x58] sm:$0xff] %vm1290, %v7639
      %7672 = vst.msk [vmem:[%s143 + $0x60] sm:$0xff] %vm1290, %v7640
      %7673 = vst.msk [vmem:[%s143 + $0x68] sm:$0xff] %vm1290, %v7641
      %7674 = vst.msk [vmem:[%s143 + $0x70] sm:$0xff] %vm1290, %v7642
      %7675 = vst.msk [vmem:[%s143 + $0x78] sm:$0xff] %vm1290, %v7643
      %7676 = vst.msk [vmem:[%s143 + $0x80] sm:$0xff] %vm1290, %v7644
      %7677 = vst.msk [vmem:[%s143 + $0x88] sm:$0xff] %vm1290, %v7645
      %7678 = vst.msk [vmem:[%s143 + $0x90] sm:$0xff] %vm1290, %v7646
      %7679 = vst.msk [vmem:[%s143 + $0x98] sm:$0xff] %vm1290, %v7647
      %7680 = vst.msk [vmem:[%s143 + $0xa0] sm:$0xff] %vm1290, %v7648
      %7681 = vst.msk [vmem:[%s143 + $0xa8] sm:$0xff] %vm1290, %v7649
      %7682 = vst.msk [vmem:[%s143 + $0xb0] sm:$0xff] %vm1290, %v7650
      %7683 = vst.msk [vmem:[%s143 + $0xb8] sm:$0xff] %vm1290, %v7651
      %7684 = vst.msk [vmem:[%s143 + $0xc0] sm:$0xff] %vm1290, %v7652
      %7685 = vst.msk [vmem:[%s143 + $0xc8] sm:$0xff] %vm1290, %v7653
      %7686 = vst.msk [vmem:[%s143 + $0xd0] sm:$0xff] %vm1290, %v7654
      %7687 = vst.msk [vmem:[%s143 + $0xd8] sm:$0xff] %vm1290, %v7655
      %7688 = vst.msk [vmem:[%s143 + $0xe0] sm:$0xff] %vm1290, %v7656
      %7689 = vst.msk [vmem:[%s143 + $0xe8] sm:$0xff] %vm1290, %v7657
      %7690 = vst.msk [vmem:[%s143 + $0xf0] sm:$0xff] %vm1290, %v7658
      %7691 = vst.msk [vmem:[%s143 + $0xf8] sm:$0xff] %vm1290, %v7659
      %p7692 = scmp.lt.s32.totalorder %s13, 1
      %s7693 = scalar_select %p7692, %s13, 1
      %s7694 = smul.addr %s7693, 32
      %s7695 = smul.addr %s7694, 8
      %s7696 = scalar_lea.vmem %s2, %s7695
      // Predicated region
      $region36: #{preprocess_forward.1} parent=27 // pred_check
        %p7697 = pneg %p78
      $region37: #{preprocess_forward.1} parent=27 // pred_check_branch
        %7699 = sbr.rel (%p7697) target = $region39
      $region38: #{preprocess_forward.1} parent=27 // pred_region
        _
      $region39: #{preprocess_forward.1} parent=27 // pred_fallthru
        _
    $region28: #{preprocess_forward.1} parent=5 // pred_fallthru
      _
    %p7700 = scmp.le.s32.totalorder 2, %s8
    // Predicated region
    $region40: #{preprocess_forward.1} parent=5 // pred_check
      %p7701 = pneg %p7700
    $region41: #{preprocess_forward.1} parent=5 // pred_check_branch
      %7703 = sbr.rel (%p7701) target = $region43
    $region42: #{preprocess_forward.1} parent=5 // pred_region
      %s7704 = ssub.s32 %s8, 2
      // Predicated region
      $region44: #{preprocess_forward.1} parent=42 // pred_check
        %p7705 = pneg %p84
      $region45: #{preprocess_forward.1} parent=42 // pred_check_branch
        %7707 = sbr.rel (%p7705) target = $region47
      $region46: #{preprocess_forward.1} parent=42 // pred_region
        %p7708 = scmp.lt.s32.totalorder %s14, 1
        %s7709 = scalar_select %p7708, %s14, 1
        %s7710 = smul.addr %s7709, 32
        %s7711 = smul.addr %s7710, 8
        %s7712 = scalar_lea.vmem %s2, %s7711
      $region47: #{preprocess_forward.1} parent=42 // pred_fallthru
        _
    $region43: #{preprocess_forward.1} parent=5 // pred_fallthru
      _
  $region6: #{preprocess_forward.1} parent=0 // loop_footer
    %s12 = sadd.s32 1, %s8
  $region7: #{preprocess_forward.1} parent=0 // loop_footer_branch
    %7 = sbr.rel target = $region3
  $region8: #{preprocess_forward.1} parent=0 // loop_exit
    _

</llo_original>
